<compile_context>
chip_gen: v7x
topology: tpu7x:2x2x1
jax: 0.10.0
libtpu: 0.0.40
codegen_flags: <defaults>
</compile_context>

<pallas_src>
import jax
import jax.numpy as jnp
from jax.experimental import pallas as pl
from jax.experimental.pallas import tpu as pltpu


def _resblock_kernel(xpad_ref, w1_ref, b1_ref, w2_ref, b2_ref, o_ref, mid_ref):
    # xpad_ref : (H+2, W+2, C) f32   zero-padded input image (batch dim squeezed)
    # w*_ref   : (3, 3*C, C)   bf16  dx-major fused conv weights, row = dy*C + ci
    # b*_ref   : (1, C)        f32   conv bias
    # o_ref    : (H*W, C)      f32   output rows (no repacking)
    # mid_ref  : (H+2, W+2, C) f32   VMEM scratch: padded conv1 activation
    Hp2, Wp2, C = xpad_ref.shape
    H, W = Hp2 - 2, Wp2 - 2

    def conv3x3(src_ref, w_ref, b_ref, want_center_tap):
        # dx-grouped tap fusion: one sublane-offset slab load per dx, three free
        # leading-dim dy slices, 3-wide lane concat, accumulating K=3C bf16 matmul.
        acc = None
        center = None
        for dx in range(3):
            slab = src_ref[:, dx:dx + W, :]                          # (H+2, W, C) f32
            taps = [slab[dy:dy + H].reshape(H * W, C) for dy in range(3)]
            if want_center_tap and dx == 1:
                center = taps[1]                                     # unpadded src, f32
            patch = jnp.concatenate(taps, axis=-1).astype(jnp.bfloat16)  # (H*W, 3C)
            part = jnp.dot(patch, w_ref[dx],
                           preferred_element_type=jnp.float32)       # (H*W, C) f32
            acc = part if acc is None else acc + part
        return acc + b_ref[...], center

    # ---- conv1 + LeakyReLU(0.1); identity tap (dx=1, dy=1) comes out for free ----
    acc1, identity = conv3x3(xpad_ref, w1_ref, b1_ref, True)
    act = jnp.maximum(acc1, 0.1 * acc1)                  # LeakyReLU via single max

    # ---- re-pad conv1 activation into VMEM scratch.  Border is zeroed every step
    #      (cheap: only the 1-pixel frame) so per-core scratch stays correct when
    #      the "parallel" grid axis is split across TensorCores. ----
    zrow = jnp.zeros((1, W + 2, C), jnp.float32)
    zcol = jnp.zeros((H + 2, 1, C), jnp.float32)
    mid_ref[0:1, :, :] = zrow
    mid_ref[H + 1:H + 2, :, :] = zrow
    mid_ref[:, 0:1, :] = zcol
    mid_ref[:, W + 1:W + 2, :] = zcol
    mid_ref[1:1 + H, 1:1 + W, :] = act.reshape(H, W, C)

    # ---- conv2 + residual add, stored with no repacking ----
    acc2, _ = conv3x3(mid_ref, w2_ref, b2_ref, False)
    o_ref[...] = (identity + acc2).astype(o_ref.dtype)


def residual_block_nhwc(x_nhwc, w1, b1, w2, b2):
    """x_nhwc: (N, H, W, C) f32; w: (3,3,C,C) HWIO f32; b: (C,) f32."""
    N, H, W, C = x_nhwc.shape

    # Pad once in HBM (fused by XLA with the producing transpose); removes the
    # in-kernel xpad scratch, its interior copy and half the border zeroing.
    xpad = jnp.pad(x_nhwc, ((0, 0), (1, 1), (1, 1), (0, 0)))

    # dx-major bf16 weights: index [dx, dy*C + ci, co], matching the in-kernel
    # dy-tap lane concat order.
    def prep_w(w):
        return jnp.transpose(w, (1, 0, 2, 3)).reshape(3, 3 * C, C).astype(jnp.bfloat16)

    w1r, w2r = prep_w(w1), prep_w(w2)
    b1r = b1.reshape(1, C).astype(jnp.float32)
    b2r = b2.reshape(1, C).astype(jnp.float32)

    out = pl.pallas_call(
        _resblock_kernel,
        out_shape=jax.ShapeDtypeStruct((N, H * W, C), jnp.float32),
        grid_spec=pltpu.PrefetchScalarGridSpec(
            num_scalar_prefetch=0,
            grid=(N,),
            in_specs=[
                pl.BlockSpec((None, H + 2, W + 2, C), lambda n: (n, 0, 0, 0)),
                pl.BlockSpec((3, 3 * C, C), lambda n: (0, 0, 0)),
                pl.BlockSpec((1, C), lambda n: (0, 0)),
                pl.BlockSpec((3, 3 * C, C), lambda n: (0, 0, 0)),
                pl.BlockSpec((1, C), lambda n: (0, 0)),
            ],
            out_specs=pl.BlockSpec((None, H * W, C), lambda n: (n, 0, 0)),
            scratch_shapes=[
                pltpu.VMEM((H + 2, W + 2, C), jnp.float32),   # padded conv1 act
            ],
        ),
        compiler_params=pltpu.CompilerParams(
            dimension_semantics=("parallel",)),
    )(xpad, w1r, b1r, w2r, b2r)

    # (N, H*W, C) -> (N, H, W, C): contiguous HBM reshape, free.
    return out.reshape(N, H, W, C)


def residual_block_nchw(x_nchw, w1, b1, w2, b2):
    """PyTorch-convention entry point: x is NCHW, returns NCHW.
    (If the surrounding model can stay NHWC, call residual_block_nhwc directly
    to avoid the two HBM transposes.)"""
    x_nhwc = jnp.transpose(x_nchw, (0, 2, 3, 1))
    y_nhwc = residual_block_nhwc(x_nhwc, w1, b1, w2, b2)
    return jnp.transpose(y_nhwc, (0, 3, 1, 2))


def _reference_nhwc(x, w1, b1, w2, b2):
    """Pure-JAX f32 reference (NHWC / HWIO conv) for correctness check."""
    dn = ("NHWC", "HWIO", "NHWC")

    def conv(z, w, b):
        y = jax.lax.conv_general_dilated(z, w, (1, 1), "SAME",
                                         dimension_numbers=dn)
        return y + b.reshape(1, 1, 1, -1)

    h = conv(x, w1, b1)
    h = jnp.where(h >= 0, h, 0.1 * h)
    return x + conv(h, w2, b2)


if __name__ == "__main__":
    # Shapes consistent with the module: num_feat=64, spatial=16, batch=2.
    N, C, H, W = 2, 64, 16, 16

    key = jax.random.PRNGKey(0)
    kx, kw1, kb1, kw2, kb2 = jax.random.split(key, 5)

    x_nchw = jax.random.normal(kx, (N, C, H, W), dtype=jnp.float32)
    # Deterministic synthetic parameters (HWIO layout), small scale.
    w1 = jax.random.normal(kw1, (3, 3, C, C), dtype=jnp.float32) * 0.05
    b1 = jax.random.normal(kb1, (C,), dtype=jnp.float32) * 0.05
    w2 = jax.random.normal(kw2, (3, 3, C, C), dtype=jnp.float32) * 0.05
    b2 = jax.random.normal(kb2, (C,), dtype=jnp.float32) * 0.05

    y = jax.block_until_ready(residual_block_nchw(x_nchw, w1, b1, w2, b2))

    # Sanity check against pure-JAX f32 reference.  The kernel uses bf16 MXU
    # operands (f32 accumulation), so the tolerance is relaxed accordingly.
    x_nhwc = jnp.transpose(x_nchw, (0, 2, 3, 1))
    y_ref = jnp.transpose(_reference_nhwc(x_nhwc, w1, b1, w2, b2), (0, 3, 1, 2))
    assert y.shape == (N, C, H, W)
    max_err = float(jnp.max(jnp.abs(y - y_ref)))
    assert jnp.allclose(y, y_ref, atol=5e-2, rtol=5e-2), max_err

    print("KERNEL_OK")
</pallas_src>

<mosaic_0001>
module attributes {stable_mosaic.version = 11 : i64} {
  func.func @_resblock_kernel(%arg0: i32, %arg1: memref<1x18x18x64xf32, #tpu.memory_space<vmem>>, %arg2: memref<3x192x64xbf16, #tpu.memory_space<vmem>>, %arg3: memref<1x64xf32, #tpu.memory_space<vmem>>, %arg4: memref<3x192x64xbf16, #tpu.memory_space<vmem>>, %arg5: memref<1x64xf32, #tpu.memory_space<vmem>>, %arg6: memref<1x256x64xf32, #tpu.memory_space<vmem>>, %arg7: memref<18x18x64xf32, #tpu.memory_space<vmem>>) attributes {dimension_semantics = [#tpu.dimension_semantics<parallel>], iteration_bounds = array<i64: 2>, scalar_prefetch = 0 : i64, scratch_operands = 1 : i64, tpu.core_type = #tpu.core_type<tc>, window_params = [{transform_indices = @transform_0, window_bounds = array<i64: 1, 18, 18, 64>}, {pipeline_mode = #tpu.pipeline_mode<synchronous>, transform_indices = @transform_1, window_bounds = array<i64: 3, 192, 64>}, {pipeline_mode = #tpu.pipeline_mode<synchronous>, transform_indices = @transform_2, window_bounds = array<i64: 1, 64>}, {pipeline_mode = #tpu.pipeline_mode<synchronous>, transform_indices = @transform_3, window_bounds = array<i64: 3, 192, 64>}, {pipeline_mode = #tpu.pipeline_mode<synchronous>, transform_indices = @transform_4, window_bounds = array<i64: 1, 64>}, {transform_indices = @transform_5, window_bounds = array<i64: 1, 256, 64>}]} {
    %c0 = arith.constant 0 : index
    %c0_0 = arith.constant 0 : index
    %c0_1 = arith.constant 0 : index
    %c0_2 = arith.constant 0 : index
    %0 = vector.load %arg1[%c0, %c0_0, %c0_1, %c0_2] : memref<1x18x18x64xf32, #tpu.memory_space<vmem>>, vector<1x18x16x64xf32>
    %1 = vector.shape_cast %0 : vector<1x18x16x64xf32> to vector<18x16x64xf32>
    %2 = vector.extract_strided_slice %1 {offsets = [0, 0, 0], sizes = [16, 16, 64], strides = [1, 1, 1]} : vector<18x16x64xf32> to vector<16x16x64xf32>
    %3 = vector.shape_cast %2 : vector<16x16x64xf32> to vector<256x64xf32>
    %4 = vector.extract_strided_slice %1 {offsets = [1, 0, 0], sizes = [16, 16, 64], strides = [1, 1, 1]} : vector<18x16x64xf32> to vector<16x16x64xf32>
    %5 = vector.shape_cast %4 : vector<16x16x64xf32> to vector<256x64xf32>
    %6 = vector.extract_strided_slice %1 {offsets = [2, 0, 0], sizes = [16, 16, 64], strides = [1, 1, 1]} : vector<18x16x64xf32> to vector<16x16x64xf32>
    %7 = vector.shape_cast %6 : vector<16x16x64xf32> to vector<256x64xf32>
    %8 = tpu.concatenate %3, %5, %7 in 1 : vector<256x64xf32>, vector<256x64xf32>, vector<256x64xf32> -> vector<256x192xf32>
    %9 = arith.truncf %8 : vector<256x192xf32> to vector<256x192xbf16>
    %c0_3 = arith.constant 0 : index
    %c0_4 = arith.constant 0 : index
    %c0_5 = arith.constant 0 : index
    %10 = vector.load %arg2[%c0_3, %c0_4, %c0_5] : memref<3x192x64xbf16, #tpu.memory_space<vmem>>, vector<1x192x64xbf16>
    %11 = vector.shape_cast %10 : vector<1x192x64xbf16> to vector<192x64xbf16>
    %cst = arith.constant dense<0.000000e+00> : vector<256x64xf32>
    %12 = tpu.matmul %9, %11, %cst {dimension_numbers = #tpu.dot_dimension_numbers<[1], [0], [0], [1], [0, 0, 1, 1], [], []>} : vector<256x192xbf16>, vector<192x64xbf16>, vector<256x64xf32> -> vector<256x64xf32>
    %c0_6 = arith.constant 0 : index
    %c0_7 = arith.constant 0 : index
    %c1 = arith.constant 1 : index
    %c0_8 = arith.constant 0 : index
    %13 = vector.load %arg1[%c0_6, %c0_7, %c1, %c0_8] : memref<1x18x18x64xf32, #tpu.memory_space<vmem>>, vector<1x18x16x64xf32>
    %14 = vector.shape_cast %13 : vector<1x18x16x64xf32> to vector<18x16x64xf32>
    %15 = vector.extract_strided_slice %14 {offsets = [0, 0, 0], sizes = [16, 16, 64], strides = [1, 1, 1]} : vector<18x16x64xf32> to vector<16x16x64xf32>
    %16 = vector.shape_cast %15 : vector<16x16x64xf32> to vector<256x64xf32>
    %17 = vector.extract_strided_slice %14 {offsets = [1, 0, 0], sizes = [16, 16, 64], strides = [1, 1, 1]} : vector<18x16x64xf32> to vector<16x16x64xf32>
    %18 = vector.shape_cast %17 : vector<16x16x64xf32> to vector<256x64xf32>
    %19 = vector.extract_strided_slice %14 {offsets = [2, 0, 0], sizes = [16, 16, 64], strides = [1, 1, 1]} : vector<18x16x64xf32> to vector<16x16x64xf32>
    %20 = vector.shape_cast %19 : vector<16x16x64xf32> to vector<256x64xf32>
    %21 = tpu.concatenate %16, %18, %20 in 1 : vector<256x64xf32>, vector<256x64xf32>, vector<256x64xf32> -> vector<256x192xf32>
    %22 = arith.truncf %21 : vector<256x192xf32> to vector<256x192xbf16>
    %c1_9 = arith.constant 1 : index
    %c0_10 = arith.constant 0 : index
    %c0_11 = arith.constant 0 : index
    %23 = vector.load %arg2[%c1_9, %c0_10, %c0_11] : memref<3x192x64xbf16, #tpu.memory_space<vmem>>, vector<1x192x64xbf16>
    %24 = vector.shape_cast %23 : vector<1x192x64xbf16> to vector<192x64xbf16>
    %cst_12 = arith.constant dense<0.000000e+00> : vector<256x64xf32>
    %25 = tpu.matmul %22, %24, %cst_12 {dimension_numbers = #tpu.dot_dimension_numbers<[1], [0], [0], [1], [0, 0, 1, 1], [], []>} : vector<256x192xbf16>, vector<192x64xbf16>, vector<256x64xf32> -> vector<256x64xf32>
    %26 = arith.addf %12, %25 : vector<256x64xf32>
    %c0_13 = arith.constant 0 : index
    %c0_14 = arith.constant 0 : index
    %c2 = arith.constant 2 : index
    %c0_15 = arith.constant 0 : index
    %27 = vector.load %arg1[%c0_13, %c0_14, %c2, %c0_15] : memref<1x18x18x64xf32, #tpu.memory_space<vmem>>, vector<1x18x16x64xf32>
    %28 = vector.shape_cast %27 : vector<1x18x16x64xf32> to vector<18x16x64xf32>
    %29 = vector.extract_strided_slice %28 {offsets = [0, 0, 0], sizes = [16, 16, 64], strides = [1, 1, 1]} : vector<18x16x64xf32> to vector<16x16x64xf32>
    %30 = vector.shape_cast %29 : vector<16x16x64xf32> to vector<256x64xf32>
    %31 = vector.extract_strided_slice %28 {offsets = [1, 0, 0], sizes = [16, 16, 64], strides = [1, 1, 1]} : vector<18x16x64xf32> to vector<16x16x64xf32>
    %32 = vector.shape_cast %31 : vector<16x16x64xf32> to vector<256x64xf32>
    %33 = vector.extract_strided_slice %28 {offsets = [2, 0, 0], sizes = [16, 16, 64], strides = [1, 1, 1]} : vector<18x16x64xf32> to vector<16x16x64xf32>
    %34 = vector.shape_cast %33 : vector<16x16x64xf32> to vector<256x64xf32>
    %35 = tpu.concatenate %30, %32, %34 in 1 : vector<256x64xf32>, vector<256x64xf32>, vector<256x64xf32> -> vector<256x192xf32>
    %36 = arith.truncf %35 : vector<256x192xf32> to vector<256x192xbf16>
    %c2_16 = arith.constant 2 : index
    %c0_17 = arith.constant 0 : index
    %c0_18 = arith.constant 0 : index
    %37 = vector.load %arg2[%c2_16, %c0_17, %c0_18] : memref<3x192x64xbf16, #tpu.memory_space<vmem>>, vector<1x192x64xbf16>
    %38 = vector.shape_cast %37 : vector<1x192x64xbf16> to vector<192x64xbf16>
    %cst_19 = arith.constant dense<0.000000e+00> : vector<256x64xf32>
    %39 = tpu.matmul %36, %38, %cst_19 {dimension_numbers = #tpu.dot_dimension_numbers<[1], [0], [0], [1], [0, 0, 1, 1], [], []>} : vector<256x192xbf16>, vector<192x64xbf16>, vector<256x64xf32> -> vector<256x64xf32>
    %40 = arith.addf %26, %39 : vector<256x64xf32>
    %c0_20 = arith.constant 0 : index
    %c0_21 = arith.constant 0 : index
    %41 = vector.load %arg3[%c0_20, %c0_21] : memref<1x64xf32, #tpu.memory_space<vmem>>, vector<1x64xf32>
    %42 = vector.broadcast %41 : vector<1x64xf32> to vector<256x64xf32>
    %43 = arith.addf %40, %42 : vector<256x64xf32>
    %cst_22 = arith.constant 1.000000e-01 : f32
    %44 = vector.broadcast %cst_22 : f32 to vector<256x64xf32>
    %45 = arith.mulf %44, %43 : vector<256x64xf32>
    %46 = arith.maximumf %43, %45 : vector<256x64xf32>
    %cst_23 = arith.constant 0.000000e+00 : f32
    %47 = vector.broadcast %cst_23 : f32 to vector<1x18x64xf32>
    %cst_24 = arith.constant 0.000000e+00 : f32
    %48 = vector.broadcast %cst_24 : f32 to vector<18x1x64xf32>
    %c0_25 = arith.constant 0 : index
    %c0_26 = arith.constant 0 : index
    %c0_27 = arith.constant 0 : index
    %49 = vector.load %arg7[%c0_25, %c0_26, %c0_27] : memref<18x18x64xf32, #tpu.memory_space<vmem>>, vector<1x18x64xf32>
    tpu.vector_store %arg7[%c0_25, %c0_26, %c0_27], %47 {strides = array<i32>} : memref<18x18x64xf32, #tpu.memory_space<vmem>>, vector<1x18x64xf32>,
    %c17 = arith.constant 17 : index
    %c0_28 = arith.constant 0 : index
    %c0_29 = arith.constant 0 : index
    %50 = vector.load %arg7[%c17, %c0_28, %c0_29] : memref<18x18x64xf32, #tpu.memory_space<vmem>>, vector<1x18x64xf32>
    tpu.vector_store %arg7[%c17, %c0_28, %c0_29], %47 {strides = array<i32>} : memref<18x18x64xf32, #tpu.memory_space<vmem>>, vector<1x18x64xf32>,
    %c0_30 = arith.constant 0 : index
    %c0_31 = arith.constant 0 : index
    %c0_32 = arith.constant 0 : index
    %51 = vector.load %arg7[%c0_30, %c0_31, %c0_32] : memref<18x18x64xf32, #tpu.memory_space<vmem>>, vector<18x1x64xf32>
    tpu.vector_store %arg7[%c0_30, %c0_31, %c0_32], %48 {strides = array<i32>} : memref<18x18x64xf32, #tpu.memory_space<vmem>>, vector<18x1x64xf32>,
    %c0_33 = arith.constant 0 : index
    %c17_34 = arith.constant 17 : index
    %c0_35 = arith.constant 0 : index
    %52 = vector.load %arg7[%c0_33, %c17_34, %c0_35] : memref<18x18x64xf32, #tpu.memory_space<vmem>>, vector<18x1x64xf32>
    tpu.vector_store %arg7[%c0_33, %c17_34, %c0_35], %48 {strides = array<i32>} : memref<18x18x64xf32, #tpu.memory_space<vmem>>, vector<18x1x64xf32>,
    %53 = vector.shape_cast %46 : vector<256x64xf32> to vector<16x16x64xf32>
    %c1_36 = arith.constant 1 : index
    %c1_37 = arith.constant 1 : index
    %c0_38 = arith.constant 0 : index
    %54 = vector.load %arg7[%c1_36, %c1_37, %c0_38] : memref<18x18x64xf32, #tpu.memory_space<vmem>>, vector<16x16x64xf32>
    tpu.vector_store %arg7[%c1_36, %c1_37, %c0_38], %53 {strides = array<i32>} : memref<18x18x64xf32, #tpu.memory_space<vmem>>, vector<16x16x64xf32>,
    %c0_39 = arith.constant 0 : index
    %c0_40 = arith.constant 0 : index
    %c0_41 = arith.constant 0 : index
    %55 = vector.load %arg7[%c0_39, %c0_40, %c0_41] : memref<18x18x64xf32, #tpu.memory_space<vmem>>, vector<18x16x64xf32>
    %56 = vector.extract_strided_slice %55 {offsets = [0, 0, 0], sizes = [16, 16, 64], strides = [1, 1, 1]} : vector<18x16x64xf32> to vector<16x16x64xf32>
    %57 = vector.shape_cast %56 : vector<16x16x64xf32> to vector<256x64xf32>
    %58 = vector.extract_strided_slice %55 {offsets = [1, 0, 0], sizes = [16, 16, 64], strides = [1, 1, 1]} : vector<18x16x64xf32> to vector<16x16x64xf32>
    %59 = vector.shape_cast %58 : vector<16x16x64xf32> to vector<256x64xf32>
    %60 = vector.extract_strided_slice %55 {offsets = [2, 0, 0], sizes = [16, 16, 64], strides = [1, 1, 1]} : vector<18x16x64xf32> to vector<16x16x64xf32>
    %61 = vector.shape_cast %60 : vector<16x16x64xf32> to vector<256x64xf32>
    %62 = tpu.concatenate %57, %59, %61 in 1 : vector<256x64xf32>, vector<256x64xf32>, vector<256x64xf32> -> vector<256x192xf32>
    %63 = arith.truncf %62 : vector<256x192xf32> to vector<256x192xbf16>
    %c0_42 = arith.constant 0 : index
    %c0_43 = arith.constant 0 : index
    %c0_44 = arith.constant 0 : index
    %64 = vector.load %arg4[%c0_42, %c0_43, %c0_44] : memref<3x192x64xbf16, #tpu.memory_space<vmem>>, vector<1x192x64xbf16>
    %65 = vector.shape_cast %64 : vector<1x192x64xbf16> to vector<192x64xbf16>
    %cst_45 = arith.constant dense<0.000000e+00> : vector<256x64xf32>
    %66 = tpu.matmul %63, %65, %cst_45 {dimension_numbers = #tpu.dot_dimension_numbers<[1], [0], [0], [1], [0, 0, 1, 1], [], []>} : vector<256x192xbf16>, vector<192x64xbf16>, vector<256x64xf32> -> vector<256x64xf32>
    %c0_46 = arith.constant 0 : index
    %c1_47 = arith.constant 1 : index
    %c0_48 = arith.constant 0 : index
    %67 = vector.load %arg7[%c0_46, %c1_47, %c0_48] : memref<18x18x64xf32, #tpu.memory_space<vmem>>, vector<18x16x64xf32>
    %68 = vector.extract_strided_slice %67 {offsets = [0, 0, 0], sizes = [16, 16, 64], strides = [1, 1, 1]} : vector<18x16x64xf32> to vector<16x16x64xf32>
    %69 = vector.shape_cast %68 : vector<16x16x64xf32> to vector<256x64xf32>
    %70 = vector.extract_strided_slice %67 {offsets = [1, 0, 0], sizes = [16, 16, 64], strides = [1, 1, 1]} : vector<18x16x64xf32> to vector<16x16x64xf32>
    %71 = vector.shape_cast %70 : vector<16x16x64xf32> to vector<256x64xf32>
    %72 = vector.extract_strided_slice %67 {offsets = [2, 0, 0], sizes = [16, 16, 64], strides = [1, 1, 1]} : vector<18x16x64xf32> to vector<16x16x64xf32>
    %73 = vector.shape_cast %72 : vector<16x16x64xf32> to vector<256x64xf32>
    %74 = tpu.concatenate %69, %71, %73 in 1 : vector<256x64xf32>, vector<256x64xf32>, vector<256x64xf32> -> vector<256x192xf32>
    %75 = arith.truncf %74 : vector<256x192xf32> to vector<256x192xbf16>
    %c1_49 = arith.constant 1 : index
    %c0_50 = arith.constant 0 : index
    %c0_51 = arith.constant 0 : index
    %76 = vector.load %arg4[%c1_49, %c0_50, %c0_51] : memref<3x192x64xbf16, #tpu.memory_space<vmem>>, vector<1x192x64xbf16>
    %77 = vector.shape_cast %76 : vector<1x192x64xbf16> to vector<192x64xbf16>
    %cst_52 = arith.constant dense<0.000000e+00> : vector<256x64xf32>
    %78 = tpu.matmul %75, %77, %cst_52 {dimension_numbers = #tpu.dot_dimension_numbers<[1], [0], [0], [1], [0, 0, 1, 1], [], []>} : vector<256x192xbf16>, vector<192x64xbf16>, vector<256x64xf32> -> vector<256x64xf32>
    %79 = arith.addf %66, %78 : vector<256x64xf32>
    %c0_53 = arith.constant 0 : index
    %c2_54 = arith.constant 2 : index
    %c0_55 = arith.constant 0 : index
    %80 = vector.load %arg7[%c0_53, %c2_54, %c0_55] : memref<18x18x64xf32, #tpu.memory_space<vmem>>, vector<18x16x64xf32>
    %81 = vector.extract_strided_slice %80 {offsets = [0, 0, 0], sizes = [16, 16, 64], strides = [1, 1, 1]} : vector<18x16x64xf32> to vector<16x16x64xf32>
    %82 = vector.shape_cast %81 : vector<16x16x64xf32> to vector<256x64xf32>
    %83 = vector.extract_strided_slice %80 {offsets = [1, 0, 0], sizes = [16, 16, 64], strides = [1, 1, 1]} : vector<18x16x64xf32> to vector<16x16x64xf32>
    %84 = vector.shape_cast %83 : vector<16x16x64xf32> to vector<256x64xf32>
    %85 = vector.extract_strided_slice %80 {offsets = [2, 0, 0], sizes = [16, 16, 64], strides = [1, 1, 1]} : vector<18x16x64xf32> to vector<16x16x64xf32>
    %86 = vector.shape_cast %85 : vector<16x16x64xf32> to vector<256x64xf32>
    %87 = tpu.concatenate %82, %84, %86 in 1 : vector<256x64xf32>, vector<256x64xf32>, vector<256x64xf32> -> vector<256x192xf32>
    %88 = arith.truncf %87 : vector<256x192xf32> to vector<256x192xbf16>
    %c2_56 = arith.constant 2 : index
    %c0_57 = arith.constant 0 : index
    %c0_58 = arith.constant 0 : index
    %89 = vector.load %arg4[%c2_56, %c0_57, %c0_58] : memref<3x192x64xbf16, #tpu.memory_space<vmem>>, vector<1x192x64xbf16>
    %90 = vector.shape_cast %89 : vector<1x192x64xbf16> to vector<192x64xbf16>
    %cst_59 = arith.constant dense<0.000000e+00> : vector<256x64xf32>
    %91 = tpu.matmul %88, %90, %cst_59 {dimension_numbers = #tpu.dot_dimension_numbers<[1], [0], [0], [1], [0, 0, 1, 1], [], []>} : vector<256x192xbf16>, vector<192x64xbf16>, vector<256x64xf32> -> vector<256x64xf32>
    %92 = arith.addf %79, %91 : vector<256x64xf32>
    %c0_60 = arith.constant 0 : index
    %c0_61 = arith.constant 0 : index
    %93 = vector.load %arg5[%c0_60, %c0_61] : memref<1x64xf32, #tpu.memory_space<vmem>>, vector<1x64xf32>
    %94 = vector.broadcast %93 : vector<1x64xf32> to vector<256x64xf32>
    %95 = arith.addf %92, %94 : vector<256x64xf32>
    %96 = arith.addf %18, %95 : vector<256x64xf32>
    %c0_62 = arith.constant 0 : index
    %c0_63 = arith.constant 0 : index
    %c0_64 = arith.constant 0 : index
    %97 = vector.load %arg6[%c0_62, %c0_63, %c0_64] : memref<1x256x64xf32, #tpu.memory_space<vmem>>, vector<1x256x64xf32>
    %98 = vector.shape_cast %97 : vector<1x256x64xf32> to vector<256x64xf32>
    %99 = vector.shape_cast %96 : vector<256x64xf32> to vector<1x256x64xf32>
    tpu.vector_store %arg6[%c0_62, %c0_63, %c0_64], %99 {strides = array<i32>} : memref<1x256x64xf32, #tpu.memory_space<vmem>>, vector<1x256x64xf32>,
    return
  }
  func.func @transform_0(%arg0: i32) -> (i32, i32, i32, i32) {
    %c0_i32 = arith.constant 0 : i32
    %c0_i32_0 = arith.constant 0 : i32
    %c0_i32_1 = arith.constant 0 : i32
    %c0_i32_2 = arith.constant 0 : i32
    return %arg0, %c0_i32, %c0_i32_0, %c0_i32_1 : i32, i32, i32, i32
  }
  func.func @transform_1(%arg0: i32) -> (i32, i32, i32) {
    %c0_i32 = arith.constant 0 : i32
    %c0_i32_0 = arith.constant 0 : i32
    %c0_i32_1 = arith.constant 0 : i32
    %c0_i32_2 = arith.constant 0 : i32
    return %c0_i32, %c0_i32_0, %c0_i32_1 : i32, i32, i32
  }
  func.func @transform_2(%arg0: i32) -> (i32, i32) {
    %c0_i32 = arith.constant 0 : i32
    %c0_i32_0 = arith.constant 0 : i32
    %c0_i32_1 = arith.constant 0 : i32
    return %c0_i32, %c0_i32_0 : i32, i32
  }
  func.func @transform_3(%arg0: i32) -> (i32, i32, i32) {
    %c0_i32 = arith.constant 0 : i32
    %c0_i32_0 = arith.constant 0 : i32
    %c0_i32_1 = arith.constant 0 : i32
    %c0_i32_2 = arith.constant 0 : i32
    return %c0_i32, %c0_i32_0, %c0_i32_1 : i32, i32, i32
  }
  func.func @transform_4(%arg0: i32) -> (i32, i32) {
    %c0_i32 = arith.constant 0 : i32
    %c0_i32_0 = arith.constant 0 : i32
    %c0_i32_1 = arith.constant 0 : i32
    return %c0_i32, %c0_i32_0 : i32, i32
  }
  func.func @transform_5(%arg0: i32) -> (i32, i32, i32) {
    %c0_i32 = arith.constant 0 : i32
    %c0_i32_0 = arith.constant 0 : i32
    %c0_i32_1 = arith.constant 0 : i32
    return %arg0, %c0_i32, %c0_i32_0 : i32, i32, i32
  }
}

</mosaic_0001>

<llo_original>
// kernel: tpu_custom_call.1
$region0: #{tpu_custom_call.1}
  #allocation0 [shape = 'u32[]', space=smem, size = 0x4, offset = 0x4, fixed_abs, tag = 'smem constant byte address 0x4 - core index']
  #allocation1 [shape = 'u32[144,128]{1,0:T(1,128)}', space=vmem, size = 0x12000, scoped, tag = 'internal scratch']
  #allocation2 [shape = 'f32[18,18,64]{2,1,0:T(8,128)}', space=vmem, size = 0x36000, scoped, tag = 'scratch operand']
  %s0 = inlined_call_operand.vmem [shape: f32[2,18,18,64], index: 0, kind: input, shape index: {}]
  %s1 = inlined_call_operand.vmem [shape: bf16[3,192,64], index: 1, kind: input, shape index: {}]
  %s2 = inlined_call_operand.vmem [shape: f32[1,64], index: 2, kind: input, shape index: {}]
  %s3 = inlined_call_operand.vmem [shape: bf16[3,192,64], index: 3, kind: input, shape index: {}]
  %s4 = inlined_call_operand.vmem [shape: f32[1,64], index: 4, kind: input, shape index: {}]
  %s5 = inlined_call_operand.vmem [shape: f32[2,256,64], index: 5, kind: output, shape index: {}]
  %s6 = sld [smem:[#allocation0]]
  $region53: #{tpu_custom_call.1} parent=0
    _
  %s8 = ssub.s32 1, %s6
  %s9 = scalar_select 0, %s8, %s6
  loop: start=0, step=1, limit=4
  $region2: #{tpu_custom_call.1} parent=0 // loop_pre_header
    _
  $region3: #{tpu_custom_call.1} parent=0 // loop_header
    %s11 = sphi 0, %s15
    %p12 = scmp.ge.s32.totalorder %s11, 4
    %s21 = sphi 0, %s23
    %s24 = sphi 0, %s21
    %s25 = sphi 0, %s24
    %s41 = sphi 0, %s25
    %s45 = sphi 0, %s45
    %s47 = sphi 0, %s45
    %s48 = sphi 0, %s47
    %s62 = sphi 0, %s48
    %s66 = sphi 0, %s66
    %s68 = sphi 0, %s66
    %s69 = sphi 0, %s68
    %s83 = sphi 0, %s69
    %s87 = sphi 0, %s87
    %s89 = sphi 0, %s87
    %s90 = sphi 0, %s89
    %s104 = sphi 0, %s90
    %s108 = sphi 0, %s108
    %s110 = sphi 0, %s108
    %s111 = sphi 0, %s110
    %s125 = sphi 0, %s111
    %s131 = sphi 0, %s133
    %s134 = sphi 0, %s131
    %s135 = sphi 0, %s134
    %s151 = sphi 0, %s135
  $region4: #{tpu_custom_call.1} parent=0 // loop_header_branch
    %14 = sbr.rel (%p12) target = $region8
  $region5: #{tpu_custom_call.1} parent=0 // loop_body
    %s16 = ssub.s32 %s11, 1
    %s17 = ssub.s32 %s11, 2
    %s18 = sadd.s32 %s11, 1
    %s19 = ssub.s32 %s11, %s18
    %p20 = scmp.eq.s32.totalorder %s19, 0
    %s22 = sadd.s32 %s21, 1
    %s23 = scalar_select %p20, %s21, %s22
    %p26 = pneg %p20
    %p27 = scmp.eq.s32.totalorder %s11, 1
    %p28 = por %p26, %p27
    %p29 = scmp.ne.s32.totalorder %s21, %s24
    %p30 = scmp.eq.s32.totalorder %s11, 0
    %p31 = por %p29, %p30
    %p32 = scmp.ne.s32.totalorder %s21, %s24
    %p33 = scmp.eq.s32.totalorder %s16, 1
    %p34 = por %p32, %p33
    %p35 = scmp.ne.s32.totalorder %s24, %s25
    %p36 = scmp.eq.s32.totalorder %s16, 0
    %p37 = por %p35, %p36
    %p38 = scmp.ne.s32.totalorder %s24, %s25
    %p39 = scmp.eq.s32.totalorder %s17, 1
    %p40 = por %p38, %p39
    %p42 = scmp.ne.s32.totalorder %s25, %s41
    %p43 = scmp.eq.s32.totalorder %s17, 0
    %p44 = por %p42, %p43
    %s46 = sadd.s32 %s45, 1
    %p49 = scmp.eq.s32.totalorder %s11, 1
    %p50 = scmp.ne.s32.totalorder %s45, %s47
    %p51 = scmp.eq.s32.totalorder %s11, 0
    %p52 = por %p50, %p51
    %p53 = scmp.ne.s32.totalorder %s45, %s47
    %p54 = scmp.eq.s32.totalorder %s16, 1
    %p55 = por %p53, %p54
    %p56 = scmp.ne.s32.totalorder %s47, %s48
    %p57 = scmp.eq.s32.totalorder %s16, 0
    %p58 = por %p56, %p57
    %p59 = scmp.ne.s32.totalorder %s47, %s48
    %p60 = scmp.eq.s32.totalorder %s17, 1
    %p61 = por %p59, %p60
    %p63 = scmp.ne.s32.totalorder %s48, %s62
    %p64 = scmp.eq.s32.totalorder %s17, 0
    %p65 = por %p63, %p64
    %s67 = sadd.s32 %s66, 1
    %p70 = scmp.eq.s32.totalorder %s11, 1
    %p71 = scmp.ne.s32.totalorder %s66, %s68
    %p72 = scmp.eq.s32.totalorder %s11, 0
    %p73 = por %p71, %p72
    %p74 = scmp.ne.s32.totalorder %s66, %s68
    %p75 = scmp.eq.s32.totalorder %s16, 1
    %p76 = por %p74, %p75
    %p77 = scmp.ne.s32.totalorder %s68, %s69
    %p78 = scmp.eq.s32.totalorder %s16, 0
    %p79 = por %p77, %p78
    %p80 = scmp.ne.s32.totalorder %s68, %s69
    %p81 = scmp.eq.s32.totalorder %s17, 1
    %p82 = por %p80, %p81
    %p84 = scmp.ne.s32.totalorder %s69, %s83
    %p85 = scmp.eq.s32.totalorder %s17, 0
    %p86 = por %p84, %p85
    %s88 = sadd.s32 %s87, 1
    %p91 = scmp.eq.s32.totalorder %s11, 1
    %p92 = scmp.ne.s32.totalorder %s87, %s89
    %p93 = scmp.eq.s32.totalorder %s11, 0
    %p94 = por %p92, %p93
    %p95 = scmp.ne.s32.totalorder %s87, %s89
    %p96 = scmp.eq.s32.totalorder %s16, 1
    %p97 = por %p95, %p96
    %p98 = scmp.ne.s32.totalorder %s89, %s90
    %p99 = scmp.eq.s32.totalorder %s16, 0
    %p100 = por %p98, %p99
    %p101 = scmp.ne.s32.totalorder %s89, %s90
    %p102 = scmp.eq.s32.totalorder %s17, 1
    %p103 = por %p101, %p102
    %p105 = scmp.ne.s32.totalorder %s90, %s104
    %p106 = scmp.eq.s32.totalorder %s17, 0
    %p107 = por %p105, %p106
    %s109 = sadd.s32 %s108, 1
    %p112 = scmp.eq.s32.totalorder %s11, 1
    %p113 = scmp.ne.s32.totalorder %s108, %s110
    %p114 = scmp.eq.s32.totalorder %s11, 0
    %p115 = por %p113, %p114
    %p116 = scmp.ne.s32.totalorder %s108, %s110
    %p117 = scmp.eq.s32.totalorder %s16, 1
    %p118 = por %p116, %p117
    %p119 = scmp.ne.s32.totalorder %s110, %s111
    %p120 = scmp.eq.s32.totalorder %s16, 0
    %p121 = por %p119, %p120
    %p122 = scmp.ne.s32.totalorder %s110, %s111
    %p123 = scmp.eq.s32.totalorder %s17, 1
    %p124 = por %p122, %p123
    %p126 = scmp.ne.s32.totalorder %s111, %s125
    %p127 = scmp.eq.s32.totalorder %s17, 0
    %p128 = por %p126, %p127
    %s129 = ssub.s32 %s11, %s18
    %p130 = scmp.eq.s32.totalorder %s129, 0
    %s132 = sadd.s32 %s131, 1
    %s133 = scalar_select %p130, %s131, %s132
    %p136 = pneg %p130
    %p137 = scmp.eq.s32.totalorder %s11, 1
    %p138 = por %p136, %p137
    %p139 = scmp.ne.s32.totalorder %s131, %s134
    %p140 = scmp.eq.s32.totalorder %s11, 0
    %p141 = por %p139, %p140
    %p142 = scmp.ne.s32.totalorder %s131, %s134
    %p143 = scmp.eq.s32.totalorder %s16, 1
    %p144 = por %p142, %p143
    %p145 = scmp.ne.s32.totalorder %s134, %s135
    %p146 = scmp.eq.s32.totalorder %s16, 0
    %p147 = por %p145, %p146
    %p148 = scmp.ne.s32.totalorder %s134, %s135
    %p149 = scmp.eq.s32.totalorder %s17, 1
    %p150 = por %p148, %p149
    %p152 = scmp.ne.s32.totalorder %s135, %s151
    %p153 = scmp.eq.s32.totalorder %s17, 0
    %p154 = por %p152, %p153
    %p155 = scmp.le.s32.totalorder 1, %s11
    %p156 = scmp.lt.s32.totalorder %s11, 3
    %p157 = pnand %p155, %p156
    %p158 = pneg %p157
    // Predicated region
    $region9: #{tpu_custom_call.1} parent=5 // pred_check
      _
    $region10: #{tpu_custom_call.1} parent=5 // pred_check_branch
      %160 = sbr.rel (%p157) target = $region12
    $region11: #{tpu_custom_call.1} parent=5 // pred_region
      %s161 = ssub.s32 %s11, 1
      // Predicated region
      $region13: #{tpu_custom_call.1} parent=11 // pred_check
        %p162 = pneg %p58
      $region14: #{tpu_custom_call.1} parent=11 // pred_check_branch
        %164 = sbr.rel (%p162) target = $region16
      $region15: #{tpu_custom_call.1} parent=11 // pred_region
        _
      $region16: #{tpu_custom_call.1} parent=11 // pred_fallthru
        _
      // Predicated region
      $region17: #{tpu_custom_call.1} parent=11 // pred_check
        %p165 = pneg %p79
      $region18: #{tpu_custom_call.1} parent=11 // pred_check_branch
        %167 = sbr.rel (%p165) target = $region20
      $region19: #{tpu_custom_call.1} parent=11 // pred_region
        _
      $region20: #{tpu_custom_call.1} parent=11 // pred_fallthru
        _
      // Predicated region
      $region21: #{tpu_custom_call.1} parent=11 // pred_check
        %p168 = pneg %p100
      $region22: #{tpu_custom_call.1} parent=11 // pred_check_branch
        %170 = sbr.rel (%p168) target = $region24
      $region23: #{tpu_custom_call.1} parent=11 // pred_region
        _
      $region24: #{tpu_custom_call.1} parent=11 // pred_fallthru
        _
      // Predicated region
      $region25: #{tpu_custom_call.1} parent=11 // pred_check
        %p171 = pneg %p121
      $region26: #{tpu_custom_call.1} parent=11 // pred_check_branch
        %173 = sbr.rel (%p171) target = $region28
      $region27: #{tpu_custom_call.1} parent=11 // pred_region
        _
      $region28: #{tpu_custom_call.1} parent=11 // pred_fallthru
        _
    $region12: #{tpu_custom_call.1} parent=5 // pred_fallthru
      _
    %p174 = scmp.lt.s32.totalorder %s11, 2
    // Predicated region
    $region29: #{tpu_custom_call.1} parent=5 // pred_check
      %p175 = pneg %p174
    $region30: #{tpu_custom_call.1} parent=5 // pred_check_branch
      %177 = sbr.rel (%p175) target = $region32
    $region31: #{tpu_custom_call.1} parent=5 // pred_region
      // Predicated region
      $region33: #{tpu_custom_call.1} parent=31 // pred_check
        %p178 = pneg %p31
      $region34: #{tpu_custom_call.1} parent=31 // pred_check_branch
        %180 = sbr.rel (%p178) target = $region36
      $region35: #{tpu_custom_call.1} parent=31 // pred_region
        %p181 = scmp.lt.s32.totalorder %s11, 1
        %s182 = scalar_select %p181, %s11, 1
        %s183 = smul.addr %s182, 54
        %s184 = smul.addr %s183, 8
        %s185 = scalar_lea.vmem %s0, %s184
      $region36: #{tpu_custom_call.1} parent=31 // pred_fallthru
        _
    $region32: #{tpu_custom_call.1} parent=5 // pred_fallthru
      _
    %p186 = scmp.le.s32.totalorder 1, %s11
    %p187 = scmp.lt.s32.totalorder %s11, 3
    %p188 = pnand %p186, %p187
    %p189 = pneg %p188
    // Predicated region
    $region37: #{tpu_custom_call.1} parent=5 // pred_check
      _
    $region38: #{tpu_custom_call.1} parent=5 // pred_check_branch
      %191 = sbr.rel (%p188) target = $region40
    $region39: #{tpu_custom_call.1} parent=5 // pred_region
      %s192 = ssub.s32 %s11, 1
      %p193 = scmp.lt.s32.totalorder %s16, 1
      %s194 = scalar_select %p193, %s16, 1
      %s195 = smul.addr %s194, 54
      %s196 = smul.addr %s195, 8
      %s197 = scalar_lea.vmem %s0, %s196
      %p198 = pneg %p37
      %p199 = pneg %p34
      %p200 = pneg %p58
      %p201 = pneg %p55
      %p202 = pneg %p79
      %p203 = pneg %p76
      %p204 = pneg %p100
      %p205 = pneg %p97
      %p206 = pneg %p121
      %p207 = pneg %p118
      %p208 = pneg %p147
      %p209 = pneg %p144
      %p210 = scmp.lt.s32.totalorder %s16, 1
      %s211 = scalar_select %p210, %s16, 1
      %s212 = smul.addr %s211, 32
      %s213 = smul.addr %s212, 8
      %s214 = scalar_lea.vmem %s5, %s213
      %p215 = scmp.lt.s32.totalorder %s16, 1
      %s216 = scalar_select %p215, %s16, 1
      %s217 = smul.addr %s216, 54
      %s218 = smul.addr %s217, 8
      %s219 = scalar_lea.vmem %s0, %s218
      %p220 = scmp.lt.s32.totalorder %s16, 1
      %s221 = scalar_select %p220, %s16, 1
      %s222 = smul.addr %s221, 32
      %s223 = smul.addr %s222, 8
      %s224 = scalar_lea.vmem %s5, %s223
      %v226 = vld [vmem:[%s219] sm:$0xff]
      %v227 = vld [vmem:[%s219 + $0x8] sm:$0xff]
      %v228 = vld [vmem:[%s219 + $0x18] sm:$0xff]
      %v229 = vld [vmem:[%s219 + $0x20] sm:$0xff]
      %v230 = vld [vmem:[%s219 + $0x30] sm:$0xff]
      %v231 = vld [vmem:[%s219 + $0x38] sm:$0xff]
      %v232 = vld [vmem:[%s219 + $0x48] sm:$0xff]
      %v233 = vld [vmem:[%s219 + $0x50] sm:$0xff]
      %v234 = vld [vmem:[%s219 + $0x60] sm:$0xff]
      %v235 = vld [vmem:[%s219 + $0x68] sm:$0xff]
      %v236 = vld [vmem:[%s219 + $0x78] sm:$0xff]
      %v237 = vld [vmem:[%s219 + $0x80] sm:$0xff]
      %v238 = vld [vmem:[%s219 + $0x90] sm:$0xff]
      %v239 = vld [vmem:[%s219 + $0x98] sm:$0xff]
      %v240 = vld [vmem:[%s219 + $0xa8] sm:$0xff]
      %v241 = vld [vmem:[%s219 + $0xb0] sm:$0xff]
      %v242 = vld [vmem:[%s219 + $0xc0] sm:$0xff]
      %v243 = vld [vmem:[%s219 + $0xc8] sm:$0xff]
      %v244 = vld [vmem:[%s219 + $0xd8] sm:$0xff]
      %v245 = vld [vmem:[%s219 + $0xe0] sm:$0xff]
      %v246 = vld [vmem:[%s219 + $0xf0] sm:$0xff]
      %v247 = vld [vmem:[%s219 + $0xf8] sm:$0xff]
      %v248 = vld [vmem:[%s219 + $0x108] sm:$0xff]
      %v249 = vld [vmem:[%s219 + $0x110] sm:$0xff]
      %v250 = vld [vmem:[%s219 + $0x120] sm:$0xff]
      %v251 = vld [vmem:[%s219 + $0x128] sm:$0xff]
      %v252 = vld [vmem:[%s219 + $0x138] sm:$0xff]
      %v253 = vld [vmem:[%s219 + $0x140] sm:$0xff]
      %v254 = vld [vmem:[%s219 + $0x150] sm:$0xff]
      %v255 = vld [vmem:[%s219 + $0x158] sm:$0xff]
      %v256 = vld [vmem:[%s219 + $0x168] sm:$0xff]
      %v257 = vld [vmem:[%s219 + $0x170] sm:$0xff]
      %v258 = vld [vmem:[%s219 + $0x180] sm:$0xff]
      %v259 = vld [vmem:[%s219 + $0x188] sm:$0xff]
      %v260 = vld [vmem:[%s219 + $0x198] sm:$0xff]
      %v261 = vld [vmem:[%s219 + $0x1a0] sm:$0xff]
      %294 = vrot.lane.b32.xlu0 %v228, 64
      %v295 = vpop.permute.xlu0 %294
      %296 = vrot.lane.b32.xlu0 %v229, 64
      %v297 = vpop.permute.xlu0 %296
      %298 = vrot.lane.b32.xlu0 %v230, 64
      %v299 = vpop.permute.xlu0 %298
      %300 = vrot.lane.b32.xlu0 %v231, 64
      %v301 = vpop.permute.xlu0 %300
      %302 = vrot.lane.b32.xlu0 %v232, 64
      %v303 = vpop.permute.xlu0 %302
      %304 = vrot.lane.b32.xlu0 %v233, 64
      %v305 = vpop.permute.xlu0 %304
      %306 = vrot.lane.b32.xlu0 %v234, 64
      %v307 = vpop.permute.xlu0 %306
      %308 = vrot.lane.b32.xlu0 %v235, 64
      %v309 = vpop.permute.xlu0 %308
      %310 = vrot.lane.b32.xlu0 %v236, 64
      %v311 = vpop.permute.xlu0 %310
      %312 = vrot.lane.b32.xlu0 %v237, 64
      %v313 = vpop.permute.xlu0 %312
      %314 = vrot.lane.b32.xlu0 %v238, 64
      %v315 = vpop.permute.xlu0 %314
      %316 = vrot.lane.b32.xlu0 %v239, 64
      %v317 = vpop.permute.xlu0 %316
      %318 = vrot.lane.b32.xlu0 %v240, 64
      %v319 = vpop.permute.xlu0 %318
      %320 = vrot.lane.b32.xlu0 %v241, 64
      %v321 = vpop.permute.xlu0 %320
      %322 = vrot.lane.b32.xlu0 %v242, 64
      %v323 = vpop.permute.xlu0 %322
      %324 = vrot.lane.b32.xlu0 %v243, 64
      %v325 = vpop.permute.xlu0 %324
      %326 = vrot.lane.b32.xlu0 %v244, 64
      %v327 = vpop.permute.xlu0 %326
      %328 = vrot.lane.b32.xlu0 %v245, 64
      %v329 = vpop.permute.xlu0 %328
      %330 = vrot.lane.b32.xlu0 %v246, 64
      %v331 = vpop.permute.xlu0 %330
      %332 = vrot.lane.b32.xlu0 %v247, 64
      %v333 = vpop.permute.xlu0 %332
      %334 = vrot.lane.b32.xlu0 %v248, 64
      %v335 = vpop.permute.xlu0 %334
      %336 = vrot.lane.b32.xlu0 %v249, 64
      %v337 = vpop.permute.xlu0 %336
      %338 = vrot.lane.b32.xlu0 %v250, 64
      %v339 = vpop.permute.xlu0 %338
      %340 = vrot.lane.b32.xlu0 %v251, 64
      %v341 = vpop.permute.xlu0 %340
      %342 = vrot.lane.b32.xlu0 %v252, 64
      %v343 = vpop.permute.xlu0 %342
      %344 = vrot.lane.b32.xlu0 %v253, 64
      %v345 = vpop.permute.xlu0 %344
      %346 = vrot.lane.b32.xlu0 %v254, 64
      %v347 = vpop.permute.xlu0 %346
      %348 = vrot.lane.b32.xlu0 %v255, 64
      %v349 = vpop.permute.xlu0 %348
      %350 = vrot.lane.b32.xlu0 %v256, 64
      %v351 = vpop.permute.xlu0 %350
      %352 = vrot.lane.b32.xlu0 %v257, 64
      %v353 = vpop.permute.xlu0 %352
      %354 = vrot.lane.b32.xlu0 %v258, 64
      %v355 = vpop.permute.xlu0 %354
      %356 = vrot.lane.b32.xlu0 %v259, 64
      %v357 = vpop.permute.xlu0 %356
      %vm390 = vcmask 523264
      %v391 = vsel %vm390, %v226, %v295
      %v392 = vsel %vm390, %v227, %v297
      %v393 = vsel %vm390, %v228, %v299
      %v394 = vsel %vm390, %v229, %v301
      %v395 = vsel %vm390, %v230, %v303
      %v396 = vsel %vm390, %v231, %v305
      %v397 = vsel %vm390, %v232, %v307
      %v398 = vsel %vm390, %v233, %v309
      %v399 = vsel %vm390, %v234, %v311
      %v400 = vsel %vm390, %v235, %v313
      %v401 = vsel %vm390, %v236, %v315
      %v402 = vsel %vm390, %v237, %v317
      %v403 = vsel %vm390, %v238, %v319
      %v404 = vsel %vm390, %v239, %v321
      %v405 = vsel %vm390, %v240, %v323
      %v406 = vsel %vm390, %v241, %v325
      %v407 = vsel %vm390, %v242, %v327
      %v408 = vsel %vm390, %v243, %v329
      %v409 = vsel %vm390, %v244, %v331
      %v410 = vsel %vm390, %v245, %v333
      %v411 = vsel %vm390, %v246, %v335
      %v412 = vsel %vm390, %v247, %v337
      %v413 = vsel %vm390, %v248, %v339
      %v414 = vsel %vm390, %v249, %v341
      %v415 = vsel %vm390, %v250, %v343
      %v416 = vsel %vm390, %v251, %v345
      %v417 = vsel %vm390, %v252, %v347
      %v418 = vsel %vm390, %v253, %v349
      %v419 = vsel %vm390, %v254, %v351
      %v420 = vsel %vm390, %v255, %v353
      %v421 = vsel %vm390, %v256, %v355
      %v422 = vsel %vm390, %v257, %v357
      %v423 = vpack.c.bf16 %v392, %v391
      %v424 = vpack.c.bf16 %v231, %v230
      %v425 = vpack.c.bf16 %v394, %v393
      %v426 = vpack.c.bf16 %v233, %v232
      %v427 = vpack.c.bf16 %v396, %v395
      %v428 = vpack.c.bf16 %v235, %v234
      %v429 = vpack.c.bf16 %v398, %v397
      %v430 = vpack.c.bf16 %v237, %v236
      %v431 = vpack.c.bf16 %v400, %v399
      %v432 = vpack.c.bf16 %v239, %v238
      %v433 = vpack.c.bf16 %v402, %v401
      %v434 = vpack.c.bf16 %v241, %v240
      %v435 = vpack.c.bf16 %v404, %v403
      %v436 = vpack.c.bf16 %v243, %v242
      %v437 = vpack.c.bf16 %v406, %v405
      %v438 = vpack.c.bf16 %v245, %v244
      %v439 = vpack.c.bf16 %v408, %v407
      %v440 = vpack.c.bf16 %v247, %v246
      %v441 = vpack.c.bf16 %v410, %v409
      %v442 = vpack.c.bf16 %v249, %v248
      %v443 = vpack.c.bf16 %v412, %v411
      %v444 = vpack.c.bf16 %v251, %v250
      %v445 = vpack.c.bf16 %v414, %v413
      %v446 = vpack.c.bf16 %v253, %v252
      %v447 = vpack.c.bf16 %v416, %v415
      %v448 = vpack.c.bf16 %v255, %v254
      %v449 = vpack.c.bf16 %v418, %v417
      %v450 = vpack.c.bf16 %v257, %v256
      %v451 = vpack.c.bf16 %v420, %v419
      %v452 = vpack.c.bf16 %v259, %v258
      %v453 = vpack.c.bf16 %v422, %v421
      %v454 = vpack.c.bf16 %v261, %v260
      %v455 = vld [vmem:[%s1] sm:$0xf]
      %v456 = vld [vmem:[%s1 + $0x4] sm:$0xf]
      %v457 = vld [vmem:[%s1 + $0x8] sm:$0xf]
      %v458 = vld [vmem:[%s1 + $0xc] sm:$0xf]
      %v459 = vld [vmem:[%s1 + $0x10] sm:$0xf]
      %v460 = vld [vmem:[%s1 + $0x14] sm:$0xf]
      %v461 = vld [vmem:[%s1 + $0x18] sm:$0xf]
      %v462 = vld [vmem:[%s1 + $0x1c] sm:$0xf]
      %v463 = vld [vmem:[%s1 + $0x20] sm:$0xf]
      %v464 = vld [vmem:[%s1 + $0x24] sm:$0xf]
      %v465 = vld [vmem:[%s1 + $0x28] sm:$0xf]
      %v466 = vld [vmem:[%s1 + $0x2c] sm:$0xf]
      %v467 = vld [vmem:[%s1 + $0x30] sm:$0xf]
      %v468 = vld [vmem:[%s1 + $0x34] sm:$0xf]
      %v469 = vld [vmem:[%s1 + $0x38] sm:$0xf]
      %v470 = vld [vmem:[%s1 + $0x3c] sm:$0xf]
      %v471 = vld [vmem:[%s1 + $0x40] sm:$0xf]
      %v472 = vld [vmem:[%s1 + $0x44] sm:$0xf]
      %v473 = vld [vmem:[%s1 + $0x48] sm:$0xf]
      %v474 = vld [vmem:[%s1 + $0x4c] sm:$0xf]
      %v475 = vld [vmem:[%s1 + $0x50] sm:$0xf]
      %v476 = vld [vmem:[%s1 + $0x54] sm:$0xf]
      %v477 = vld [vmem:[%s1 + $0x58] sm:$0xf]
      %v478 = vld [vmem:[%s1 + $0x5c] sm:$0xf]
      %v479 = vld [vmem:[%s219 + $0x1] sm:$0xff]
      %v480 = vld [vmem:[%s219 + $0x9] sm:$0xff]
      %v481 = vld [vmem:[%s219 + $0x19] sm:$0xff]
      %v482 = vld [vmem:[%s219 + $0x21] sm:$0xff]
      %v483 = vld [vmem:[%s219 + $0x31] sm:$0xff]
      %v484 = vld [vmem:[%s219 + $0x39] sm:$0xff]
      %v485 = vld [vmem:[%s219 + $0x49] sm:$0xff]
      %v486 = vld [vmem:[%s219 + $0x51] sm:$0xff]
      %v487 = vld [vmem:[%s219 + $0x61] sm:$0xff]
      %v488 = vld [vmem:[%s219 + $0x69] sm:$0xff]
      %v489 = vld [vmem:[%s219 + $0x79] sm:$0xff]
      %v490 = vld [vmem:[%s219 + $0x81] sm:$0xff]
      %v491 = vld [vmem:[%s219 + $0x91] sm:$0xff]
      %v492 = vld [vmem:[%s219 + $0x99] sm:$0xff]
      %v493 = vld [vmem:[%s219 + $0xa9] sm:$0xff]
      %v494 = vld [vmem:[%s219 + $0xb1] sm:$0xff]
      %v495 = vld [vmem:[%s219 + $0xc1] sm:$0xff]
      %v496 = vld [vmem:[%s219 + $0xc9] sm:$0xff]
      %v497 = vld [vmem:[%s219 + $0xd9] sm:$0xff]
      %v498 = vld [vmem:[%s219 + $0xe1] sm:$0xff]
      %v499 = vld [vmem:[%s219 + $0xf1] sm:$0xff]
      %v500 = vld [vmem:[%s219 + $0xf9] sm:$0xff]
      %v501 = vld [vmem:[%s219 + $0x109] sm:$0xff]
      %v502 = vld [vmem:[%s219 + $0x111] sm:$0xff]
      %v503 = vld [vmem:[%s219 + $0x121] sm:$0xff]
      %v504 = vld [vmem:[%s219 + $0x129] sm:$0xff]
      %v505 = vld [vmem:[%s219 + $0x139] sm:$0xff]
      %v506 = vld [vmem:[%s219 + $0x141] sm:$0xff]
      %v507 = vld [vmem:[%s219 + $0x151] sm:$0xff]
      %v508 = vld [vmem:[%s219 + $0x159] sm:$0xff]
      %v509 = vld [vmem:[%s219 + $0x169] sm:$0xff]
      %v510 = vld [vmem:[%s219 + $0x171] sm:$0xff]
      %v511 = vld [vmem:[%s219 + $0x181] sm:$0xff]
      %v512 = vld [vmem:[%s219 + $0x189] sm:$0xff]
      %v513 = vld [vmem:[%s219 + $0x199] sm:$0xff]
      %v514 = vld [vmem:[%s219 + $0x1a1] sm:$0xff]
      %547 = vrot.lane.b32.xlu0 %v481, 64
      %v548 = vpop.permute.xlu0 %547
      %549 = vrot.lane.b32.xlu0 %v482, 64
      %v550 = vpop.permute.xlu0 %549
      %551 = vrot.lane.b32.xlu0 %v483, 64
      %v552 = vpop.permute.xlu0 %551
      %553 = vrot.lane.b32.xlu0 %v484, 64
      %v554 = vpop.permute.xlu0 %553
      %555 = vrot.lane.b32.xlu0 %v485, 64
      %v556 = vpop.permute.xlu0 %555
      %557 = vrot.lane.b32.xlu0 %v486, 64
      %v558 = vpop.permute.xlu0 %557
      %559 = vrot.lane.b32.xlu0 %v487, 64
      %v560 = vpop.permute.xlu0 %559
      %561 = vrot.lane.b32.xlu0 %v488, 64
      %v562 = vpop.permute.xlu0 %561
      %563 = vrot.lane.b32.xlu0 %v489, 64
      %v564 = vpop.permute.xlu0 %563
      %565 = vrot.lane.b32.xlu0 %v490, 64
      %v566 = vpop.permute.xlu0 %565
      %567 = vrot.lane.b32.xlu0 %v491, 64
      %v568 = vpop.permute.xlu0 %567
      %569 = vrot.lane.b32.xlu0 %v492, 64
      %v570 = vpop.permute.xlu0 %569
      %571 = vrot.lane.b32.xlu0 %v493, 64
      %v572 = vpop.permute.xlu0 %571
      %573 = vrot.lane.b32.xlu0 %v494, 64
      %v574 = vpop.permute.xlu0 %573
      %575 = vrot.lane.b32.xlu0 %v495, 64
      %v576 = vpop.permute.xlu0 %575
      %577 = vrot.lane.b32.xlu0 %v496, 64
      %v578 = vpop.permute.xlu0 %577
      %579 = vrot.lane.b32.xlu0 %v497, 64
      %v580 = vpop.permute.xlu0 %579
      %581 = vrot.lane.b32.xlu0 %v498, 64
      %v582 = vpop.permute.xlu0 %581
      %583 = vrot.lane.b32.xlu0 %v499, 64
      %v584 = vpop.permute.xlu0 %583
      %585 = vrot.lane.b32.xlu0 %v500, 64
      %v586 = vpop.permute.xlu0 %585
      %587 = vrot.lane.b32.xlu0 %v501, 64
      %v588 = vpop.permute.xlu0 %587
      %589 = vrot.lane.b32.xlu0 %v502, 64
      %v590 = vpop.permute.xlu0 %589
      %591 = vrot.lane.b32.xlu0 %v503, 64
      %v592 = vpop.permute.xlu0 %591
      %593 = vrot.lane.b32.xlu0 %v504, 64
      %v594 = vpop.permute.xlu0 %593
      %595 = vrot.lane.b32.xlu0 %v505, 64
      %v596 = vpop.permute.xlu0 %595
      %597 = vrot.lane.b32.xlu0 %v506, 64
      %v598 = vpop.permute.xlu0 %597
      %599 = vrot.lane.b32.xlu0 %v507, 64
      %v600 = vpop.permute.xlu0 %599
      %601 = vrot.lane.b32.xlu0 %v508, 64
      %v602 = vpop.permute.xlu0 %601
      %603 = vrot.lane.b32.xlu0 %v509, 64
      %v604 = vpop.permute.xlu0 %603
      %605 = vrot.lane.b32.xlu0 %v510, 64
      %v606 = vpop.permute.xlu0 %605
      %607 = vrot.lane.b32.xlu0 %v511, 64
      %v608 = vpop.permute.xlu0 %607
      %609 = vrot.lane.b32.xlu0 %v512, 64
      %v610 = vpop.permute.xlu0 %609
      %v643 = vsel %vm390, %v479, %v548
      %v644 = vsel %vm390, %v480, %v550
      %v645 = vsel %vm390, %v481, %v552
      %v646 = vsel %vm390, %v482, %v554
      %v647 = vsel %vm390, %v483, %v556
      %v648 = vsel %vm390, %v484, %v558
      %v649 = vsel %vm390, %v485, %v560
      %v650 = vsel %vm390, %v486, %v562
      %v651 = vsel %vm390, %v487, %v564
      %v652 = vsel %vm390, %v488, %v566
      %v653 = vsel %vm390, %v489, %v568
      %v654 = vsel %vm390, %v490, %v570
      %v655 = vsel %vm390, %v491, %v572
      %v656 = vsel %vm390, %v492, %v574
      %v657 = vsel %vm390, %v493, %v576
      %v658 = vsel %vm390, %v494, %v578
      %v659 = vsel %vm390, %v495, %v580
      %v660 = vsel %vm390, %v496, %v582
      %v661 = vsel %vm390, %v497, %v584
      %v662 = vsel %vm390, %v498, %v586
      %v663 = vsel %vm390, %v499, %v588
      %v664 = vsel %vm390, %v500, %v590
      %v665 = vsel %vm390, %v501, %v592
      %v666 = vsel %vm390, %v502, %v594
      %v667 = vsel %vm390, %v503, %v596
      %v668 = vsel %vm390, %v504, %v598
      %v669 = vsel %vm390, %v505, %v600
      %v670 = vsel %vm390, %v506, %v602
      %v671 = vsel %vm390, %v507, %v604
      %v672 = vsel %vm390, %v508, %v606
      %v673 = vsel %vm390, %v509, %v608
      %v674 = vsel %vm390, %v510, %v610
      %v675 = vpack.c.bf16 %v644, %v643
      %v676 = vpack.c.bf16 %v484, %v483
      %v677 = vpack.c.bf16 %v646, %v645
      %v678 = vpack.c.bf16 %v486, %v485
      %v679 = vpack.c.bf16 %v648, %v647
      %v680 = vpack.c.bf16 %v488, %v487
      %v681 = vpack.c.bf16 %v650, %v649
      %v682 = vpack.c.bf16 %v490, %v489
      %v683 = vpack.c.bf16 %v652, %v651
      %v684 = vpack.c.bf16 %v492, %v491
      %v685 = vpack.c.bf16 %v654, %v653
      %v686 = vpack.c.bf16 %v494, %v493
      %v687 = vpack.c.bf16 %v656, %v655
      %v688 = vpack.c.bf16 %v496, %v495
      %v689 = vpack.c.bf16 %v658, %v657
      %v690 = vpack.c.bf16 %v498, %v497
      %v691 = vpack.c.bf16 %v660, %v659
      %v692 = vpack.c.bf16 %v500, %v499
      %v693 = vpack.c.bf16 %v662, %v661
      %v694 = vpack.c.bf16 %v502, %v501
      %v695 = vpack.c.bf16 %v664, %v663
      %v696 = vpack.c.bf16 %v504, %v503
      %v697 = vpack.c.bf16 %v666, %v665
      %v698 = vpack.c.bf16 %v506, %v505
      %v699 = vpack.c.bf16 %v668, %v667
      %v700 = vpack.c.bf16 %v508, %v507
      %v701 = vpack.c.bf16 %v670, %v669
      %v702 = vpack.c.bf16 %v510, %v509
      %v703 = vpack.c.bf16 %v672, %v671
      %v704 = vpack.c.bf16 %v512, %v511
      %v705 = vpack.c.bf16 %v674, %v673
      %v706 = vpack.c.bf16 %v514, %v513
      %s707 = scalar_lea.vmem %s1, 96
      %v708 = vld [vmem:[%s707] sm:$0xf]
      %v709 = vld [vmem:[%s707 + $0x4] sm:$0xf]
      %v710 = vld [vmem:[%s707 + $0x8] sm:$0xf]
      %v711 = vld [vmem:[%s707 + $0xc] sm:$0xf]
      %v712 = vld [vmem:[%s707 + $0x10] sm:$0xf]
      %v713 = vld [vmem:[%s707 + $0x14] sm:$0xf]
      %v714 = vld [vmem:[%s707 + $0x18] sm:$0xf]
      %v715 = vld [vmem:[%s707 + $0x1c] sm:$0xf]
      %v716 = vld [vmem:[%s707 + $0x20] sm:$0xf]
      %v717 = vld [vmem:[%s707 + $0x24] sm:$0xf]
      %v718 = vld [vmem:[%s707 + $0x28] sm:$0xf]
      %v719 = vld [vmem:[%s707 + $0x2c] sm:$0xf]
      %v720 = vld [vmem:[%s707 + $0x30] sm:$0xf]
      %v721 = vld [vmem:[%s707 + $0x34] sm:$0xf]
      %v722 = vld [vmem:[%s707 + $0x38] sm:$0xf]
      %v723 = vld [vmem:[%s707 + $0x3c] sm:$0xf]
      %v724 = vld [vmem:[%s707 + $0x40] sm:$0xf]
      %v725 = vld [vmem:[%s707 + $0x44] sm:$0xf]
      %v726 = vld [vmem:[%s707 + $0x48] sm:$0xf]
      %v727 = vld [vmem:[%s707 + $0x4c] sm:$0xf]
      %v728 = vld [vmem:[%s707 + $0x50] sm:$0xf]
      %v729 = vld [vmem:[%s707 + $0x54] sm:$0xf]
      %v730 = vld [vmem:[%s707 + $0x58] sm:$0xf]
      %v731 = vld [vmem:[%s707 + $0x5c] sm:$0xf]
      %v756 = vunpack.c.l.b16 %v708
      %v757 = vunpack.c.l.b16 %v709
      %v758 = vunpack.c.l.b16 %v710
      %v759 = vunpack.c.l.b16 %v711
      %v760 = vunpack.c.l.b16 %v712
      %v761 = vunpack.c.l.b16 %v713
      %v762 = vunpack.c.l.b16 %v714
      %v763 = vunpack.c.l.b16 %v715
      %v764 = vunpack.c.l.b16 %v716
      %v765 = vunpack.c.l.b16 %v717
      %v766 = vunpack.c.l.b16 %v718
      %v767 = vunpack.c.l.b16 %v719
      %v768 = vunpack.c.l.b16 %v720
      %v769 = vunpack.c.l.b16 %v721
      %v770 = vunpack.c.l.b16 %v722
      %v771 = vunpack.c.l.b16 %v723
      %v772 = vunpack.c.l.b16 %v724
      %v773 = vunpack.c.l.b16 %v725
      %v774 = vunpack.c.l.b16 %v726
      %v775 = vunpack.c.l.b16 %v727
      %v776 = vunpack.c.l.b16 %v728
      %v777 = vunpack.c.l.b16 %v729
      %v778 = vunpack.c.l.b16 %v730
      %v779 = vunpack.c.l.b16 %v731
      %v780 = vpack.c.b16 %v757, %v756
      %v781 = vpack.c.b16 %v759, %v758
      %v782 = vpack.c.b16 %v761, %v760
      %v783 = vpack.c.b16 %v763, %v762
      %v784 = vpack.c.b16 %v765, %v764
      %v785 = vpack.c.b16 %v767, %v766
      %v786 = vpack.c.b16 %v769, %v768
      %v787 = vpack.c.b16 %v771, %v770
      %v788 = vpack.c.b16 %v773, %v772
      %v789 = vpack.c.b16 %v775, %v774
      %v790 = vpack.c.b16 %v777, %v776
      %v791 = vpack.c.b16 %v779, %v778
      %v805 = vsel %vm390, %v676, 0
      %v808 = vsel %vm390, %v678, 0
      %v811 = vsel %vm390, %v680, 0
      %v814 = vsel %vm390, %v682, 0
      %v817 = vsel %vm390, %v684, 0
      %v820 = vsel %vm390, %v686, 0
      %v823 = vsel %vm390, %v688, 0
      %v826 = vsel %vm390, %v690, 0
      %v829 = vsel %vm390, %v692, 0
      %v832 = vsel %vm390, %v694, 0
      %v835 = vsel %vm390, %v696, 0
      %v838 = vsel %vm390, %v698, 0
      %v841 = vsel %vm390, %v700, 0
      %v844 = vsel %vm390, %v702, 0
      %v847 = vsel %vm390, %v704, 0
      %v850 = vsel %vm390, %v706, 0
      %852 = vmatprep.subr.bf16.mxu0 0
      %853 = vmatpush1.bf16.msra.mxu0 %v780
      %854 = vmatprep.subr.bf16.mxu0 0
      %855 = vmatpush1.bf16.msra.mxu0 %v781
      %856 = vmatprep.subr.bf16.mxu0 0
      %857 = vmatpush1.bf16.msra.mxu0 %v782
      %858 = vmatprep.subr.bf16.mxu0 0
      %859 = vmatpush1.bf16.msra.mxu0 %v783
      %860 = vmatprep.subr.bf16.mxu0 0
      %861 = vmatpush1.bf16.msra.mxu0 %v784
      %862 = vmatprep.subr.bf16.mxu0 0
      %863 = vmatpush1.bf16.msra.mxu0 %v785
      %864 = vmatprep.subr.bf16.mxu0 0
      %865 = vmatpush1.bf16.msra.mxu0 %v786
      %866 = vmatprep.subr.bf16.mxu0 0
      %867 = vmatpush1.bf16.msra.mxu0 %v787
      %868 = vmatprep.subr.bf16.mxu0 0
      %869 = vmatpush1.bf16.msra.mxu0 %v788
      %870 = vmatprep.subr.bf16.mxu0 0
      %871 = vmatpush1.bf16.msra.mxu0 %v789
      %872 = vmatprep.subr.bf16.mxu0 0
      %873 = vmatpush1.bf16.msra.mxu0 %v790
      %874 = vmatprep.subr.bf16.mxu0 0
      %875 = vmatpush1.bf16.msra.mxu0 %v791
      %876 = vmatprep.subr.bf16.mxu0 0
      %877 = vmatpush1.bf16.msra.mxu0 0
      %878 = vmatprep.subr.bf16.mxu0 0
      %879 = vmatpush1.bf16.msra.mxu0 0
      %880 = vmatprep.subr.bf16.mxu0 0
      %881 = vmatpush1.bf16.msra.mxu0 0
      %882 = vmatprep.subr.bf16.mxu0 0
      %883 = vmatpush1.bf16.msra.mxu0 0
      %884 = vmatprep.mubr.bf16.mxu0 %v805
      %885 = vmatmul.mubr.bf16.gmra.mrb[0].mxu0 %v675
      %v886 = vpop.f32.mrb[0].mxu0
      %v887 = vadd.f32 0.0, %v886
      %v888 = vpop.f32.mrb[0].mxu0
      %v889 = vpop.f32.mrb[0].mxu0
      %v890 = vadd.f32 0.0, %v889
      %v891 = vpop.f32.mrb[0].mxu0
      %892 = vmatprep.mubr.bf16.mxu0 %v808
      %893 = vmatmul.mubr.bf16.gmra.mrb[0].mxu0 %v677
      %v894 = vpop.f32.mrb[0].mxu0
      %v895 = vadd.f32 0.0, %v894
      %v896 = vpop.f32.mrb[0].mxu0
      %v897 = vpop.f32.mrb[0].mxu0
      %v898 = vadd.f32 0.0, %v897
      %v899 = vpop.f32.mrb[0].mxu0
      %900 = vmatprep.mubr.bf16.mxu0 %v811
      %901 = vmatmul.mubr.bf16.gmra.mrb[0].mxu0 %v679
      %v902 = vpop.f32.mrb[0].mxu0
      %v903 = vadd.f32 0.0, %v902
      %v904 = vpop.f32.mrb[0].mxu0
      %v905 = vpop.f32.mrb[0].mxu0
      %v906 = vadd.f32 0.0, %v905
      %v907 = vpop.f32.mrb[0].mxu0
      %908 = vmatprep.mubr.bf16.mxu0 %v814
      %909 = vmatmul.mubr.bf16.gmra.mrb[0].mxu0 %v681
      %v910 = vpop.f32.mrb[0].mxu0
      %v911 = vadd.f32 0.0, %v910
      %v912 = vpop.f32.mrb[0].mxu0
      %v913 = vpop.f32.mrb[0].mxu0
      %v914 = vadd.f32 0.0, %v913
      %v915 = vpop.f32.mrb[0].mxu0
      %916 = vmatprep.mubr.bf16.mxu0 %v817
      %917 = vmatmul.mubr.bf16.gmra.mrb[0].mxu0 %v683
      %v918 = vpop.f32.mrb[0].mxu0
      %v919 = vadd.f32 0.0, %v918
      %v920 = vpop.f32.mrb[0].mxu0
      %v921 = vpop.f32.mrb[0].mxu0
      %v922 = vadd.f32 0.0, %v921
      %v923 = vpop.f32.mrb[0].mxu0
      %924 = vmatprep.mubr.bf16.mxu0 %v820
      %925 = vmatmul.mubr.bf16.gmra.mrb[0].mxu0 %v685
      %v926 = vpop.f32.mrb[0].mxu0
      %v927 = vadd.f32 0.0, %v926
      %v928 = vpop.f32.mrb[0].mxu0
      %v929 = vpop.f32.mrb[0].mxu0
      %v930 = vadd.f32 0.0, %v929
      %v931 = vpop.f32.mrb[0].mxu0
      %932 = vmatprep.mubr.bf16.mxu0 %v823
      %933 = vmatmul.mubr.bf16.gmra.mrb[0].mxu0 %v687
      %v934 = vpop.f32.mrb[0].mxu0
      %v935 = vadd.f32 0.0, %v934
      %v936 = vpop.f32.mrb[0].mxu0
      %v937 = vpop.f32.mrb[0].mxu0
      %v938 = vadd.f32 0.0, %v937
      %v939 = vpop.f32.mrb[0].mxu0
      %940 = vmatprep.mubr.bf16.mxu0 %v826
      %941 = vmatmul.mubr.bf16.gmra.mrb[0].mxu0 %v689
      %v942 = vpop.f32.mrb[0].mxu0
      %v943 = vadd.f32 0.0, %v942
      %v944 = vpop.f32.mrb[0].mxu0
      %v945 = vpop.f32.mrb[0].mxu0
      %v946 = vadd.f32 0.0, %v945
      %v947 = vpop.f32.mrb[0].mxu0
      %948 = vmatprep.mubr.bf16.mxu0 %v829
      %949 = vmatmul.mubr.bf16.gmra.mrb[0].mxu0 %v691
      %v950 = vpop.f32.mrb[0].mxu0
      %v951 = vadd.f32 0.0, %v950
      %v952 = vpop.f32.mrb[0].mxu0
      %v953 = vpop.f32.mrb[0].mxu0
      %v954 = vadd.f32 0.0, %v953
      %v955 = vpop.f32.mrb[0].mxu0
      %956 = vmatprep.mubr.bf16.mxu0 %v832
      %957 = vmatmul.mubr.bf16.gmra.mrb[0].mxu0 %v693
      %v958 = vpop.f32.mrb[0].mxu0
      %v959 = vadd.f32 0.0, %v958
      %v960 = vpop.f32.mrb[0].mxu0
      %v961 = vpop.f32.mrb[0].mxu0
      %v962 = vadd.f32 0.0, %v961
      %v963 = vpop.f32.mrb[0].mxu0
      %964 = vmatprep.mubr.bf16.mxu0 %v835
      %965 = vmatmul.mubr.bf16.gmra.mrb[0].mxu0 %v695
      %v966 = vpop.f32.mrb[0].mxu0
      %v967 = vadd.f32 0.0, %v966
      %v968 = vpop.f32.mrb[0].mxu0
      %v969 = vpop.f32.mrb[0].mxu0
      %v970 = vadd.f32 0.0, %v969
      %v971 = vpop.f32.mrb[0].mxu0
      %972 = vmatprep.mubr.bf16.mxu0 %v838
      %973 = vmatmul.mubr.bf16.gmra.mrb[0].mxu0 %v697
      %v974 = vpop.f32.mrb[0].mxu0
      %v975 = vadd.f32 0.0, %v974
      %v976 = vpop.f32.mrb[0].mxu0
      %v977 = vpop.f32.mrb[0].mxu0
      %v978 = vadd.f32 0.0, %v977
      %v979 = vpop.f32.mrb[0].mxu0
      %980 = vmatprep.mubr.bf16.mxu0 %v841
      %981 = vmatmul.mubr.bf16.gmra.mrb[0].mxu0 %v699
      %v982 = vpop.f32.mrb[0].mxu0
      %v983 = vadd.f32 0.0, %v982
      %v984 = vpop.f32.mrb[0].mxu0
      %v985 = vpop.f32.mrb[0].mxu0
      %v986 = vadd.f32 0.0, %v985
      %v987 = vpop.f32.mrb[0].mxu0
      %988 = vmatprep.mubr.bf16.mxu0 %v844
      %989 = vmatmul.mubr.bf16.gmra.mrb[0].mxu0 %v701
      %v990 = vpop.f32.mrb[0].mxu0
      %v991 = vadd.f32 0.0, %v990
      %v992 = vpop.f32.mrb[0].mxu0
      %v993 = vpop.f32.mrb[0].mxu0
      %v994 = vadd.f32 0.0, %v993
      %v995 = vpop.f32.mrb[0].mxu0
      %996 = vmatprep.mubr.bf16.mxu0 %v847
      %997 = vmatmul.mubr.bf16.gmra.mrb[0].mxu0 %v703
      %v998 = vpop.f32.mrb[0].mxu0
      %v999 = vadd.f32 0.0, %v998
      %v1000 = vpop.f32.mrb[0].mxu0
      %v1001 = vpop.f32.mrb[0].mxu0
      %v1002 = vadd.f32 0.0, %v1001
      %v1003 = vpop.f32.mrb[0].mxu0
      %1004 = vmatprep.mubr.bf16.mxu0 %v850
      %1005 = vmatmul.mubr.bf16.gmra.mrb[0].mxu0 %v705
      %v1006 = vpop.f32.mrb[0].mxu0
      %v1007 = vadd.f32 0.0, %v1006
      %v1008 = vpop.f32.mrb[0].mxu0
      %v1009 = vpop.f32.mrb[0].mxu0
      %v1010 = vadd.f32 0.0, %v1009
      %v1011 = vpop.f32.mrb[0].mxu0
      %1012 = vdwg.mxu0
      %v1037 = vunpack.c.l.b16 %v455
      %v1038 = vunpack.c.l.b16 %v456
      %v1039 = vunpack.c.l.b16 %v457
      %v1040 = vunpack.c.l.b16 %v458
      %v1041 = vunpack.c.l.b16 %v459
      %v1042 = vunpack.c.l.b16 %v460
      %v1043 = vunpack.c.l.b16 %v461
      %v1044 = vunpack.c.l.b16 %v462
      %v1045 = vunpack.c.l.b16 %v463
      %v1046 = vunpack.c.l.b16 %v464
      %v1047 = vunpack.c.l.b16 %v465
      %v1048 = vunpack.c.l.b16 %v466
      %v1049 = vunpack.c.l.b16 %v467
      %v1050 = vunpack.c.l.b16 %v468
      %v1051 = vunpack.c.l.b16 %v469
      %v1052 = vunpack.c.l.b16 %v470
      %v1053 = vunpack.c.l.b16 %v471
      %v1054 = vunpack.c.l.b16 %v472
      %v1055 = vunpack.c.l.b16 %v473
      %v1056 = vunpack.c.l.b16 %v474
      %v1057 = vunpack.c.l.b16 %v475
      %v1058 = vunpack.c.l.b16 %v476
      %v1059 = vunpack.c.l.b16 %v477
      %v1060 = vunpack.c.l.b16 %v478
      %v1061 = vpack.c.b16 %v1038, %v1037
      %v1062 = vpack.c.b16 %v1040, %v1039
      %v1063 = vpack.c.b16 %v1042, %v1041
      %v1064 = vpack.c.b16 %v1044, %v1043
      %v1065 = vpack.c.b16 %v1046, %v1045
      %v1066 = vpack.c.b16 %v1048, %v1047
      %v1067 = vpack.c.b16 %v1050, %v1049
      %v1068 = vpack.c.b16 %v1052, %v1051
      %v1069 = vpack.c.b16 %v1054, %v1053
      %v1070 = vpack.c.b16 %v1056, %v1055
      %v1071 = vpack.c.b16 %v1058, %v1057
      %v1072 = vpack.c.b16 %v1060, %v1059
      %v1086 = vsel %vm390, %v424, 0
      %v1089 = vsel %vm390, %v426, 0
      %v1092 = vsel %vm390, %v428, 0
      %v1095 = vsel %vm390, %v430, 0
      %v1098 = vsel %vm390, %v432, 0
      %v1101 = vsel %vm390, %v434, 0
      %v1104 = vsel %vm390, %v436, 0
      %v1107 = vsel %vm390, %v438, 0
      %v1110 = vsel %vm390, %v440, 0
      %v1113 = vsel %vm390, %v442, 0
      %v1116 = vsel %vm390, %v444, 0
      %v1119 = vsel %vm390, %v446, 0
      %v1122 = vsel %vm390, %v448, 0
      %v1125 = vsel %vm390, %v450, 0
      %v1128 = vsel %vm390, %v452, 0
      %v1131 = vsel %vm390, %v454, 0
      %1133 = vmatprep.subr.bf16.mxu0 0
      %1134 = vmatpush1.bf16.msra.mxu0 %v1061
      %1135 = vmatprep.subr.bf16.mxu0 0
      %1136 = vmatpush1.bf16.msra.mxu0 %v1062
      %1137 = vmatprep.subr.bf16.mxu0 0
      %1138 = vmatpush1.bf16.msra.mxu0 %v1063
      %1139 = vmatprep.subr.bf16.mxu0 0
      %1140 = vmatpush1.bf16.msra.mxu0 %v1064
      %1141 = vmatprep.subr.bf16.mxu0 0
      %1142 = vmatpush1.bf16.msra.mxu0 %v1065
      %1143 = vmatprep.subr.bf16.mxu0 0
      %1144 = vmatpush1.bf16.msra.mxu0 %v1066
      %1145 = vmatprep.subr.bf16.mxu0 0
      %1146 = vmatpush1.bf16.msra.mxu0 %v1067
      %1147 = vmatprep.subr.bf16.mxu0 0
      %1148 = vmatpush1.bf16.msra.mxu0 %v1068
      %1149 = vmatprep.subr.bf16.mxu0 0
      %1150 = vmatpush1.bf16.msra.mxu0 %v1069
      %1151 = vmatprep.subr.bf16.mxu0 0
      %1152 = vmatpush1.bf16.msra.mxu0 %v1070
      %1153 = vmatprep.subr.bf16.mxu0 0
      %1154 = vmatpush1.bf16.msra.mxu0 %v1071
      %1155 = vmatprep.subr.bf16.mxu0 0
      %1156 = vmatpush1.bf16.msra.mxu0 %v1072
      %1157 = vmatprep.subr.bf16.mxu0 0
      %1158 = vmatpush1.bf16.msra.mxu0 0
      %1159 = vmatprep.subr.bf16.mxu0 0
      %1160 = vmatpush1.bf16.msra.mxu0 0
      %1161 = vmatprep.subr.bf16.mxu0 0
      %1162 = vmatpush1.bf16.msra.mxu0 0
      %1163 = vmatprep.subr.bf16.mxu0 0
      %1164 = vmatpush1.bf16.msra.mxu0 0
      %1165 = vmatprep.mubr.bf16.mxu0 %v1086
      %1166 = vmatmul.mubr.bf16.gmra.mrb[0].mxu0 %v423
      %v1167 = vpop.f32.mrb[0].mxu0
      %v1168 = vadd.f32 %v887, %v1167
      %v1169 = vpop.f32.mrb[0].mxu0
      %v1170 = vpop.f32.mrb[0].mxu0
      %v1171 = vadd.f32 %v890, %v1170
      %v1172 = vpop.f32.mrb[0].mxu0
      %1173 = vmatprep.mubr.bf16.mxu0 %v1089
      %1174 = vmatmul.mubr.bf16.gmra.mrb[0].mxu0 %v425
      %v1175 = vpop.f32.mrb[0].mxu0
      %v1176 = vadd.f32 %v895, %v1175
      %v1177 = vpop.f32.mrb[0].mxu0
      %v1178 = vpop.f32.mrb[0].mxu0
      %v1179 = vadd.f32 %v898, %v1178
      %v1180 = vpop.f32.mrb[0].mxu0
      %1181 = vmatprep.mubr.bf16.mxu0 %v1092
      %1182 = vmatmul.mubr.bf16.gmra.mrb[0].mxu0 %v427
      %v1183 = vpop.f32.mrb[0].mxu0
      %v1184 = vadd.f32 %v903, %v1183
      %v1185 = vpop.f32.mrb[0].mxu0
      %v1186 = vpop.f32.mrb[0].mxu0
      %v1187 = vadd.f32 %v906, %v1186
      %v1188 = vpop.f32.mrb[0].mxu0
      %1189 = vmatprep.mubr.bf16.mxu0 %v1095
      %1190 = vmatmul.mubr.bf16.gmra.mrb[0].mxu0 %v429
      %v1191 = vpop.f32.mrb[0].mxu0
      %v1192 = vadd.f32 %v911, %v1191
      %v1193 = vpop.f32.mrb[0].mxu0
      %v1194 = vpop.f32.mrb[0].mxu0
      %v1195 = vadd.f32 %v914, %v1194
      %v1196 = vpop.f32.mrb[0].mxu0
      %1197 = vmatprep.mubr.bf16.mxu0 %v1098
      %1198 = vmatmul.mubr.bf16.gmra.mrb[0].mxu0 %v431
      %v1199 = vpop.f32.mrb[0].mxu0
      %v1200 = vadd.f32 %v919, %v1199
      %v1201 = vpop.f32.mrb[0].mxu0
      %v1202 = vpop.f32.mrb[0].mxu0
      %v1203 = vadd.f32 %v922, %v1202
      %v1204 = vpop.f32.mrb[0].mxu0
      %1205 = vmatprep.mubr.bf16.mxu0 %v1101
      %1206 = vmatmul.mubr.bf16.gmra.mrb[0].mxu0 %v433
      %v1207 = vpop.f32.mrb[0].mxu0
      %v1208 = vadd.f32 %v927, %v1207
      %v1209 = vpop.f32.mrb[0].mxu0
      %v1210 = vpop.f32.mrb[0].mxu0
      %v1211 = vadd.f32 %v930, %v1210
      %v1212 = vpop.f32.mrb[0].mxu0
      %1213 = vmatprep.mubr.bf16.mxu0 %v1104
      %1214 = vmatmul.mubr.bf16.gmra.mrb[0].mxu0 %v435
      %v1215 = vpop.f32.mrb[0].mxu0
      %v1216 = vadd.f32 %v935, %v1215
      %v1217 = vpop.f32.mrb[0].mxu0
      %v1218 = vpop.f32.mrb[0].mxu0
      %v1219 = vadd.f32 %v938, %v1218
      %v1220 = vpop.f32.mrb[0].mxu0
      %1221 = vmatprep.mubr.bf16.mxu0 %v1107
      %1222 = vmatmul.mubr.bf16.gmra.mrb[0].mxu0 %v437
      %v1223 = vpop.f32.mrb[0].mxu0
      %v1224 = vadd.f32 %v943, %v1223
      %v1225 = vpop.f32.mrb[0].mxu0
      %v1226 = vpop.f32.mrb[0].mxu0
      %v1227 = vadd.f32 %v946, %v1226
      %v1228 = vpop.f32.mrb[0].mxu0
      %1229 = vmatprep.mubr.bf16.mxu0 %v1110
      %1230 = vmatmul.mubr.bf16.gmra.mrb[0].mxu0 %v439
      %v1231 = vpop.f32.mrb[0].mxu0
      %v1232 = vadd.f32 %v951, %v1231
      %v1233 = vpop.f32.mrb[0].mxu0
      %v1234 = vpop.f32.mrb[0].mxu0
      %v1235 = vadd.f32 %v954, %v1234
      %v1236 = vpop.f32.mrb[0].mxu0
      %1237 = vmatprep.mubr.bf16.mxu0 %v1113
      %1238 = vmatmul.mubr.bf16.gmra.mrb[0].mxu0 %v441
      %v1239 = vpop.f32.mrb[0].mxu0
      %v1240 = vadd.f32 %v959, %v1239
      %v1241 = vpop.f32.mrb[0].mxu0
      %v1242 = vpop.f32.mrb[0].mxu0
      %v1243 = vadd.f32 %v962, %v1242
      %v1244 = vpop.f32.mrb[0].mxu0
      %1245 = vmatprep.mubr.bf16.mxu0 %v1116
      %1246 = vmatmul.mubr.bf16.gmra.mrb[0].mxu0 %v443
      %v1247 = vpop.f32.mrb[0].mxu0
      %v1248 = vadd.f32 %v967, %v1247
      %v1249 = vpop.f32.mrb[0].mxu0
      %v1250 = vpop.f32.mrb[0].mxu0
      %v1251 = vadd.f32 %v970, %v1250
      %v1252 = vpop.f32.mrb[0].mxu0
      %1253 = vmatprep.mubr.bf16.mxu0 %v1119
      %1254 = vmatmul.mubr.bf16.gmra.mrb[0].mxu0 %v445
      %v1255 = vpop.f32.mrb[0].mxu0
      %v1256 = vadd.f32 %v975, %v1255
      %v1257 = vpop.f32.mrb[0].mxu0
      %v1258 = vpop.f32.mrb[0].mxu0
      %v1259 = vadd.f32 %v978, %v1258
      %v1260 = vpop.f32.mrb[0].mxu0
      %1261 = vmatprep.mubr.bf16.mxu0 %v1122
      %1262 = vmatmul.mubr.bf16.gmra.mrb[0].mxu0 %v447
      %v1263 = vpop.f32.mrb[0].mxu0
      %v1264 = vadd.f32 %v983, %v1263
      %v1265 = vpop.f32.mrb[0].mxu0
      %v1266 = vpop.f32.mrb[0].mxu0
      %v1267 = vadd.f32 %v986, %v1266
      %v1268 = vpop.f32.mrb[0].mxu0
      %1269 = vmatprep.mubr.bf16.mxu0 %v1125
      %1270 = vmatmul.mubr.bf16.gmra.mrb[0].mxu0 %v449
      %v1271 = vpop.f32.mrb[0].mxu0
      %v1272 = vadd.f32 %v991, %v1271
      %v1273 = vpop.f32.mrb[0].mxu0
      %v1274 = vpop.f32.mrb[0].mxu0
      %v1275 = vadd.f32 %v994, %v1274
      %v1276 = vpop.f32.mrb[0].mxu0
      %1277 = vmatprep.mubr.bf16.mxu0 %v1128
      %1278 = vmatmul.mubr.bf16.gmra.mrb[0].mxu0 %v451
      %v1279 = vpop.f32.mrb[0].mxu0
      %v1280 = vadd.f32 %v999, %v1279
      %v1281 = vpop.f32.mrb[0].mxu0
      %v1282 = vpop.f32.mrb[0].mxu0
      %v1283 = vadd.f32 %v1002, %v1282
      %v1284 = vpop.f32.mrb[0].mxu0
      %1285 = vmatprep.mubr.bf16.mxu0 %v1131
      %1286 = vmatmul.mubr.bf16.gmra.mrb[0].mxu0 %v453
      %v1287 = vpop.f32.mrb[0].mxu0
      %v1288 = vadd.f32 %v1007, %v1287
      %v1289 = vpop.f32.mrb[0].mxu0
      %v1290 = vpop.f32.mrb[0].mxu0
      %v1291 = vadd.f32 %v1010, %v1290
      %v1292 = vpop.f32.mrb[0].mxu0
      %1293 = vdwg.mxu0
      %v1294 = vld [vmem:[%s219 + $0x2] sm:$0xff]
      %v1295 = vld [vmem:[%s219 + $0xa] sm:$0xff]
      %v1296 = vld [vmem:[%s219 + $0x1a] sm:$0xff]
      %v1297 = vld [vmem:[%s219 + $0x22] sm:$0xff]
      %v1298 = vld [vmem:[%s219 + $0x32] sm:$0xff]
      %v1299 = vld [vmem:[%s219 + $0x3a] sm:$0xff]
      %v1300 = vld [vmem:[%s219 + $0x4a] sm:$0xff]
      %v1301 = vld [vmem:[%s219 + $0x52] sm:$0xff]
      %v1302 = vld [vmem:[%s219 + $0x62] sm:$0xff]
      %v1303 = vld [vmem:[%s219 + $0x6a] sm:$0xff]
      %v1304 = vld [vmem:[%s219 + $0x7a] sm:$0xff]
      %v1305 = vld [vmem:[%s219 + $0x82] sm:$0xff]
      %v1306 = vld [vmem:[%s219 + $0x92] sm:$0xff]
      %v1307 = vld [vmem:[%s219 + $0x9a] sm:$0xff]
      %v1308 = vld [vmem:[%s219 + $0xaa] sm:$0xff]
      %v1309 = vld [vmem:[%s219 + $0xb2] sm:$0xff]
      %v1310 = vld [vmem:[%s219 + $0xc2] sm:$0xff]
      %v1311 = vld [vmem:[%s219 + $0xca] sm:$0xff]
      %v1312 = vld [vmem:[%s219 + $0xda] sm:$0xff]
      %v1313 = vld [vmem:[%s219 + $0xe2] sm:$0xff]
      %v1314 = vld [vmem:[%s219 + $0xf2] sm:$0xff]
      %v1315 = vld [vmem:[%s219 + $0xfa] sm:$0xff]
      %v1316 = vld [vmem:[%s219 + $0x10a] sm:$0xff]
      %v1317 = vld [vmem:[%s219 + $0x112] sm:$0xff]
      %v1318 = vld [vmem:[%s219 + $0x122] sm:$0xff]
      %v1319 = vld [vmem:[%s219 + $0x12a] sm:$0xff]
      %v1320 = vld [vmem:[%s219 + $0x13a] sm:$0xff]
      %v1321 = vld [vmem:[%s219 + $0x142] sm:$0xff]
      %v1322 = vld [vmem:[%s219 + $0x152] sm:$0xff]
      %v1323 = vld [vmem:[%s219 + $0x15a] sm:$0xff]
      %v1324 = vld [vmem:[%s219 + $0x16a] sm:$0xff]
      %v1325 = vld [vmem:[%s219 + $0x172] sm:$0xff]
      %v1326 = vld [vmem:[%s219 + $0x182] sm:$0xff]
      %v1327 = vld [vmem:[%s219 + $0x18a] sm:$0xff]
      %v1328 = vld [vmem:[%s219 + $0x19a] sm:$0xff]
      %v1329 = vld [vmem:[%s219 + $0x1a2] sm:$0xff]
      %1362 = vrot.lane.b32.xlu0 %v1296, 64
      %v1363 = vpop.permute.xlu0 %1362
      %1364 = vrot.lane.b32.xlu0 %v1297, 64
      %v1365 = vpop.permute.xlu0 %1364
      %1366 = vrot.lane.b32.xlu0 %v1298, 64
      %v1367 = vpop.permute.xlu0 %1366
      %1368 = vrot.lane.b32.xlu0 %v1299, 64
      %v1369 = vpop.permute.xlu0 %1368
      %1370 = vrot.lane.b32.xlu0 %v1300, 64
      %v1371 = vpop.permute.xlu0 %1370
      %1372 = vrot.lane.b32.xlu0 %v1301, 64
      %v1373 = vpop.permute.xlu0 %1372
      %1374 = vrot.lane.b32.xlu0 %v1302, 64
      %v1375 = vpop.permute.xlu0 %1374
      %1376 = vrot.lane.b32.xlu0 %v1303, 64
      %v1377 = vpop.permute.xlu0 %1376
      %1378 = vrot.lane.b32.xlu0 %v1304, 64
      %v1379 = vpop.permute.xlu0 %1378
      %1380 = vrot.lane.b32.xlu0 %v1305, 64
      %v1381 = vpop.permute.xlu0 %1380
      %1382 = vrot.lane.b32.xlu0 %v1306, 64
      %v1383 = vpop.permute.xlu0 %1382
      %1384 = vrot.lane.b32.xlu0 %v1307, 64
      %v1385 = vpop.permute.xlu0 %1384
      %1386 = vrot.lane.b32.xlu0 %v1308, 64
      %v1387 = vpop.permute.xlu0 %1386
      %1388 = vrot.lane.b32.xlu0 %v1309, 64
      %v1389 = vpop.permute.xlu0 %1388
      %1390 = vrot.lane.b32.xlu0 %v1310, 64
      %v1391 = vpop.permute.xlu0 %1390
      %1392 = vrot.lane.b32.xlu0 %v1311, 64
      %v1393 = vpop.permute.xlu0 %1392
      %1394 = vrot.lane.b32.xlu0 %v1312, 64
      %v1395 = vpop.permute.xlu0 %1394
      %1396 = vrot.lane.b32.xlu0 %v1313, 64
      %v1397 = vpop.permute.xlu0 %1396
      %1398 = vrot.lane.b32.xlu0 %v1314, 64
      %v1399 = vpop.permute.xlu0 %1398
      %1400 = vrot.lane.b32.xlu0 %v1315, 64
      %v1401 = vpop.permute.xlu0 %1400
      %1402 = vrot.lane.b32.xlu0 %v1316, 64
      %v1403 = vpop.permute.xlu0 %1402
      %1404 = vrot.lane.b32.xlu0 %v1317, 64
      %v1405 = vpop.permute.xlu0 %1404
      %1406 = vrot.lane.b32.xlu0 %v1318, 64
      %v1407 = vpop.permute.xlu0 %1406
      %1408 = vrot.lane.b32.xlu0 %v1319, 64
      %v1409 = vpop.permute.xlu0 %1408
      %1410 = vrot.lane.b32.xlu0 %v1320, 64
      %v1411 = vpop.permute.xlu0 %1410
      %1412 = vrot.lane.b32.xlu0 %v1321, 64
      %v1413 = vpop.permute.xlu0 %1412
      %1414 = vrot.lane.b32.xlu0 %v1322, 64
      %v1415 = vpop.permute.xlu0 %1414
      %1416 = vrot.lane.b32.xlu0 %v1323, 64
      %v1417 = vpop.permute.xlu0 %1416
      %1418 = vrot.lane.b32.xlu0 %v1324, 64
      %v1419 = vpop.permute.xlu0 %1418
      %1420 = vrot.lane.b32.xlu0 %v1325, 64
      %v1421 = vpop.permute.xlu0 %1420
      %1422 = vrot.lane.b32.xlu0 %v1326, 64
      %v1423 = vpop.permute.xlu0 %1422
      %1424 = vrot.lane.b32.xlu0 %v1327, 64
      %v1425 = vpop.permute.xlu0 %1424
      %v1458 = vsel %vm390, %v1294, %v1363
      %v1459 = vsel %vm390, %v1295, %v1365
      %v1460 = vsel %vm390, %v1296, %v1367
      %v1461 = vsel %vm390, %v1297, %v1369
      %v1462 = vsel %vm390, %v1298, %v1371
      %v1463 = vsel %vm390, %v1299, %v1373
      %v1464 = vsel %vm390, %v1300, %v1375
      %v1465 = vsel %vm390, %v1301, %v1377
      %v1466 = vsel %vm390, %v1302, %v1379
      %v1467 = vsel %vm390, %v1303, %v1381
      %v1468 = vsel %vm390, %v1304, %v1383
      %v1469 = vsel %vm390, %v1305, %v1385
      %v1470 = vsel %vm390, %v1306, %v1387
      %v1471 = vsel %vm390, %v1307, %v1389
      %v1472 = vsel %vm390, %v1308, %v1391
      %v1473 = vsel %vm390, %v1309, %v1393
      %v1474 = vsel %vm390, %v1310, %v1395
      %v1475 = vsel %vm390, %v1311, %v1397
      %v1476 = vsel %vm390, %v1312, %v1399
      %v1477 = vsel %vm390, %v1313, %v1401
      %v1478 = vsel %vm390, %v1314, %v1403
      %v1479 = vsel %vm390, %v1315, %v1405
      %v1480 = vsel %vm390, %v1316, %v1407
      %v1481 = vsel %vm390, %v1317, %v1409
      %v1482 = vsel %vm390, %v1318, %v1411
      %v1483 = vsel %vm390, %v1319, %v1413
      %v1484 = vsel %vm390, %v1320, %v1415
      %v1485 = vsel %vm390, %v1321, %v1417
      %v1486 = vsel %vm390, %v1322, %v1419
      %v1487 = vsel %vm390, %v1323, %v1421
      %v1488 = vsel %vm390, %v1324, %v1423
      %v1489 = vsel %vm390, %v1325, %v1425
      %v1490 = vpack.c.bf16 %v1459, %v1458
      %v1491 = vpack.c.bf16 %v1299, %v1298
      %v1492 = vpack.c.bf16 %v1461, %v1460
      %v1493 = vpack.c.bf16 %v1301, %v1300
      %v1494 = vpack.c.bf16 %v1463, %v1462
      %v1495 = vpack.c.bf16 %v1303, %v1302
      %v1496 = vpack.c.bf16 %v1465, %v1464
      %v1497 = vpack.c.bf16 %v1305, %v1304
      %v1498 = vpack.c.bf16 %v1467, %v1466
      %v1499 = vpack.c.bf16 %v1307, %v1306
      %v1500 = vpack.c.bf16 %v1469, %v1468
      %v1501 = vpack.c.bf16 %v1309, %v1308
      %v1502 = vpack.c.bf16 %v1471, %v1470
      %v1503 = vpack.c.bf16 %v1311, %v1310
      %v1504 = vpack.c.bf16 %v1473, %v1472
      %v1505 = vpack.c.bf16 %v1313, %v1312
      %v1506 = vpack.c.bf16 %v1475, %v1474
      %v1507 = vpack.c.bf16 %v1315, %v1314
      %v1508 = vpack.c.bf16 %v1477, %v1476
      %v1509 = vpack.c.bf16 %v1317, %v1316
      %v1510 = vpack.c.bf16 %v1479, %v1478
      %v1511 = vpack.c.bf16 %v1319, %v1318
      %v1512 = vpack.c.bf16 %v1481, %v1480
      %v1513 = vpack.c.bf16 %v1321, %v1320
      %v1514 = vpack.c.bf16 %v1483, %v1482
      %v1515 = vpack.c.bf16 %v1323, %v1322
      %v1516 = vpack.c.bf16 %v1485, %v1484
      %v1517 = vpack.c.bf16 %v1325, %v1324
      %v1518 = vpack.c.bf16 %v1487, %v1486
      %v1519 = vpack.c.bf16 %v1327, %v1326
      %v1520 = vpack.c.bf16 %v1489, %v1488
      %v1521 = vpack.c.bf16 %v1329, %v1328
      %s1522 = scalar_lea.vmem %s1, 192
      %v1523 = vld [vmem:[%s1522] sm:$0xf]
      %v1524 = vld [vmem:[%s1522 + $0x4] sm:$0xf]
      %v1525 = vld [vmem:[%s1522 + $0x8] sm:$0xf]
      %v1526 = vld [vmem:[%s1522 + $0xc] sm:$0xf]
      %v1527 = vld [vmem:[%s1522 + $0x10] sm:$0xf]
      %v1528 = vld [vmem:[%s1522 + $0x14] sm:$0xf]
      %v1529 = vld [vmem:[%s1522 + $0x18] sm:$0xf]
      %v1530 = vld [vmem:[%s1522 + $0x1c] sm:$0xf]
      %v1531 = vld [vmem:[%s1522 + $0x20] sm:$0xf]
      %v1532 = vld [vmem:[%s1522 + $0x24] sm:$0xf]
      %v1533 = vld [vmem:[%s1522 + $0x28] sm:$0xf]
      %v1534 = vld [vmem:[%s1522 + $0x2c] sm:$0xf]
      %v1535 = vld [vmem:[%s1522 + $0x30] sm:$0xf]
      %v1536 = vld [vmem:[%s1522 + $0x34] sm:$0xf]
      %v1537 = vld [vmem:[%s1522 + $0x38] sm:$0xf]
      %v1538 = vld [vmem:[%s1522 + $0x3c] sm:$0xf]
      %v1539 = vld [vmem:[%s1522 + $0x40] sm:$0xf]
      %v1540 = vld [vmem:[%s1522 + $0x44] sm:$0xf]
      %v1541 = vld [vmem:[%s1522 + $0x48] sm:$0xf]
      %v1542 = vld [vmem:[%s1522 + $0x4c] sm:$0xf]
      %v1543 = vld [vmem:[%s1522 + $0x50] sm:$0xf]
      %v1544 = vld [vmem:[%s1522 + $0x54] sm:$0xf]
      %v1545 = vld [vmem:[%s1522 + $0x58] sm:$0xf]
      %v1546 = vld [vmem:[%s1522 + $0x5c] sm:$0xf]
      %v1571 = vunpack.c.l.b16 %v1523
      %v1572 = vunpack.c.l.b16 %v1524
      %v1573 = vunpack.c.l.b16 %v1525
      %v1574 = vunpack.c.l.b16 %v1526
      %v1575 = vunpack.c.l.b16 %v1527
      %v1576 = vunpack.c.l.b16 %v1528
      %v1577 = vunpack.c.l.b16 %v1529
      %v1578 = vunpack.c.l.b16 %v1530
      %v1579 = vunpack.c.l.b16 %v1531
      %v1580 = vunpack.c.l.b16 %v1532
      %v1581 = vunpack.c.l.b16 %v1533
      %v1582 = vunpack.c.l.b16 %v1534
      %v1583 = vunpack.c.l.b16 %v1535
      %v1584 = vunpack.c.l.b16 %v1536
      %v1585 = vunpack.c.l.b16 %v1537
      %v1586 = vunpack.c.l.b16 %v1538
      %v1587 = vunpack.c.l.b16 %v1539
      %v1588 = vunpack.c.l.b16 %v1540
      %v1589 = vunpack.c.l.b16 %v1541
      %v1590 = vunpack.c.l.b16 %v1542
      %v1591 = vunpack.c.l.b16 %v1543
      %v1592 = vunpack.c.l.b16 %v1544
      %v1593 = vunpack.c.l.b16 %v1545
      %v1594 = vunpack.c.l.b16 %v1546
      %v1595 = vpack.c.b16 %v1572, %v1571
      %v1596 = vpack.c.b16 %v1574, %v1573
      %v1597 = vpack.c.b16 %v1576, %v1575
      %v1598 = vpack.c.b16 %v1578, %v1577
      %v1599 = vpack.c.b16 %v1580, %v1579
      %v1600 = vpack.c.b16 %v1582, %v1581
      %v1601 = vpack.c.b16 %v1584, %v1583
      %v1602 = vpack.c.b16 %v1586, %v1585
      %v1603 = vpack.c.b16 %v1588, %v1587
      %v1604 = vpack.c.b16 %v1590, %v1589
      %v1605 = vpack.c.b16 %v1592, %v1591
      %v1606 = vpack.c.b16 %v1594, %v1593
      %v1620 = vsel %vm390, %v1491, 0
      %v1623 = vsel %vm390, %v1493, 0
      %v1626 = vsel %vm390, %v1495, 0
      %v1629 = vsel %vm390, %v1497, 0
      %v1632 = vsel %vm390, %v1499, 0
      %v1635 = vsel %vm390, %v1501, 0
      %v1638 = vsel %vm390, %v1503, 0
      %v1641 = vsel %vm390, %v1505, 0
      %v1644 = vsel %vm390, %v1507, 0
      %v1647 = vsel %vm390, %v1509, 0
      %v1650 = vsel %vm390, %v1511, 0
      %v1653 = vsel %vm390, %v1513, 0
      %v1656 = vsel %vm390, %v1515, 0
      %v1659 = vsel %vm390, %v1517, 0
      %v1662 = vsel %vm390, %v1519, 0
      %v1665 = vsel %vm390, %v1521, 0
      %1667 = vmatprep.subr.bf16.mxu0 0
      %1668 = vmatpush1.bf16.msra.mxu0 %v1595
      %1669 = vmatprep.subr.bf16.mxu0 0
      %1670 = vmatpush1.bf16.msra.mxu0 %v1596
      %1671 = vmatprep.subr.bf16.mxu0 0
      %1672 = vmatpush1.bf16.msra.mxu0 %v1597
      %1673 = vmatprep.subr.bf16.mxu0 0
      %1674 = vmatpush1.bf16.msra.mxu0 %v1598
      %1675 = vmatprep.subr.bf16.mxu0 0
      %1676 = vmatpush1.bf16.msra.mxu0 %v1599
      %1677 = vmatprep.subr.bf16.mxu0 0
      %1678 = vmatpush1.bf16.msra.mxu0 %v1600
      %1679 = vmatprep.subr.bf16.mxu0 0
      %1680 = vmatpush1.bf16.msra.mxu0 %v1601
      %1681 = vmatprep.subr.bf16.mxu0 0
      %1682 = vmatpush1.bf16.msra.mxu0 %v1602
      %1683 = vmatprep.subr.bf16.mxu0 0
      %1684 = vmatpush1.bf16.msra.mxu0 %v1603
      %1685 = vmatprep.subr.bf16.mxu0 0
      %1686 = vmatpush1.bf16.msra.mxu0 %v1604
      %1687 = vmatprep.subr.bf16.mxu0 0
      %1688 = vmatpush1.bf16.msra.mxu0 %v1605
      %1689 = vmatprep.subr.bf16.mxu0 0
      %1690 = vmatpush1.bf16.msra.mxu0 %v1606
      %1691 = vmatprep.subr.bf16.mxu0 0
      %1692 = vmatpush1.bf16.msra.mxu0 0
      %1693 = vmatprep.subr.bf16.mxu0 0
      %1694 = vmatpush1.bf16.msra.mxu0 0
      %1695 = vmatprep.subr.bf16.mxu0 0
      %1696 = vmatpush1.bf16.msra.mxu0 0
      %1697 = vmatprep.subr.bf16.mxu0 0
      %1698 = vmatpush1.bf16.msra.mxu0 0
      %1699 = vmatprep.mubr.bf16.mxu0 %v1620
      %1700 = vmatmul.mubr.bf16.gmra.mrb[0].mxu0 %v1490
      %v1701 = vpop.f32.mrb[0].mxu0
      %v1702 = vadd.f32 0.0, %v1701
      %v1703 = vpop.f32.mrb[0].mxu0
      %v1704 = vpop.f32.mrb[0].mxu0
      %v1705 = vadd.f32 0.0, %v1704
      %v1706 = vpop.f32.mrb[0].mxu0
      %1707 = vmatprep.mubr.bf16.mxu0 %v1623
      %1708 = vmatmul.mubr.bf16.gmra.mrb[0].mxu0 %v1492
      %v1709 = vpop.f32.mrb[0].mxu0
      %v1710 = vadd.f32 0.0, %v1709
      %v1711 = vpop.f32.mrb[0].mxu0
      %v1712 = vpop.f32.mrb[0].mxu0
      %v1713 = vadd.f32 0.0, %v1712
      %v1714 = vpop.f32.mrb[0].mxu0
      %1715 = vmatprep.mubr.bf16.mxu0 %v1626
      %1716 = vmatmul.mubr.bf16.gmra.mrb[0].mxu0 %v1494
      %v1717 = vpop.f32.mrb[0].mxu0
      %v1718 = vadd.f32 0.0, %v1717
      %v1719 = vpop.f32.mrb[0].mxu0
      %v1720 = vpop.f32.mrb[0].mxu0
      %v1721 = vadd.f32 0.0, %v1720
      %v1722 = vpop.f32.mrb[0].mxu0
      %1723 = vmatprep.mubr.bf16.mxu0 %v1629
      %1724 = vmatmul.mubr.bf16.gmra.mrb[0].mxu0 %v1496
      %v1725 = vpop.f32.mrb[0].mxu0
      %v1726 = vadd.f32 0.0, %v1725
      %v1727 = vpop.f32.mrb[0].mxu0
      %v1728 = vpop.f32.mrb[0].mxu0
      %v1729 = vadd.f32 0.0, %v1728
      %v1730 = vpop.f32.mrb[0].mxu0
      %1731 = vmatprep.mubr.bf16.mxu0 %v1632
      %1732 = vmatmul.mubr.bf16.gmra.mrb[0].mxu0 %v1498
      %v1733 = vpop.f32.mrb[0].mxu0
      %v1734 = vadd.f32 0.0, %v1733
      %v1735 = vpop.f32.mrb[0].mxu0
      %v1736 = vpop.f32.mrb[0].mxu0
      %v1737 = vadd.f32 0.0, %v1736
      %v1738 = vpop.f32.mrb[0].mxu0
      %1739 = vmatprep.mubr.bf16.mxu0 %v1635
      %1740 = vmatmul.mubr.bf16.gmra.mrb[0].mxu0 %v1500
      %v1741 = vpop.f32.mrb[0].mxu0
      %v1742 = vadd.f32 0.0, %v1741
      %v1743 = vpop.f32.mrb[0].mxu0
      %v1744 = vpop.f32.mrb[0].mxu0
      %v1745 = vadd.f32 0.0, %v1744
      %v1746 = vpop.f32.mrb[0].mxu0
      %1747 = vmatprep.mubr.bf16.mxu0 %v1638
      %1748 = vmatmul.mubr.bf16.gmra.mrb[0].mxu0 %v1502
      %v1749 = vpop.f32.mrb[0].mxu0
      %v1750 = vadd.f32 0.0, %v1749
      %v1751 = vpop.f32.mrb[0].mxu0
      %v1752 = vpop.f32.mrb[0].mxu0
      %v1753 = vadd.f32 0.0, %v1752
      %v1754 = vpop.f32.mrb[0].mxu0
      %1755 = vmatprep.mubr.bf16.mxu0 %v1641
      %1756 = vmatmul.mubr.bf16.gmra.mrb[0].mxu0 %v1504
      %v1757 = vpop.f32.mrb[0].mxu0
      %v1758 = vadd.f32 0.0, %v1757
      %v1759 = vpop.f32.mrb[0].mxu0
      %v1760 = vpop.f32.mrb[0].mxu0
      %v1761 = vadd.f32 0.0, %v1760
      %v1762 = vpop.f32.mrb[0].mxu0
      %1763 = vmatprep.mubr.bf16.mxu0 %v1644
      %1764 = vmatmul.mubr.bf16.gmra.mrb[0].mxu0 %v1506
      %v1765 = vpop.f32.mrb[0].mxu0
      %v1766 = vadd.f32 0.0, %v1765
      %v1767 = vpop.f32.mrb[0].mxu0
      %v1768 = vpop.f32.mrb[0].mxu0
      %v1769 = vadd.f32 0.0, %v1768
      %v1770 = vpop.f32.mrb[0].mxu0
      %1771 = vmatprep.mubr.bf16.mxu0 %v1647
      %1772 = vmatmul.mubr.bf16.gmra.mrb[0].mxu0 %v1508
      %v1773 = vpop.f32.mrb[0].mxu0
      %v1774 = vadd.f32 0.0, %v1773
      %v1775 = vpop.f32.mrb[0].mxu0
      %v1776 = vpop.f32.mrb[0].mxu0
      %v1777 = vadd.f32 0.0, %v1776
      %v1778 = vpop.f32.mrb[0].mxu0
      %1779 = vmatprep.mubr.bf16.mxu0 %v1650
      %1780 = vmatmul.mubr.bf16.gmra.mrb[0].mxu0 %v1510
      %v1781 = vpop.f32.mrb[0].mxu0
      %v1782 = vadd.f32 0.0, %v1781
      %v1783 = vpop.f32.mrb[0].mxu0
      %v1784 = vpop.f32.mrb[0].mxu0
      %v1785 = vadd.f32 0.0, %v1784
      %v1786 = vpop.f32.mrb[0].mxu0
      %1787 = vmatprep.mubr.bf16.mxu0 %v1653
      %1788 = vmatmul.mubr.bf16.gmra.mrb[0].mxu0 %v1512
      %v1789 = vpop.f32.mrb[0].mxu0
      %v1790 = vadd.f32 0.0, %v1789
      %v1791 = vpop.f32.mrb[0].mxu0
      %v1792 = vpop.f32.mrb[0].mxu0
      %v1793 = vadd.f32 0.0, %v1792
      %v1794 = vpop.f32.mrb[0].mxu0
      %1795 = vmatprep.mubr.bf16.mxu0 %v1656
      %1796 = vmatmul.mubr.bf16.gmra.mrb[0].mxu0 %v1514
      %v1797 = vpop.f32.mrb[0].mxu0
      %v1798 = vadd.f32 0.0, %v1797
      %v1799 = vpop.f32.mrb[0].mxu0
      %v1800 = vpop.f32.mrb[0].mxu0
      %v1801 = vadd.f32 0.0, %v1800
      %v1802 = vpop.f32.mrb[0].mxu0
      %1803 = vmatprep.mubr.bf16.mxu0 %v1659
      %1804 = vmatmul.mubr.bf16.gmra.mrb[0].mxu0 %v1516
      %v1805 = vpop.f32.mrb[0].mxu0
      %v1806 = vadd.f32 0.0, %v1805
      %v1807 = vpop.f32.mrb[0].mxu0
      %v1808 = vpop.f32.mrb[0].mxu0
      %v1809 = vadd.f32 0.0, %v1808
      %v1810 = vpop.f32.mrb[0].mxu0
      %1811 = vmatprep.mubr.bf16.mxu0 %v1662
      %1812 = vmatmul.mubr.bf16.gmra.mrb[0].mxu0 %v1518
      %v1813 = vpop.f32.mrb[0].mxu0
      %v1814 = vadd.f32 0.0, %v1813
      %v1815 = vpop.f32.mrb[0].mxu0
      %v1816 = vpop.f32.mrb[0].mxu0
      %v1817 = vadd.f32 0.0, %v1816
      %v1818 = vpop.f32.mrb[0].mxu0
      %1819 = vmatprep.mubr.bf16.mxu0 %v1665
      %1820 = vmatmul.mubr.bf16.gmra.mrb[0].mxu0 %v1520
      %v1821 = vpop.f32.mrb[0].mxu0
      %v1822 = vadd.f32 0.0, %v1821
      %v1823 = vpop.f32.mrb[0].mxu0
      %v1824 = vpop.f32.mrb[0].mxu0
      %v1825 = vadd.f32 0.0, %v1824
      %v1826 = vpop.f32.mrb[0].mxu0
      %1827 = vdwg.mxu0
      %v1828 = vadd.f32 %v1168, %v1702
      %v1829 = vadd.f32 %v1171, %v1705
      %v1830 = vadd.f32 %v1176, %v1710
      %v1831 = vadd.f32 %v1179, %v1713
      %v1832 = vadd.f32 %v1184, %v1718
      %v1833 = vadd.f32 %v1187, %v1721
      %v1834 = vadd.f32 %v1192, %v1726
      %v1835 = vadd.f32 %v1195, %v1729
      %v1836 = vadd.f32 %v1200, %v1734
      %v1837 = vadd.f32 %v1203, %v1737
      %v1838 = vadd.f32 %v1208, %v1742
      %v1839 = vadd.f32 %v1211, %v1745
      %v1840 = vadd.f32 %v1216, %v1750
      %v1841 = vadd.f32 %v1219, %v1753
      %v1842 = vadd.f32 %v1224, %v1758
      %v1843 = vadd.f32 %v1227, %v1761
      %v1844 = vadd.f32 %v1232, %v1766
      %v1845 = vadd.f32 %v1235, %v1769
      %v1846 = vadd.f32 %v1240, %v1774
      %v1847 = vadd.f32 %v1243, %v1777
      %v1848 = vadd.f32 %v1248, %v1782
      %v1849 = vadd.f32 %v1251, %v1785
      %v1850 = vadd.f32 %v1256, %v1790
      %v1851 = vadd.f32 %v1259, %v1793
      %v1852 = vadd.f32 %v1264, %v1798
      %v1853 = vadd.f32 %v1267, %v1801
      %v1854 = vadd.f32 %v1272, %v1806
      %v1855 = vadd.f32 %v1275, %v1809
      %v1856 = vadd.f32 %v1280, %v1814
      %v1857 = vadd.f32 %v1283, %v1817
      %v1858 = vadd.f32 %v1288, %v1822
      %v1859 = vadd.f32 %v1291, %v1825
      %v1860 = vld [vmem:[%s2] sm:$0x1]
      %v1862 = vlaneseq
      %v1863 = vshrl.u32 %v1862, 7
      %v1864 = vsub.s32 0, %v1863
      %v1865 = vrot.slane %v1860, %v1864
      %v1867 = vadd.f32 %v1828, %v1865
      %v1868 = vadd.f32 %v1829, %v1865
      %v1869 = vadd.f32 %v1830, %v1865
      %v1870 = vadd.f32 %v1831, %v1865
      %v1871 = vadd.f32 %v1832, %v1865
      %v1872 = vadd.f32 %v1833, %v1865
      %v1873 = vadd.f32 %v1834, %v1865
      %v1874 = vadd.f32 %v1835, %v1865
      %v1875 = vadd.f32 %v1836, %v1865
      %v1876 = vadd.f32 %v1837, %v1865
      %v1877 = vadd.f32 %v1838, %v1865
      %v1878 = vadd.f32 %v1839, %v1865
      %v1879 = vadd.f32 %v1840, %v1865
      %v1880 = vadd.f32 %v1841, %v1865
      %v1881 = vadd.f32 %v1842, %v1865
      %v1882 = vadd.f32 %v1843, %v1865
      %v1883 = vadd.f32 %v1844, %v1865
      %v1884 = vadd.f32 %v1845, %v1865
      %v1885 = vadd.f32 %v1846, %v1865
      %v1886 = vadd.f32 %v1847, %v1865
      %v1887 = vadd.f32 %v1848, %v1865
      %v1888 = vadd.f32 %v1849, %v1865
      %v1889 = vadd.f32 %v1850, %v1865
      %v1890 = vadd.f32 %v1851, %v1865
      %v1891 = vadd.f32 %v1852, %v1865
      %v1892 = vadd.f32 %v1853, %v1865
      %v1893 = vadd.f32 %v1854, %v1865
      %v1894 = vadd.f32 %v1855, %v1865
      %v1895 = vadd.f32 %v1856, %v1865
      %v1896 = vadd.f32 %v1857, %v1865
      %v1897 = vadd.f32 %v1858, %v1865
      %v1898 = vadd.f32 %v1859, %v1865
      %v1899 = vmul.f32 %v1867, 0.1
      %v1900 = vmul.f32 %v1868, 0.1
      %v1901 = vmul.f32 %v1869, 0.1
      %v1902 = vmul.f32 %v1870, 0.1
      %v1903 = vmul.f32 %v1871, 0.1
      %v1904 = vmul.f32 %v1872, 0.1
      %v1905 = vmul.f32 %v1873, 0.1
      %v1906 = vmul.f32 %v1874, 0.1
      %v1907 = vmul.f32 %v1875, 0.1
      %v1908 = vmul.f32 %v1876, 0.1
      %v1909 = vmul.f32 %v1877, 0.1
      %v1910 = vmul.f32 %v1878, 0.1
      %v1911 = vmul.f32 %v1879, 0.1
      %v1912 = vmul.f32 %v1880, 0.1
      %v1913 = vmul.f32 %v1881, 0.1
      %v1914 = vmul.f32 %v1882, 0.1
      %v1915 = vmul.f32 %v1883, 0.1
      %v1916 = vmul.f32 %v1884, 0.1
      %v1917 = vmul.f32 %v1885, 0.1
      %v1918 = vmul.f32 %v1886, 0.1
      %v1919 = vmul.f32 %v1887, 0.1
      %v1920 = vmul.f32 %v1888, 0.1
      %v1921 = vmul.f32 %v1889, 0.1
      %v1922 = vmul.f32 %v1890, 0.1
      %v1923 = vmul.f32 %v1891, 0.1
      %v1924 = vmul.f32 %v1892, 0.1
      %v1925 = vmul.f32 %v1893, 0.1
      %v1926 = vmul.f32 %v1894, 0.1
      %v1927 = vmul.f32 %v1895, 0.1
      %v1928 = vmul.f32 %v1896, 0.1
      %v1929 = vmul.f32 %v1897, 0.1
      %v1930 = vmul.f32 %v1898, 0.1
      %v1931 = vmax.f32 %v1867, %v1899
      %v1932 = vmax.f32 %v1868, %v1900
      %v1933 = vmax.f32 %v1869, %v1901
      %v1934 = vmax.f32 %v1870, %v1902
      %v1935 = vmax.f32 %v1871, %v1903
      %v1936 = vmax.f32 %v1872, %v1904
      %v1937 = vmax.f32 %v1873, %v1905
      %v1938 = vmax.f32 %v1874, %v1906
      %v1939 = vmax.f32 %v1875, %v1907
      %v1940 = vmax.f32 %v1876, %v1908
      %v1941 = vmax.f32 %v1877, %v1909
      %v1942 = vmax.f32 %v1878, %v1910
      %v1943 = vmax.f32 %v1879, %v1911
      %v1944 = vmax.f32 %v1880, %v1912
      %v1945 = vmax.f32 %v1881, %v1913
      %v1946 = vmax.f32 %v1882, %v1914
      %v1947 = vmax.f32 %v1883, %v1915
      %v1948 = vmax.f32 %v1884, %v1916
      %v1949 = vmax.f32 %v1885, %v1917
      %v1950 = vmax.f32 %v1886, %v1918
      %v1951 = vmax.f32 %v1887, %v1919
      %v1952 = vmax.f32 %v1888, %v1920
      %v1953 = vmax.f32 %v1889, %v1921
      %v1954 = vmax.f32 %v1890, %v1922
      %v1955 = vmax.f32 %v1891, %v1923
      %v1956 = vmax.f32 %v1892, %v1924
      %v1957 = vmax.f32 %v1893, %v1925
      %v1958 = vmax.f32 %v1894, %v1926
      %v1959 = vmax.f32 %v1895, %v1927
      %v1960 = vmax.f32 %v1896, %v1928
      %v1961 = vmax.f32 %v1897, %v1929
      %v1962 = vmax.f32 %v1898, %v1930
      %1963 = vst.msk [vmem:[#allocation2] sm:$0xff] %vm390, 0.0
      %1964 = vst.msk [vmem:[#allocation2 + $0x8] sm:$0xff] %vm390, 0.0
      %vm1965 = vcmask 517120
      %1966 = vst.msk [vmem:[#allocation2 + $0x10] sm:$0x3] %vm1965, 0.0
      %s1967 = scalar_lea.vmem [#allocation2], 408
      %1968 = vst.msk [vmem:[%s1967] sm:$0xff] %vm390, 0.0
      %1969 = vst.msk [vmem:[%s1967 + $0x8] sm:$0xff] %vm390, 0.0
      %1970 = vst.msk [vmem:[%s1967 + $0x10] sm:$0x3] %vm1965, 0.0
      %vm1971 = vcmask 516096
      %1972 = vst.msk [vmem:[#allocation2] sm:$0x1] %vm1971, 0.0
      %1973 = vst.msk [vmem:[#allocation2 + $0x18] sm:$0x1] %vm1971, 0.0
      %1974 = vst.msk [vmem:[#allocation2 + $0x30] sm:$0x1] %vm1971, 0.0
      %1975 = vst.msk [vmem:[#allocation2 + $0x48] sm:$0x1] %vm1971, 0.0
      %1976 = vst.msk [vmem:[#allocation2 + $0x60] sm:$0x1] %vm1971, 0.0
      %1977 = vst.msk [vmem:[#allocation2 + $0x78] sm:$0x1] %vm1971, 0.0
      %1978 = vst.msk [vmem:[#allocation2 + $0x90] sm:$0x1] %vm1971, 0.0
      %1979 = vst.msk [vmem:[#allocation2 + $0xa8] sm:$0x1] %vm1971, 0.0
      %1980 = vst.msk [vmem:[#allocation2 + $0xc0] sm:$0x1] %vm1971, 0.0
      %1981 = vst.msk [vmem:[#allocation2 + $0xd8] sm:$0x1] %vm1971, 0.0
      %1982 = vst.msk [vmem:[#allocation2 + $0xf0] sm:$0x1] %vm1971, 0.0
      %1983 = vst.msk [vmem:[#allocation2 + $0x108] sm:$0x1] %vm1971, 0.0
      %1984 = vst.msk [vmem:[#allocation2 + $0x120] sm:$0x1] %vm1971, 0.0
      %1985 = vst.msk [vmem:[#allocation2 + $0x138] sm:$0x1] %vm1971, 0.0
      %1986 = vst.msk [vmem:[#allocation2 + $0x150] sm:$0x1] %vm1971, 0.0
      %1987 = vst.msk [vmem:[#allocation2 + $0x168] sm:$0x1] %vm1971, 0.0
      %1988 = vst.msk [vmem:[#allocation2 + $0x180] sm:$0x1] %vm1971, 0.0
      %1989 = vst.msk [vmem:[#allocation2 + $0x198] sm:$0x1] %vm1971, 0.0
      %1990 = vst.msk [vmem:[#allocation2 + $0x11] sm:$0x1] %vm1971, 0.0
      %1991 = vst.msk [vmem:[#allocation2 + $0x29] sm:$0x1] %vm1971, 0.0
      %1992 = vst.msk [vmem:[#allocation2 + $0x41] sm:$0x1] %vm1971, 0.0
      %1993 = vst.msk [vmem:[#allocation2 + $0x59] sm:$0x1] %vm1971, 0.0
      %1994 = vst.msk [vmem:[#allocation2 + $0x71] sm:$0x1] %vm1971, 0.0
      %1995 = vst.msk [vmem:[#allocation2 + $0x89] sm:$0x1] %vm1971, 0.0
      %1996 = vst.msk [vmem:[#allocation2 + $0xa1] sm:$0x1] %vm1971, 0.0
      %1997 = vst.msk [vmem:[#allocation2 + $0xb9] sm:$0x1] %vm1971, 0.0
      %1998 = vst.msk [vmem:[#allocation2 + $0xd1] sm:$0x1] %vm1971, 0.0
      %1999 = vst.msk [vmem:[#allocation2 + $0xe9] sm:$0x1] %vm1971, 0.0
      %2000 = vst.msk [vmem:[#allocation2 + $0x101] sm:$0x1] %vm1971, 0.0
      %2001 = vst.msk [vmem:[#allocation2 + $0x119] sm:$0x1] %vm1971, 0.0
      %2002 = vst.msk [vmem:[#allocation2 + $0x131] sm:$0x1] %vm1971, 0.0
      %2003 = vst.msk [vmem:[#allocation2 + $0x149] sm:$0x1] %vm1971, 0.0
      %2004 = vst.msk [vmem:[#allocation2 + $0x161] sm:$0x1] %vm1971, 0.0
      %2005 = vst.msk [vmem:[#allocation2 + $0x179] sm:$0x1] %vm1971, 0.0
      %2006 = vst.msk [vmem:[#allocation2 + $0x191] sm:$0x1] %vm1971, 0.0
      %2007 = vst.msk [vmem:[#allocation2 + $0x1a9] sm:$0x1] %vm1971, 0.0
      %s2008 = scalar_lea.vmem [#allocation2], 24
      %2009 = vst.msk [vmem:[%s2008 + $0x1] sm:$0xff] %vm390, %v1931
      %2010 = vst.msk [vmem:[%s2008 + $0x9] sm:$0xff] %vm390, %v1932
      %2011 = vst.msk [vmem:[%s2008 + $0x19] sm:$0xff] %vm390, %v1933
      %2012 = vst.msk [vmem:[%s2008 + $0x21] sm:$0xff] %vm390, %v1934
      %2013 = vst.msk [vmem:[%s2008 + $0x31] sm:$0xff] %vm390, %v1935
      %2014 = vst.msk [vmem:[%s2008 + $0x39] sm:$0xff] %vm390, %v1936
      %2015 = vst.msk [vmem:[%s2008 + $0x49] sm:$0xff] %vm390, %v1937
      %2016 = vst.msk [vmem:[%s2008 + $0x51] sm:$0xff] %vm390, %v1938
      %2017 = vst.msk [vmem:[%s2008 + $0x61] sm:$0xff] %vm390, %v1939
      %2018 = vst.msk [vmem:[%s2008 + $0x69] sm:$0xff] %vm390, %v1940
      %2019 = vst.msk [vmem:[%s2008 + $0x79] sm:$0xff] %vm390, %v1941
      %2020 = vst.msk [vmem:[%s2008 + $0x81] sm:$0xff] %vm390, %v1942
      %2021 = vst.msk [vmem:[%s2008 + $0x91] sm:$0xff] %vm390, %v1943
      %2022 = vst.msk [vmem:[%s2008 + $0x99] sm:$0xff] %vm390, %v1944
      %2023 = vst.msk [vmem:[%s2008 + $0xa9] sm:$0xff] %vm390, %v1945
      %2024 = vst.msk [vmem:[%s2008 + $0xb1] sm:$0xff] %vm390, %v1946
      %2025 = vst.msk [vmem:[%s2008 + $0xc1] sm:$0xff] %vm390, %v1947
      %2026 = vst.msk [vmem:[%s2008 + $0xc9] sm:$0xff] %vm390, %v1948
      %2027 = vst.msk [vmem:[%s2008 + $0xd9] sm:$0xff] %vm390, %v1949
      %2028 = vst.msk [vmem:[%s2008 + $0xe1] sm:$0xff] %vm390, %v1950
      %2029 = vst.msk [vmem:[%s2008 + $0xf1] sm:$0xff] %vm390, %v1951
      %2030 = vst.msk [vmem:[%s2008 + $0xf9] sm:$0xff] %vm390, %v1952
      %2031 = vst.msk [vmem:[%s2008 + $0x109] sm:$0xff] %vm390, %v1953
      %2032 = vst.msk [vmem:[%s2008 + $0x111] sm:$0xff] %vm390, %v1954
      %2033 = vst.msk [vmem:[%s2008 + $0x121] sm:$0xff] %vm390, %v1955
      %2034 = vst.msk [vmem:[%s2008 + $0x129] sm:$0xff] %vm390, %v1956
      %2035 = vst.msk [vmem:[%s2008 + $0x139] sm:$0xff] %vm390, %v1957
      %2036 = vst.msk [vmem:[%s2008 + $0x141] sm:$0xff] %vm390, %v1958
      %2037 = vst.msk [vmem:[%s2008 + $0x151] sm:$0xff] %vm390, %v1959
      %2038 = vst.msk [vmem:[%s2008 + $0x159] sm:$0xff] %vm390, %v1960
      %2039 = vst.msk [vmem:[%s2008 + $0x169] sm:$0xff] %vm390, %v1961
      %2040 = vst.msk [vmem:[%s2008 + $0x171] sm:$0xff] %vm390, %v1962
      %v2041 = vld [vmem:[#allocation2] sm:$0xff]
      %v2042 = vld [vmem:[#allocation2 + $0x8] sm:$0xff]
      %v2043 = vld [vmem:[#allocation2 + $0x18] sm:$0xff]
      %v2044 = vld [vmem:[#allocation2 + $0x20] sm:$0xff]
      %v2045 = vld [vmem:[#allocation2 + $0x30] sm:$0xff]
      %v2046 = vld [vmem:[#allocation2 + $0x38] sm:$0xff]
      %v2047 = vld [vmem:[#allocation2 + $0x48] sm:$0xff]
      %v2048 = vld [vmem:[#allocation2 + $0x50] sm:$0xff]
      %v2049 = vld [vmem:[#allocation2 + $0x60] sm:$0xff]
      %v2050 = vld [vmem:[#allocation2 + $0x68] sm:$0xff]
      %v2051 = vld [vmem:[#allocation2 + $0x78] sm:$0xff]
      %v2052 = vld [vmem:[#allocation2 + $0x80] sm:$0xff]
      %v2053 = vld [vmem:[#allocation2 + $0x90] sm:$0xff]
      %v2054 = vld [vmem:[#allocation2 + $0x98] sm:$0xff]
      %v2055 = vld [vmem:[#allocation2 + $0xa8] sm:$0xff]
      %v2056 = vld [vmem:[#allocation2 + $0xb0] sm:$0xff]
      %v2057 = vld [vmem:[#allocation2 + $0xc0] sm:$0xff]
      %v2058 = vld [vmem:[#allocation2 + $0xc8] sm:$0xff]
      %v2059 = vld [vmem:[#allocation2 + $0xd8] sm:$0xff]
      %v2060 = vld [vmem:[#allocation2 + $0xe0] sm:$0xff]
      %v2061 = vld [vmem:[#allocation2 + $0xf0] sm:$0xff]
      %v2062 = vld [vmem:[#allocation2 + $0xf8] sm:$0xff]
      %v2063 = vld [vmem:[#allocation2 + $0x108] sm:$0xff]
      %v2064 = vld [vmem:[#allocation2 + $0x110] sm:$0xff]
      %v2065 = vld [vmem:[#allocation2 + $0x120] sm:$0xff]
      %v2066 = vld [vmem:[#allocation2 + $0x128] sm:$0xff]
      %v2067 = vld [vmem:[#allocation2 + $0x138] sm:$0xff]
      %v2068 = vld [vmem:[#allocation2 + $0x140] sm:$0xff]
      %v2069 = vld [vmem:[#allocation2 + $0x150] sm:$0xff]
      %v2070 = vld [vmem:[#allocation2 + $0x158] sm:$0xff]
      %v2071 = vld [vmem:[#allocation2 + $0x168] sm:$0xff]
      %v2072 = vld [vmem:[#allocation2 + $0x170] sm:$0xff]
      %v2073 = vld [vmem:[#allocation2 + $0x180] sm:$0xff]
      %v2074 = vld [vmem:[#allocation2 + $0x188] sm:$0xff]
      %v2075 = vld [vmem:[#allocation2 + $0x198] sm:$0xff]
      %v2076 = vld [vmem:[#allocation2 + $0x1a0] sm:$0xff]
      %2109 = vrot.lane.b32.xlu0 %v2043, 64
      %v2110 = vpop.permute.xlu0 %2109
      %2111 = vrot.lane.b32.xlu0 %v2044, 64
      %v2112 = vpop.permute.xlu0 %2111
      %2113 = vrot.lane.b32.xlu0 %v2045, 64
      %v2114 = vpop.permute.xlu0 %2113
      %2115 = vrot.lane.b32.xlu0 %v2046, 64
      %v2116 = vpop.permute.xlu0 %2115
      %2117 = vrot.lane.b32.xlu0 %v2047, 64
      %v2118 = vpop.permute.xlu0 %2117
      %2119 = vrot.lane.b32.xlu0 %v2048, 64
      %v2120 = vpop.permute.xlu0 %2119
      %2121 = vrot.lane.b32.xlu0 %v2049, 64
      %v2122 = vpop.permute.xlu0 %2121
      %2123 = vrot.lane.b32.xlu0 %v2050, 64
      %v2124 = vpop.permute.xlu0 %2123
      %2125 = vrot.lane.b32.xlu0 %v2051, 64
      %v2126 = vpop.permute.xlu0 %2125
      %2127 = vrot.lane.b32.xlu0 %v2052, 64
      %v2128 = vpop.permute.xlu0 %2127
      %2129 = vrot.lane.b32.xlu0 %v2053, 64
      %v2130 = vpop.permute.xlu0 %2129
      %2131 = vrot.lane.b32.xlu0 %v2054, 64
      %v2132 = vpop.permute.xlu0 %2131
      %2133 = vrot.lane.b32.xlu0 %v2055, 64
      %v2134 = vpop.permute.xlu0 %2133
      %2135 = vrot.lane.b32.xlu0 %v2056, 64
      %v2136 = vpop.permute.xlu0 %2135
      %2137 = vrot.lane.b32.xlu0 %v2057, 64
      %v2138 = vpop.permute.xlu0 %2137
      %2139 = vrot.lane.b32.xlu0 %v2058, 64
      %v2140 = vpop.permute.xlu0 %2139
      %2141 = vrot.lane.b32.xlu0 %v2059, 64
      %v2142 = vpop.permute.xlu0 %2141
      %2143 = vrot.lane.b32.xlu0 %v2060, 64
      %v2144 = vpop.permute.xlu0 %2143
      %2145 = vrot.lane.b32.xlu0 %v2061, 64
      %v2146 = vpop.permute.xlu0 %2145
      %2147 = vrot.lane.b32.xlu0 %v2062, 64
      %v2148 = vpop.permute.xlu0 %2147
      %2149 = vrot.lane.b32.xlu0 %v2063, 64
      %v2150 = vpop.permute.xlu0 %2149
      %2151 = vrot.lane.b32.xlu0 %v2064, 64
      %v2152 = vpop.permute.xlu0 %2151
      %2153 = vrot.lane.b32.xlu0 %v2065, 64
      %v2154 = vpop.permute.xlu0 %2153
      %2155 = vrot.lane.b32.xlu0 %v2066, 64
      %v2156 = vpop.permute.xlu0 %2155
      %2157 = vrot.lane.b32.xlu0 %v2067, 64
      %v2158 = vpop.permute.xlu0 %2157
      %2159 = vrot.lane.b32.xlu0 %v2068, 64
      %v2160 = vpop.permute.xlu0 %2159
      %2161 = vrot.lane.b32.xlu0 %v2069, 64
      %v2162 = vpop.permute.xlu0 %2161
      %2163 = vrot.lane.b32.xlu0 %v2070, 64
      %v2164 = vpop.permute.xlu0 %2163
      %2165 = vrot.lane.b32.xlu0 %v2071, 64
      %v2166 = vpop.permute.xlu0 %2165
      %2167 = vrot.lane.b32.xlu0 %v2072, 64
      %v2168 = vpop.permute.xlu0 %2167
      %2169 = vrot.lane.b32.xlu0 %v2073, 64
      %v2170 = vpop.permute.xlu0 %2169
      %2171 = vrot.lane.b32.xlu0 %v2074, 64
      %v2172 = vpop.permute.xlu0 %2171
      %v2205 = vsel %vm390, %v2041, %v2110
      %v2206 = vsel %vm390, %v2042, %v2112
      %v2207 = vsel %vm390, %v2043, %v2114
      %v2208 = vsel %vm390, %v2044, %v2116
      %v2209 = vsel %vm390, %v2045, %v2118
      %v2210 = vsel %vm390, %v2046, %v2120
      %v2211 = vsel %vm390, %v2047, %v2122
      %v2212 = vsel %vm390, %v2048, %v2124
      %v2213 = vsel %vm390, %v2049, %v2126
      %v2214 = vsel %vm390, %v2050, %v2128
      %v2215 = vsel %vm390, %v2051, %v2130
      %v2216 = vsel %vm390, %v2052, %v2132
      %v2217 = vsel %vm390, %v2053, %v2134
      %v2218 = vsel %vm390, %v2054, %v2136
      %v2219 = vsel %vm390, %v2055, %v2138
      %v2220 = vsel %vm390, %v2056, %v2140
      %v2221 = vsel %vm390, %v2057, %v2142
      %v2222 = vsel %vm390, %v2058, %v2144
      %v2223 = vsel %vm390, %v2059, %v2146
      %v2224 = vsel %vm390, %v2060, %v2148
      %v2225 = vsel %vm390, %v2061, %v2150
      %v2226 = vsel %vm390, %v2062, %v2152
      %v2227 = vsel %vm390, %v2063, %v2154
      %v2228 = vsel %vm390, %v2064, %v2156
      %v2229 = vsel %vm390, %v2065, %v2158
      %v2230 = vsel %vm390, %v2066, %v2160
      %v2231 = vsel %vm390, %v2067, %v2162
      %v2232 = vsel %vm390, %v2068, %v2164
      %v2233 = vsel %vm390, %v2069, %v2166
      %v2234 = vsel %vm390, %v2070, %v2168
      %v2235 = vsel %vm390, %v2071, %v2170
      %v2236 = vsel %vm390, %v2072, %v2172
      %v2237 = vpack.c.bf16 %v2206, %v2205
      %v2238 = vpack.c.bf16 %v2046, %v2045
      %v2239 = vpack.c.bf16 %v2208, %v2207
      %v2240 = vpack.c.bf16 %v2048, %v2047
      %v2241 = vpack.c.bf16 %v2210, %v2209
      %v2242 = vpack.c.bf16 %v2050, %v2049
      %v2243 = vpack.c.bf16 %v2212, %v2211
      %v2244 = vpack.c.bf16 %v2052, %v2051
      %v2245 = vpack.c.bf16 %v2214, %v2213
      %v2246 = vpack.c.bf16 %v2054, %v2053
      %v2247 = vpack.c.bf16 %v2216, %v2215
      %v2248 = vpack.c.bf16 %v2056, %v2055
      %v2249 = vpack.c.bf16 %v2218, %v2217
      %v2250 = vpack.c.bf16 %v2058, %v2057
      %v2251 = vpack.c.bf16 %v2220, %v2219
      %v2252 = vpack.c.bf16 %v2060, %v2059
      %v2253 = vpack.c.bf16 %v2222, %v2221
      %v2254 = vpack.c.bf16 %v2062, %v2061
      %v2255 = vpack.c.bf16 %v2224, %v2223
      %v2256 = vpack.c.bf16 %v2064, %v2063
      %v2257 = vpack.c.bf16 %v2226, %v2225
      %v2258 = vpack.c.bf16 %v2066, %v2065
      %v2259 = vpack.c.bf16 %v2228, %v2227
      %v2260 = vpack.c.bf16 %v2068, %v2067
      %v2261 = vpack.c.bf16 %v2230, %v2229
      %v2262 = vpack.c.bf16 %v2070, %v2069
      %v2263 = vpack.c.bf16 %v2232, %v2231
      %v2264 = vpack.c.bf16 %v2072, %v2071
      %v2265 = vpack.c.bf16 %v2234, %v2233
      %v2266 = vpack.c.bf16 %v2074, %v2073
      %v2267 = vpack.c.bf16 %v2236, %v2235
      %v2268 = vpack.c.bf16 %v2076, %v2075
      %v2269 = vld [vmem:[%s3] sm:$0xf]
      %v2270 = vld [vmem:[%s3 + $0x4] sm:$0xf]
      %v2271 = vld [vmem:[%s3 + $0x8] sm:$0xf]
      %v2272 = vld [vmem:[%s3 + $0xc] sm:$0xf]
      %v2273 = vld [vmem:[%s3 + $0x10] sm:$0xf]
      %v2274 = vld [vmem:[%s3 + $0x14] sm:$0xf]
      %v2275 = vld [vmem:[%s3 + $0x18] sm:$0xf]
      %v2276 = vld [vmem:[%s3 + $0x1c] sm:$0xf]
      %v2277 = vld [vmem:[%s3 + $0x20] sm:$0xf]
      %v2278 = vld [vmem:[%s3 + $0x24] sm:$0xf]
      %v2279 = vld [vmem:[%s3 + $0x28] sm:$0xf]
      %v2280 = vld [vmem:[%s3 + $0x2c] sm:$0xf]
      %v2281 = vld [vmem:[%s3 + $0x30] sm:$0xf]
      %v2282 = vld [vmem:[%s3 + $0x34] sm:$0xf]
      %v2283 = vld [vmem:[%s3 + $0x38] sm:$0xf]
      %v2284 = vld [vmem:[%s3 + $0x3c] sm:$0xf]
      %v2285 = vld [vmem:[%s3 + $0x40] sm:$0xf]
      %v2286 = vld [vmem:[%s3 + $0x44] sm:$0xf]
      %v2287 = vld [vmem:[%s3 + $0x48] sm:$0xf]
      %v2288 = vld [vmem:[%s3 + $0x4c] sm:$0xf]
      %v2289 = vld [vmem:[%s3 + $0x50] sm:$0xf]
      %v2290 = vld [vmem:[%s3 + $0x54] sm:$0xf]
      %v2291 = vld [vmem:[%s3 + $0x58] sm:$0xf]
      %v2292 = vld [vmem:[%s3 + $0x5c] sm:$0xf]
      %v2293 = vld [vmem:[#allocation2 + $0x1] sm:$0xff]
      %v2294 = vld [vmem:[#allocation2 + $0x9] sm:$0xff]
      %v2295 = vld [vmem:[#allocation2 + $0x19] sm:$0xff]
      %v2296 = vld [vmem:[#allocation2 + $0x21] sm:$0xff]
      %v2297 = vld [vmem:[#allocation2 + $0x31] sm:$0xff]
      %v2298 = vld [vmem:[#allocation2 + $0x39] sm:$0xff]
      %v2299 = vld [vmem:[#allocation2 + $0x49] sm:$0xff]
      %v2300 = vld [vmem:[#allocation2 + $0x51] sm:$0xff]
      %v2301 = vld [vmem:[#allocation2 + $0x61] sm:$0xff]
      %v2302 = vld [vmem:[#allocation2 + $0x69] sm:$0xff]
      %v2303 = vld [vmem:[#allocation2 + $0x79] sm:$0xff]
      %v2304 = vld [vmem:[#allocation2 + $0x81] sm:$0xff]
      %v2305 = vld [vmem:[#allocation2 + $0x91] sm:$0xff]
      %v2306 = vld [vmem:[#allocation2 + $0x99] sm:$0xff]
      %v2307 = vld [vmem:[#allocation2 + $0xa9] sm:$0xff]
      %v2308 = vld [vmem:[#allocation2 + $0xb1] sm:$0xff]
      %v2309 = vld [vmem:[#allocation2 + $0xc1] sm:$0xff]
      %v2310 = vld [vmem:[#allocation2 + $0xc9] sm:$0xff]
      %v2311 = vld [vmem:[#allocation2 + $0xd9] sm:$0xff]
      %v2312 = vld [vmem:[#allocation2 + $0xe1] sm:$0xff]
      %v2313 = vld [vmem:[#allocation2 + $0xf1] sm:$0xff]
      %v2314 = vld [vmem:[#allocation2 + $0xf9] sm:$0xff]
      %v2315 = vld [vmem:[#allocation2 + $0x109] sm:$0xff]
      %v2316 = vld [vmem:[#allocation2 + $0x111] sm:$0xff]
      %v2317 = vld [vmem:[#allocation2 + $0x121] sm:$0xff]
      %v2318 = vld [vmem:[#allocation2 + $0x129] sm:$0xff]
      %v2319 = vld [vmem:[#allocation2 + $0x139] sm:$0xff]
      %v2320 = vld [vmem:[#allocation2 + $0x141] sm:$0xff]
      %v2321 = vld [vmem:[#allocation2 + $0x151] sm:$0xff]
      %v2322 = vld [vmem:[#allocation2 + $0x159] sm:$0xff]
      %v2323 = vld [vmem:[#allocation2 + $0x169] sm:$0xff]
      %v2324 = vld [vmem:[#allocation2 + $0x171] sm:$0xff]
      %v2325 = vld [vmem:[#allocation2 + $0x181] sm:$0xff]
      %v2326 = vld [vmem:[#allocation2 + $0x189] sm:$0xff]
      %v2327 = vld [vmem:[#allocation2 + $0x199] sm:$0xff]
      %v2328 = vld [vmem:[#allocation2 + $0x1a1] sm:$0xff]
      %2361 = vrot.lane.b32.xlu0 %v2295, 64
      %v2362 = vpop.permute.xlu0 %2361
      %2363 = vrot.lane.b32.xlu0 %v2296, 64
      %v2364 = vpop.permute.xlu0 %2363
      %2365 = vrot.lane.b32.xlu0 %v2297, 64
      %v2366 = vpop.permute.xlu0 %2365
      %2367 = vrot.lane.b32.xlu0 %v2298, 64
      %v2368 = vpop.permute.xlu0 %2367
      %2369 = vrot.lane.b32.xlu0 %v2299, 64
      %v2370 = vpop.permute.xlu0 %2369
      %2371 = vrot.lane.b32.xlu0 %v2300, 64
      %v2372 = vpop.permute.xlu0 %2371
      %2373 = vrot.lane.b32.xlu0 %v2301, 64
      %v2374 = vpop.permute.xlu0 %2373
      %2375 = vrot.lane.b32.xlu0 %v2302, 64
      %v2376 = vpop.permute.xlu0 %2375
      %2377 = vrot.lane.b32.xlu0 %v2303, 64
      %v2378 = vpop.permute.xlu0 %2377
      %2379 = vrot.lane.b32.xlu0 %v2304, 64
      %v2380 = vpop.permute.xlu0 %2379
      %2381 = vrot.lane.b32.xlu0 %v2305, 64
      %v2382 = vpop.permute.xlu0 %2381
      %2383 = vrot.lane.b32.xlu0 %v2306, 64
      %v2384 = vpop.permute.xlu0 %2383
      %2385 = vrot.lane.b32.xlu0 %v2307, 64
      %v2386 = vpop.permute.xlu0 %2385
      %2387 = vrot.lane.b32.xlu0 %v2308, 64
      %v2388 = vpop.permute.xlu0 %2387
      %2389 = vrot.lane.b32.xlu0 %v2309, 64
      %v2390 = vpop.permute.xlu0 %2389
      %2391 = vrot.lane.b32.xlu0 %v2310, 64
      %v2392 = vpop.permute.xlu0 %2391
      %2393 = vrot.lane.b32.xlu0 %v2311, 64
      %v2394 = vpop.permute.xlu0 %2393
      %2395 = vrot.lane.b32.xlu0 %v2312, 64
      %v2396 = vpop.permute.xlu0 %2395
      %2397 = vrot.lane.b32.xlu0 %v2313, 64
      %v2398 = vpop.permute.xlu0 %2397
      %2399 = vrot.lane.b32.xlu0 %v2314, 64
      %v2400 = vpop.permute.xlu0 %2399
      %2401 = vrot.lane.b32.xlu0 %v2315, 64
      %v2402 = vpop.permute.xlu0 %2401
      %2403 = vrot.lane.b32.xlu0 %v2316, 64
      %v2404 = vpop.permute.xlu0 %2403
      %2405 = vrot.lane.b32.xlu0 %v2317, 64
      %v2406 = vpop.permute.xlu0 %2405
      %2407 = vrot.lane.b32.xlu0 %v2318, 64
      %v2408 = vpop.permute.xlu0 %2407
      %2409 = vrot.lane.b32.xlu0 %v2319, 64
      %v2410 = vpop.permute.xlu0 %2409
      %2411 = vrot.lane.b32.xlu0 %v2320, 64
      %v2412 = vpop.permute.xlu0 %2411
      %2413 = vrot.lane.b32.xlu0 %v2321, 64
      %v2414 = vpop.permute.xlu0 %2413
      %2415 = vrot.lane.b32.xlu0 %v2322, 64
      %v2416 = vpop.permute.xlu0 %2415
      %2417 = vrot.lane.b32.xlu0 %v2323, 64
      %v2418 = vpop.permute.xlu0 %2417
      %2419 = vrot.lane.b32.xlu0 %v2324, 64
      %v2420 = vpop.permute.xlu0 %2419
      %2421 = vrot.lane.b32.xlu0 %v2325, 64
      %v2422 = vpop.permute.xlu0 %2421
      %2423 = vrot.lane.b32.xlu0 %v2326, 64
      %v2424 = vpop.permute.xlu0 %2423
      %v2457 = vsel %vm390, %v2293, %v2362
      %v2458 = vsel %vm390, %v2294, %v2364
      %v2459 = vsel %vm390, %v2295, %v2366
      %v2460 = vsel %vm390, %v2296, %v2368
      %v2461 = vsel %vm390, %v2297, %v2370
      %v2462 = vsel %vm390, %v2298, %v2372
      %v2463 = vsel %vm390, %v2299, %v2374
      %v2464 = vsel %vm390, %v2300, %v2376
      %v2465 = vsel %vm390, %v2301, %v2378
      %v2466 = vsel %vm390, %v2302, %v2380
      %v2467 = vsel %vm390, %v2303, %v2382
      %v2468 = vsel %vm390, %v2304, %v2384
      %v2469 = vsel %vm390, %v2305, %v2386
      %v2470 = vsel %vm390, %v2306, %v2388
      %v2471 = vsel %vm390, %v2307, %v2390
      %v2472 = vsel %vm390, %v2308, %v2392
      %v2473 = vsel %vm390, %v2309, %v2394
      %v2474 = vsel %vm390, %v2310, %v2396
      %v2475 = vsel %vm390, %v2311, %v2398
      %v2476 = vsel %vm390, %v2312, %v2400
      %v2477 = vsel %vm390, %v2313, %v2402
      %v2478 = vsel %vm390, %v2314, %v2404
      %v2479 = vsel %vm390, %v2315, %v2406
      %v2480 = vsel %vm390, %v2316, %v2408
      %v2481 = vsel %vm390, %v2317, %v2410
      %v2482 = vsel %vm390, %v2318, %v2412
      %v2483 = vsel %vm390, %v2319, %v2414
      %v2484 = vsel %vm390, %v2320, %v2416
      %v2485 = vsel %vm390, %v2321, %v2418
      %v2486 = vsel %vm390, %v2322, %v2420
      %v2487 = vsel %vm390, %v2323, %v2422
      %v2488 = vsel %vm390, %v2324, %v2424
      %v2489 = vpack.c.bf16 %v2458, %v2457
      %v2490 = vpack.c.bf16 %v2298, %v2297
      %v2491 = vpack.c.bf16 %v2460, %v2459
      %v2492 = vpack.c.bf16 %v2300, %v2299
      %v2493 = vpack.c.bf16 %v2462, %v2461
      %v2494 = vpack.c.bf16 %v2302, %v2301
      %v2495 = vpack.c.bf16 %v2464, %v2463
      %v2496 = vpack.c.bf16 %v2304, %v2303
      %v2497 = vpack.c.bf16 %v2466, %v2465
      %v2498 = vpack.c.bf16 %v2306, %v2305
      %v2499 = vpack.c.bf16 %v2468, %v2467
      %v2500 = vpack.c.bf16 %v2308, %v2307
      %v2501 = vpack.c.bf16 %v2470, %v2469
      %v2502 = vpack.c.bf16 %v2310, %v2309
      %v2503 = vpack.c.bf16 %v2472, %v2471
      %v2504 = vpack.c.bf16 %v2312, %v2311
      %v2505 = vpack.c.bf16 %v2474, %v2473
      %v2506 = vpack.c.bf16 %v2314, %v2313
      %v2507 = vpack.c.bf16 %v2476, %v2475
      %v2508 = vpack.c.bf16 %v2316, %v2315
      %v2509 = vpack.c.bf16 %v2478, %v2477
      %v2510 = vpack.c.bf16 %v2318, %v2317
      %v2511 = vpack.c.bf16 %v2480, %v2479
      %v2512 = vpack.c.bf16 %v2320, %v2319
      %v2513 = vpack.c.bf16 %v2482, %v2481
      %v2514 = vpack.c.bf16 %v2322, %v2321
      %v2515 = vpack.c.bf16 %v2484, %v2483
      %v2516 = vpack.c.bf16 %v2324, %v2323
      %v2517 = vpack.c.bf16 %v2486, %v2485
      %v2518 = vpack.c.bf16 %v2326, %v2325
      %v2519 = vpack.c.bf16 %v2488, %v2487
      %v2520 = vpack.c.bf16 %v2328, %v2327
      %s2521 = scalar_lea.vmem %s3, 96
      %v2522 = vld [vmem:[%s2521] sm:$0xf]
      %v2523 = vld [vmem:[%s2521 + $0x4] sm:$0xf]
      %v2524 = vld [vmem:[%s2521 + $0x8] sm:$0xf]
      %v2525 = vld [vmem:[%s2521 + $0xc] sm:$0xf]
      %v2526 = vld [vmem:[%s2521 + $0x10] sm:$0xf]
      %v2527 = vld [vmem:[%s2521 + $0x14] sm:$0xf]
      %v2528 = vld [vmem:[%s2521 + $0x18] sm:$0xf]
      %v2529 = vld [vmem:[%s2521 + $0x1c] sm:$0xf]
      %v2530 = vld [vmem:[%s2521 + $0x20] sm:$0xf]
      %v2531 = vld [vmem:[%s2521 + $0x24] sm:$0xf]
      %v2532 = vld [vmem:[%s2521 + $0x28] sm:$0xf]
      %v2533 = vld [vmem:[%s2521 + $0x2c] sm:$0xf]
      %v2534 = vld [vmem:[%s2521 + $0x30] sm:$0xf]
      %v2535 = vld [vmem:[%s2521 + $0x34] sm:$0xf]
      %v2536 = vld [vmem:[%s2521 + $0x38] sm:$0xf]
      %v2537 = vld [vmem:[%s2521 + $0x3c] sm:$0xf]
      %v2538 = vld [vmem:[%s2521 + $0x40] sm:$0xf]
      %v2539 = vld [vmem:[%s2521 + $0x44] sm:$0xf]
      %v2540 = vld [vmem:[%s2521 + $0x48] sm:$0xf]
      %v2541 = vld [vmem:[%s2521 + $0x4c] sm:$0xf]
      %v2542 = vld [vmem:[%s2521 + $0x50] sm:$0xf]
      %v2543 = vld [vmem:[%s2521 + $0x54] sm:$0xf]
      %v2544 = vld [vmem:[%s2521 + $0x58] sm:$0xf]
      %v2545 = vld [vmem:[%s2521 + $0x5c] sm:$0xf]
      %v2570 = vunpack.c.l.b16 %v2522
      %v2571 = vunpack.c.l.b16 %v2523
      %v2572 = vunpack.c.l.b16 %v2524
      %v2573 = vunpack.c.l.b16 %v2525
      %v2574 = vunpack.c.l.b16 %v2526
      %v2575 = vunpack.c.l.b16 %v2527
      %v2576 = vunpack.c.l.b16 %v2528
      %v2577 = vunpack.c.l.b16 %v2529
      %v2578 = vunpack.c.l.b16 %v2530
      %v2579 = vunpack.c.l.b16 %v2531
      %v2580 = vunpack.c.l.b16 %v2532
      %v2581 = vunpack.c.l.b16 %v2533
      %v2582 = vunpack.c.l.b16 %v2534
      %v2583 = vunpack.c.l.b16 %v2535
      %v2584 = vunpack.c.l.b16 %v2536
      %v2585 = vunpack.c.l.b16 %v2537
      %v2586 = vunpack.c.l.b16 %v2538
      %v2587 = vunpack.c.l.b16 %v2539
      %v2588 = vunpack.c.l.b16 %v2540
      %v2589 = vunpack.c.l.b16 %v2541
      %v2590 = vunpack.c.l.b16 %v2542
      %v2591 = vunpack.c.l.b16 %v2543
      %v2592 = vunpack.c.l.b16 %v2544
      %v2593 = vunpack.c.l.b16 %v2545
      %v2594 = vpack.c.b16 %v2571, %v2570
      %v2595 = vpack.c.b16 %v2573, %v2572
      %v2596 = vpack.c.b16 %v2575, %v2574
      %v2597 = vpack.c.b16 %v2577, %v2576
      %v2598 = vpack.c.b16 %v2579, %v2578
      %v2599 = vpack.c.b16 %v2581, %v2580
      %v2600 = vpack.c.b16 %v2583, %v2582
      %v2601 = vpack.c.b16 %v2585, %v2584
      %v2602 = vpack.c.b16 %v2587, %v2586
      %v2603 = vpack.c.b16 %v2589, %v2588
      %v2604 = vpack.c.b16 %v2591, %v2590
      %v2605 = vpack.c.b16 %v2593, %v2592
      %v2619 = vsel %vm390, %v2490, 0
      %v2622 = vsel %vm390, %v2492, 0
      %v2625 = vsel %vm390, %v2494, 0
      %v2628 = vsel %vm390, %v2496, 0
      %v2631 = vsel %vm390, %v2498, 0
      %v2634 = vsel %vm390, %v2500, 0
      %v2637 = vsel %vm390, %v2502, 0
      %v2640 = vsel %vm390, %v2504, 0
      %v2643 = vsel %vm390, %v2506, 0
      %v2646 = vsel %vm390, %v2508, 0
      %v2649 = vsel %vm390, %v2510, 0
      %v2652 = vsel %vm390, %v2512, 0
      %v2655 = vsel %vm390, %v2514, 0
      %v2658 = vsel %vm390, %v2516, 0
      %v2661 = vsel %vm390, %v2518, 0
      %v2664 = vsel %vm390, %v2520, 0
      %2666 = vmatprep.subr.bf16.mxu0 0
      %2667 = vmatpush1.bf16.msra.mxu0 %v2594
      %2668 = vmatprep.subr.bf16.mxu0 0
      %2669 = vmatpush1.bf16.msra.mxu0 %v2595
      %2670 = vmatprep.subr.bf16.mxu0 0
      %2671 = vmatpush1.bf16.msra.mxu0 %v2596
      %2672 = vmatprep.subr.bf16.mxu0 0
      %2673 = vmatpush1.bf16.msra.mxu0 %v2597
      %2674 = vmatprep.subr.bf16.mxu0 0
      %2675 = vmatpush1.bf16.msra.mxu0 %v2598
      %2676 = vmatprep.subr.bf16.mxu0 0
      %2677 = vmatpush1.bf16.msra.mxu0 %v2599
      %2678 = vmatprep.subr.bf16.mxu0 0
      %2679 = vmatpush1.bf16.msra.mxu0 %v2600
      %2680 = vmatprep.subr.bf16.mxu0 0
      %2681 = vmatpush1.bf16.msra.mxu0 %v2601
      %2682 = vmatprep.subr.bf16.mxu0 0
      %2683 = vmatpush1.bf16.msra.mxu0 %v2602
      %2684 = vmatprep.subr.bf16.mxu0 0
      %2685 = vmatpush1.bf16.msra.mxu0 %v2603
      %2686 = vmatprep.subr.bf16.mxu0 0
      %2687 = vmatpush1.bf16.msra.mxu0 %v2604
      %2688 = vmatprep.subr.bf16.mxu0 0
      %2689 = vmatpush1.bf16.msra.mxu0 %v2605
      %2690 = vmatprep.subr.bf16.mxu0 0
      %2691 = vmatpush1.bf16.msra.mxu0 0
      %2692 = vmatprep.subr.bf16.mxu0 0
      %2693 = vmatpush1.bf16.msra.mxu0 0
      %2694 = vmatprep.subr.bf16.mxu0 0
      %2695 = vmatpush1.bf16.msra.mxu0 0
      %2696 = vmatprep.subr.bf16.mxu0 0
      %2697 = vmatpush1.bf16.msra.mxu0 0
      %2698 = vmatprep.mubr.bf16.mxu0 %v2619
      %2699 = vmatmul.mubr.bf16.gmra.mrb[0].mxu0 %v2489
      %v2700 = vpop.f32.mrb[0].mxu0
      %v2701 = vadd.f32 0.0, %v2700
      %v2702 = vpop.f32.mrb[0].mxu0
      %v2703 = vpop.f32.mrb[0].mxu0
      %v2704 = vadd.f32 0.0, %v2703
      %v2705 = vpop.f32.mrb[0].mxu0
      %2706 = vmatprep.mubr.bf16.mxu0 %v2622
      %2707 = vmatmul.mubr.bf16.gmra.mrb[0].mxu0 %v2491
      %v2708 = vpop.f32.mrb[0].mxu0
      %v2709 = vadd.f32 0.0, %v2708
      %v2710 = vpop.f32.mrb[0].mxu0
      %v2711 = vpop.f32.mrb[0].mxu0
      %v2712 = vadd.f32 0.0, %v2711
      %v2713 = vpop.f32.mrb[0].mxu0
      %2714 = vmatprep.mubr.bf16.mxu0 %v2625
      %2715 = vmatmul.mubr.bf16.gmra.mrb[0].mxu0 %v2493
      %v2716 = vpop.f32.mrb[0].mxu0
      %v2717 = vadd.f32 0.0, %v2716
      %v2718 = vpop.f32.mrb[0].mxu0
      %v2719 = vpop.f32.mrb[0].mxu0
      %v2720 = vadd.f32 0.0, %v2719
      %v2721 = vpop.f32.mrb[0].mxu0
      %2722 = vmatprep.mubr.bf16.mxu0 %v2628
      %2723 = vmatmul.mubr.bf16.gmra.mrb[0].mxu0 %v2495
      %v2724 = vpop.f32.mrb[0].mxu0
      %v2725 = vadd.f32 0.0, %v2724
      %v2726 = vpop.f32.mrb[0].mxu0
      %v2727 = vpop.f32.mrb[0].mxu0
      %v2728 = vadd.f32 0.0, %v2727
      %v2729 = vpop.f32.mrb[0].mxu0
      %2730 = vmatprep.mubr.bf16.mxu0 %v2631
      %2731 = vmatmul.mubr.bf16.gmra.mrb[0].mxu0 %v2497
      %v2732 = vpop.f32.mrb[0].mxu0
      %v2733 = vadd.f32 0.0, %v2732
      %v2734 = vpop.f32.mrb[0].mxu0
      %v2735 = vpop.f32.mrb[0].mxu0
      %v2736 = vadd.f32 0.0, %v2735
      %v2737 = vpop.f32.mrb[0].mxu0
      %2738 = vmatprep.mubr.bf16.mxu0 %v2634
      %2739 = vmatmul.mubr.bf16.gmra.mrb[0].mxu0 %v2499
      %v2740 = vpop.f32.mrb[0].mxu0
      %v2741 = vadd.f32 0.0, %v2740
      %v2742 = vpop.f32.mrb[0].mxu0
      %v2743 = vpop.f32.mrb[0].mxu0
      %v2744 = vadd.f32 0.0, %v2743
      %v2745 = vpop.f32.mrb[0].mxu0
      %2746 = vmatprep.mubr.bf16.mxu0 %v2637
      %2747 = vmatmul.mubr.bf16.gmra.mrb[0].mxu0 %v2501
      %v2748 = vpop.f32.mrb[0].mxu0
      %v2749 = vadd.f32 0.0, %v2748
      %v2750 = vpop.f32.mrb[0].mxu0
      %v2751 = vpop.f32.mrb[0].mxu0
      %v2752 = vadd.f32 0.0, %v2751
      %v2753 = vpop.f32.mrb[0].mxu0
      %2754 = vmatprep.mubr.bf16.mxu0 %v2640
      %2755 = vmatmul.mubr.bf16.gmra.mrb[0].mxu0 %v2503
      %v2756 = vpop.f32.mrb[0].mxu0
      %v2757 = vadd.f32 0.0, %v2756
      %v2758 = vpop.f32.mrb[0].mxu0
      %v2759 = vpop.f32.mrb[0].mxu0
      %v2760 = vadd.f32 0.0, %v2759
      %v2761 = vpop.f32.mrb[0].mxu0
      %2762 = vmatprep.mubr.bf16.mxu0 %v2643
      %2763 = vmatmul.mubr.bf16.gmra.mrb[0].mxu0 %v2505
      %v2764 = vpop.f32.mrb[0].mxu0
      %v2765 = vadd.f32 0.0, %v2764
      %v2766 = vpop.f32.mrb[0].mxu0
      %v2767 = vpop.f32.mrb[0].mxu0
      %v2768 = vadd.f32 0.0, %v2767
      %v2769 = vpop.f32.mrb[0].mxu0
      %2770 = vmatprep.mubr.bf16.mxu0 %v2646
      %2771 = vmatmul.mubr.bf16.gmra.mrb[0].mxu0 %v2507
      %v2772 = vpop.f32.mrb[0].mxu0
      %v2773 = vadd.f32 0.0, %v2772
      %v2774 = vpop.f32.mrb[0].mxu0
      %v2775 = vpop.f32.mrb[0].mxu0
      %v2776 = vadd.f32 0.0, %v2775
      %v2777 = vpop.f32.mrb[0].mxu0
      %2778 = vmatprep.mubr.bf16.mxu0 %v2649
      %2779 = vmatmul.mubr.bf16.gmra.mrb[0].mxu0 %v2509
      %v2780 = vpop.f32.mrb[0].mxu0
      %v2781 = vadd.f32 0.0, %v2780
      %v2782 = vpop.f32.mrb[0].mxu0
      %v2783 = vpop.f32.mrb[0].mxu0
      %v2784 = vadd.f32 0.0, %v2783
      %v2785 = vpop.f32.mrb[0].mxu0
      %2786 = vmatprep.mubr.bf16.mxu0 %v2652
      %2787 = vmatmul.mubr.bf16.gmra.mrb[0].mxu0 %v2511
      %v2788 = vpop.f32.mrb[0].mxu0
      %v2789 = vadd.f32 0.0, %v2788
      %v2790 = vpop.f32.mrb[0].mxu0
      %v2791 = vpop.f32.mrb[0].mxu0
      %v2792 = vadd.f32 0.0, %v2791
      %v2793 = vpop.f32.mrb[0].mxu0
      %2794 = vmatprep.mubr.bf16.mxu0 %v2655
      %2795 = vmatmul.mubr.bf16.gmra.mrb[0].mxu0 %v2513
      %v2796 = vpop.f32.mrb[0].mxu0
      %v2797 = vadd.f32 0.0, %v2796
      %v2798 = vpop.f32.mrb[0].mxu0
      %v2799 = vpop.f32.mrb[0].mxu0
      %v2800 = vadd.f32 0.0, %v2799
      %v2801 = vpop.f32.mrb[0].mxu0
      %2802 = vmatprep.mubr.bf16.mxu0 %v2658
      %2803 = vmatmul.mubr.bf16.gmra.mrb[0].mxu0 %v2515
      %v2804 = vpop.f32.mrb[0].mxu0
      %v2805 = vadd.f32 0.0, %v2804
      %v2806 = vpop.f32.mrb[0].mxu0
      %v2807 = vpop.f32.mrb[0].mxu0
      %v2808 = vadd.f32 0.0, %v2807
      %v2809 = vpop.f32.mrb[0].mxu0
      %2810 = vmatprep.mubr.bf16.mxu0 %v2661
      %2811 = vmatmul.mubr.bf16.gmra.mrb[0].mxu0 %v2517
      %v2812 = vpop.f32.mrb[0].mxu0
      %v2813 = vadd.f32 0.0, %v2812
      %v2814 = vpop.f32.mrb[0].mxu0
      %v2815 = vpop.f32.mrb[0].mxu0
      %v2816 = vadd.f32 0.0, %v2815
      %v2817 = vpop.f32.mrb[0].mxu0
      %2818 = vmatprep.mubr.bf16.mxu0 %v2664
      %2819 = vmatmul.mubr.bf16.gmra.mrb[0].mxu0 %v2519
      %v2820 = vpop.f32.mrb[0].mxu0
      %v2821 = vadd.f32 0.0, %v2820
      %v2822 = vpop.f32.mrb[0].mxu0
      %v2823 = vpop.f32.mrb[0].mxu0
      %v2824 = vadd.f32 0.0, %v2823
      %v2825 = vpop.f32.mrb[0].mxu0
      %2826 = vdwg.mxu0
      %v2851 = vunpack.c.l.b16 %v2269
      %v2852 = vunpack.c.l.b16 %v2270
      %v2853 = vunpack.c.l.b16 %v2271
      %v2854 = vunpack.c.l.b16 %v2272
      %v2855 = vunpack.c.l.b16 %v2273
      %v2856 = vunpack.c.l.b16 %v2274
      %v2857 = vunpack.c.l.b16 %v2275
      %v2858 = vunpack.c.l.b16 %v2276
      %v2859 = vunpack.c.l.b16 %v2277
      %v2860 = vunpack.c.l.b16 %v2278
      %v2861 = vunpack.c.l.b16 %v2279
      %v2862 = vunpack.c.l.b16 %v2280
      %v2863 = vunpack.c.l.b16 %v2281
      %v2864 = vunpack.c.l.b16 %v2282
      %v2865 = vunpack.c.l.b16 %v2283
      %v2866 = vunpack.c.l.b16 %v2284
      %v2867 = vunpack.c.l.b16 %v2285
      %v2868 = vunpack.c.l.b16 %v2286
      %v2869 = vunpack.c.l.b16 %v2287
      %v2870 = vunpack.c.l.b16 %v2288
      %v2871 = vunpack.c.l.b16 %v2289
      %v2872 = vunpack.c.l.b16 %v2290
      %v2873 = vunpack.c.l.b16 %v2291
      %v2874 = vunpack.c.l.b16 %v2292
      %v2875 = vpack.c.b16 %v2852, %v2851
      %v2876 = vpack.c.b16 %v2854, %v2853
      %v2877 = vpack.c.b16 %v2856, %v2855
      %v2878 = vpack.c.b16 %v2858, %v2857
      %v2879 = vpack.c.b16 %v2860, %v2859
      %v2880 = vpack.c.b16 %v2862, %v2861
      %v2881 = vpack.c.b16 %v2864, %v2863
      %v2882 = vpack.c.b16 %v2866, %v2865
      %v2883 = vpack.c.b16 %v2868, %v2867
      %v2884 = vpack.c.b16 %v2870, %v2869
      %v2885 = vpack.c.b16 %v2872, %v2871
      %v2886 = vpack.c.b16 %v2874, %v2873
      %v2900 = vsel %vm390, %v2238, 0
      %v2903 = vsel %vm390, %v2240, 0
      %v2906 = vsel %vm390, %v2242, 0
      %v2909 = vsel %vm390, %v2244, 0
      %v2912 = vsel %vm390, %v2246, 0
      %v2915 = vsel %vm390, %v2248, 0
      %v2918 = vsel %vm390, %v2250, 0
      %v2921 = vsel %vm390, %v2252, 0
      %v2924 = vsel %vm390, %v2254, 0
      %v2927 = vsel %vm390, %v2256, 0
      %v2930 = vsel %vm390, %v2258, 0
      %v2933 = vsel %vm390, %v2260, 0
      %v2936 = vsel %vm390, %v2262, 0
      %v2939 = vsel %vm390, %v2264, 0
      %v2942 = vsel %vm390, %v2266, 0
      %v2945 = vsel %vm390, %v2268, 0
      %2947 = vmatprep.subr.bf16.mxu0 0
      %2948 = vmatpush1.bf16.msra.mxu0 %v2875
      %2949 = vmatprep.subr.bf16.mxu0 0
      %2950 = vmatpush1.bf16.msra.mxu0 %v2876
      %2951 = vmatprep.subr.bf16.mxu0 0
      %2952 = vmatpush1.bf16.msra.mxu0 %v2877
      %2953 = vmatprep.subr.bf16.mxu0 0
      %2954 = vmatpush1.bf16.msra.mxu0 %v2878
      %2955 = vmatprep.subr.bf16.mxu0 0
      %2956 = vmatpush1.bf16.msra.mxu0 %v2879
      %2957 = vmatprep.subr.bf16.mxu0 0
      %2958 = vmatpush1.bf16.msra.mxu0 %v2880
      %2959 = vmatprep.subr.bf16.mxu0 0
      %2960 = vmatpush1.bf16.msra.mxu0 %v2881
      %2961 = vmatprep.subr.bf16.mxu0 0
      %2962 = vmatpush1.bf16.msra.mxu0 %v2882
      %2963 = vmatprep.subr.bf16.mxu0 0
      %2964 = vmatpush1.bf16.msra.mxu0 %v2883
      %2965 = vmatprep.subr.bf16.mxu0 0
      %2966 = vmatpush1.bf16.msra.mxu0 %v2884
      %2967 = vmatprep.subr.bf16.mxu0 0
      %2968 = vmatpush1.bf16.msra.mxu0 %v2885
      %2969 = vmatprep.subr.bf16.mxu0 0
      %2970 = vmatpush1.bf16.msra.mxu0 %v2886
      %2971 = vmatprep.subr.bf16.mxu0 0
      %2972 = vmatpush1.bf16.msra.mxu0 0
      %2973 = vmatprep.subr.bf16.mxu0 0
      %2974 = vmatpush1.bf16.msra.mxu0 0
      %2975 = vmatprep.subr.bf16.mxu0 0
      %2976 = vmatpush1.bf16.msra.mxu0 0
      %2977 = vmatprep.subr.bf16.mxu0 0
      %2978 = vmatpush1.bf16.msra.mxu0 0
      %2979 = vmatprep.mubr.bf16.mxu0 %v2900
      %2980 = vmatmul.mubr.bf16.gmra.mrb[0].mxu0 %v2237
      %v2981 = vpop.f32.mrb[0].mxu0
      %v2982 = vadd.f32 %v2701, %v2981
      %v2983 = vpop.f32.mrb[0].mxu0
      %v2984 = vpop.f32.mrb[0].mxu0
      %v2985 = vadd.f32 %v2704, %v2984
      %v2986 = vpop.f32.mrb[0].mxu0
      %2987 = vmatprep.mubr.bf16.mxu0 %v2903
      %2988 = vmatmul.mubr.bf16.gmra.mrb[0].mxu0 %v2239
      %v2989 = vpop.f32.mrb[0].mxu0
      %v2990 = vadd.f32 %v2709, %v2989
      %v2991 = vpop.f32.mrb[0].mxu0
      %v2992 = vpop.f32.mrb[0].mxu0
      %v2993 = vadd.f32 %v2712, %v2992
      %v2994 = vpop.f32.mrb[0].mxu0
      %2995 = vmatprep.mubr.bf16.mxu0 %v2906
      %2996 = vmatmul.mubr.bf16.gmra.mrb[0].mxu0 %v2241
      %v2997 = vpop.f32.mrb[0].mxu0
      %v2998 = vadd.f32 %v2717, %v2997
      %v2999 = vpop.f32.mrb[0].mxu0
      %v3000 = vpop.f32.mrb[0].mxu0
      %v3001 = vadd.f32 %v2720, %v3000
      %v3002 = vpop.f32.mrb[0].mxu0
      %3003 = vmatprep.mubr.bf16.mxu0 %v2909
      %3004 = vmatmul.mubr.bf16.gmra.mrb[0].mxu0 %v2243
      %v3005 = vpop.f32.mrb[0].mxu0
      %v3006 = vadd.f32 %v2725, %v3005
      %v3007 = vpop.f32.mrb[0].mxu0
      %v3008 = vpop.f32.mrb[0].mxu0
      %v3009 = vadd.f32 %v2728, %v3008
      %v3010 = vpop.f32.mrb[0].mxu0
      %3011 = vmatprep.mubr.bf16.mxu0 %v2912
      %3012 = vmatmul.mubr.bf16.gmra.mrb[0].mxu0 %v2245
      %v3013 = vpop.f32.mrb[0].mxu0
      %v3014 = vadd.f32 %v2733, %v3013
      %v3015 = vpop.f32.mrb[0].mxu0
      %v3016 = vpop.f32.mrb[0].mxu0
      %v3017 = vadd.f32 %v2736, %v3016
      %v3018 = vpop.f32.mrb[0].mxu0
      %3019 = vmatprep.mubr.bf16.mxu0 %v2915
      %3020 = vmatmul.mubr.bf16.gmra.mrb[0].mxu0 %v2247
      %v3021 = vpop.f32.mrb[0].mxu0
      %v3022 = vadd.f32 %v2741, %v3021
      %v3023 = vpop.f32.mrb[0].mxu0
      %v3024 = vpop.f32.mrb[0].mxu0
      %v3025 = vadd.f32 %v2744, %v3024
      %v3026 = vpop.f32.mrb[0].mxu0
      %3027 = vmatprep.mubr.bf16.mxu0 %v2918
      %3028 = vmatmul.mubr.bf16.gmra.mrb[0].mxu0 %v2249
      %v3029 = vpop.f32.mrb[0].mxu0
      %v3030 = vadd.f32 %v2749, %v3029
      %v3031 = vpop.f32.mrb[0].mxu0
      %v3032 = vpop.f32.mrb[0].mxu0
      %v3033 = vadd.f32 %v2752, %v3032
      %v3034 = vpop.f32.mrb[0].mxu0
      %3035 = vmatprep.mubr.bf16.mxu0 %v2921
      %3036 = vmatmul.mubr.bf16.gmra.mrb[0].mxu0 %v2251
      %v3037 = vpop.f32.mrb[0].mxu0
      %v3038 = vadd.f32 %v2757, %v3037
      %v3039 = vpop.f32.mrb[0].mxu0
      %v3040 = vpop.f32.mrb[0].mxu0
      %v3041 = vadd.f32 %v2760, %v3040
      %v3042 = vpop.f32.mrb[0].mxu0
      %3043 = vmatprep.mubr.bf16.mxu0 %v2924
      %3044 = vmatmul.mubr.bf16.gmra.mrb[0].mxu0 %v2253
      %v3045 = vpop.f32.mrb[0].mxu0
      %v3046 = vadd.f32 %v2765, %v3045
      %v3047 = vpop.f32.mrb[0].mxu0
      %v3048 = vpop.f32.mrb[0].mxu0
      %v3049 = vadd.f32 %v2768, %v3048
      %v3050 = vpop.f32.mrb[0].mxu0
      %3051 = vmatprep.mubr.bf16.mxu0 %v2927
      %3052 = vmatmul.mubr.bf16.gmra.mrb[0].mxu0 %v2255
      %v3053 = vpop.f32.mrb[0].mxu0
      %v3054 = vadd.f32 %v2773, %v3053
      %v3055 = vpop.f32.mrb[0].mxu0
      %v3056 = vpop.f32.mrb[0].mxu0
      %v3057 = vadd.f32 %v2776, %v3056
      %v3058 = vpop.f32.mrb[0].mxu0
      %3059 = vmatprep.mubr.bf16.mxu0 %v2930
      %3060 = vmatmul.mubr.bf16.gmra.mrb[0].mxu0 %v2257
      %v3061 = vpop.f32.mrb[0].mxu0
      %v3062 = vadd.f32 %v2781, %v3061
      %v3063 = vpop.f32.mrb[0].mxu0
      %v3064 = vpop.f32.mrb[0].mxu0
      %v3065 = vadd.f32 %v2784, %v3064
      %v3066 = vpop.f32.mrb[0].mxu0
      %3067 = vmatprep.mubr.bf16.mxu0 %v2933
      %3068 = vmatmul.mubr.bf16.gmra.mrb[0].mxu0 %v2259
      %v3069 = vpop.f32.mrb[0].mxu0
      %v3070 = vadd.f32 %v2789, %v3069
      %v3071 = vpop.f32.mrb[0].mxu0
      %v3072 = vpop.f32.mrb[0].mxu0
      %v3073 = vadd.f32 %v2792, %v3072
      %v3074 = vpop.f32.mrb[0].mxu0
      %3075 = vmatprep.mubr.bf16.mxu0 %v2936
      %3076 = vmatmul.mubr.bf16.gmra.mrb[0].mxu0 %v2261
      %v3077 = vpop.f32.mrb[0].mxu0
      %v3078 = vadd.f32 %v2797, %v3077
      %v3079 = vpop.f32.mrb[0].mxu0
      %v3080 = vpop.f32.mrb[0].mxu0
      %v3081 = vadd.f32 %v2800, %v3080
      %v3082 = vpop.f32.mrb[0].mxu0
      %3083 = vmatprep.mubr.bf16.mxu0 %v2939
      %3084 = vmatmul.mubr.bf16.gmra.mrb[0].mxu0 %v2263
      %v3085 = vpop.f32.mrb[0].mxu0
      %v3086 = vadd.f32 %v2805, %v3085
      %v3087 = vpop.f32.mrb[0].mxu0
      %v3088 = vpop.f32.mrb[0].mxu0
      %v3089 = vadd.f32 %v2808, %v3088
      %v3090 = vpop.f32.mrb[0].mxu0
      %3091 = vmatprep.mubr.bf16.mxu0 %v2942
      %3092 = vmatmul.mubr.bf16.gmra.mrb[0].mxu0 %v2265
      %v3093 = vpop.f32.mrb[0].mxu0
      %v3094 = vadd.f32 %v2813, %v3093
      %v3095 = vpop.f32.mrb[0].mxu0
      %v3096 = vpop.f32.mrb[0].mxu0
      %v3097 = vadd.f32 %v2816, %v3096
      %v3098 = vpop.f32.mrb[0].mxu0
      %3099 = vmatprep.mubr.bf16.mxu0 %v2945
      %3100 = vmatmul.mubr.bf16.gmra.mrb[0].mxu0 %v2267
      %v3101 = vpop.f32.mrb[0].mxu0
      %v3102 = vadd.f32 %v2821, %v3101
      %v3103 = vpop.f32.mrb[0].mxu0
      %v3104 = vpop.f32.mrb[0].mxu0
      %v3105 = vadd.f32 %v2824, %v3104
      %v3106 = vpop.f32.mrb[0].mxu0
      %3107 = vdwg.mxu0
      %v3108 = vld [vmem:[#allocation2 + $0x2] sm:$0xff]
      %v3109 = vld [vmem:[#allocation2 + $0xa] sm:$0xff]
      %v3110 = vld [vmem:[#allocation2 + $0x1a] sm:$0xff]
      %v3111 = vld [vmem:[#allocation2 + $0x22] sm:$0xff]
      %v3112 = vld [vmem:[#allocation2 + $0x32] sm:$0xff]
      %v3113 = vld [vmem:[#allocation2 + $0x3a] sm:$0xff]
      %v3114 = vld [vmem:[#allocation2 + $0x4a] sm:$0xff]
      %v3115 = vld [vmem:[#allocation2 + $0x52] sm:$0xff]
      %v3116 = vld [vmem:[#allocation2 + $0x62] sm:$0xff]
      %v3117 = vld [vmem:[#allocation2 + $0x6a] sm:$0xff]
      %v3118 = vld [vmem:[#allocation2 + $0x7a] sm:$0xff]
      %v3119 = vld [vmem:[#allocation2 + $0x82] sm:$0xff]
      %v3120 = vld [vmem:[#allocation2 + $0x92] sm:$0xff]
      %v3121 = vld [vmem:[#allocation2 + $0x9a] sm:$0xff]
      %v3122 = vld [vmem:[#allocation2 + $0xaa] sm:$0xff]
      %v3123 = vld [vmem:[#allocation2 + $0xb2] sm:$0xff]
      %v3124 = vld [vmem:[#allocation2 + $0xc2] sm:$0xff]
      %v3125 = vld [vmem:[#allocation2 + $0xca] sm:$0xff]
      %v3126 = vld [vmem:[#allocation2 + $0xda] sm:$0xff]
      %v3127 = vld [vmem:[#allocation2 + $0xe2] sm:$0xff]
      %v3128 = vld [vmem:[#allocation2 + $0xf2] sm:$0xff]
      %v3129 = vld [vmem:[#allocation2 + $0xfa] sm:$0xff]
      %v3130 = vld [vmem:[#allocation2 + $0x10a] sm:$0xff]
      %v3131 = vld [vmem:[#allocation2 + $0x112] sm:$0xff]
      %v3132 = vld [vmem:[#allocation2 + $0x122] sm:$0xff]
      %v3133 = vld [vmem:[#allocation2 + $0x12a] sm:$0xff]
      %v3134 = vld [vmem:[#allocation2 + $0x13a] sm:$0xff]
      %v3135 = vld [vmem:[#allocation2 + $0x142] sm:$0xff]
      %v3136 = vld [vmem:[#allocation2 + $0x152] sm:$0xff]
      %v3137 = vld [vmem:[#allocation2 + $0x15a] sm:$0xff]
      %v3138 = vld [vmem:[#allocation2 + $0x16a] sm:$0xff]
      %v3139 = vld [vmem:[#allocation2 + $0x172] sm:$0xff]
      %v3140 = vld [vmem:[#allocation2 + $0x182] sm:$0xff]
      %v3141 = vld [vmem:[#allocation2 + $0x18a] sm:$0xff]
      %v3142 = vld [vmem:[#allocation2 + $0x19a] sm:$0xff]
      %v3143 = vld [vmem:[#allocation2 + $0x1a2] sm:$0xff]
      %3176 = vrot.lane.b32.xlu0 %v3110, 64
      %v3177 = vpop.permute.xlu0 %3176
      %3178 = vrot.lane.b32.xlu0 %v3111, 64
      %v3179 = vpop.permute.xlu0 %3178
      %3180 = vrot.lane.b32.xlu0 %v3112, 64
      %v3181 = vpop.permute.xlu0 %3180
      %3182 = vrot.lane.b32.xlu0 %v3113, 64
      %v3183 = vpop.permute.xlu0 %3182
      %3184 = vrot.lane.b32.xlu0 %v3114, 64
      %v3185 = vpop.permute.xlu0 %3184
      %3186 = vrot.lane.b32.xlu0 %v3115, 64
      %v3187 = vpop.permute.xlu0 %3186
      %3188 = vrot.lane.b32.xlu0 %v3116, 64
      %v3189 = vpop.permute.xlu0 %3188
      %3190 = vrot.lane.b32.xlu0 %v3117, 64
      %v3191 = vpop.permute.xlu0 %3190
      %3192 = vrot.lane.b32.xlu0 %v3118, 64
      %v3193 = vpop.permute.xlu0 %3192
      %3194 = vrot.lane.b32.xlu0 %v3119, 64
      %v3195 = vpop.permute.xlu0 %3194
      %3196 = vrot.lane.b32.xlu0 %v3120, 64
      %v3197 = vpop.permute.xlu0 %3196
      %3198 = vrot.lane.b32.xlu0 %v3121, 64
      %v3199 = vpop.permute.xlu0 %3198
      %3200 = vrot.lane.b32.xlu0 %v3122, 64
      %v3201 = vpop.permute.xlu0 %3200
      %3202 = vrot.lane.b32.xlu0 %v3123, 64
      %v3203 = vpop.permute.xlu0 %3202
      %3204 = vrot.lane.b32.xlu0 %v3124, 64
      %v3205 = vpop.permute.xlu0 %3204
      %3206 = vrot.lane.b32.xlu0 %v3125, 64
      %v3207 = vpop.permute.xlu0 %3206
      %3208 = vrot.lane.b32.xlu0 %v3126, 64
      %v3209 = vpop.permute.xlu0 %3208
      %3210 = vrot.lane.b32.xlu0 %v3127, 64
      %v3211 = vpop.permute.xlu0 %3210
      %3212 = vrot.lane.b32.xlu0 %v3128, 64
      %v3213 = vpop.permute.xlu0 %3212
      %3214 = vrot.lane.b32.xlu0 %v3129, 64
      %v3215 = vpop.permute.xlu0 %3214
      %3216 = vrot.lane.b32.xlu0 %v3130, 64
      %v3217 = vpop.permute.xlu0 %3216
      %3218 = vrot.lane.b32.xlu0 %v3131, 64
      %v3219 = vpop.permute.xlu0 %3218
      %3220 = vrot.lane.b32.xlu0 %v3132, 64
      %v3221 = vpop.permute.xlu0 %3220
      %3222 = vrot.lane.b32.xlu0 %v3133, 64
      %v3223 = vpop.permute.xlu0 %3222
      %3224 = vrot.lane.b32.xlu0 %v3134, 64
      %v3225 = vpop.permute.xlu0 %3224
      %3226 = vrot.lane.b32.xlu0 %v3135, 64
      %v3227 = vpop.permute.xlu0 %3226
      %3228 = vrot.lane.b32.xlu0 %v3136, 64
      %v3229 = vpop.permute.xlu0 %3228
      %3230 = vrot.lane.b32.xlu0 %v3137, 64
      %v3231 = vpop.permute.xlu0 %3230
      %3232 = vrot.lane.b32.xlu0 %v3138, 64
      %v3233 = vpop.permute.xlu0 %3232
      %3234 = vrot.lane.b32.xlu0 %v3139, 64
      %v3235 = vpop.permute.xlu0 %3234
      %3236 = vrot.lane.b32.xlu0 %v3140, 64
      %v3237 = vpop.permute.xlu0 %3236
      %3238 = vrot.lane.b32.xlu0 %v3141, 64
      %v3239 = vpop.permute.xlu0 %3238
      %v3272 = vsel %vm390, %v3108, %v3177
      %v3273 = vsel %vm390, %v3109, %v3179
      %v3274 = vsel %vm390, %v3110, %v3181
      %v3275 = vsel %vm390, %v3111, %v3183
      %v3276 = vsel %vm390, %v3112, %v3185
      %v3277 = vsel %vm390, %v3113, %v3187
      %v3278 = vsel %vm390, %v3114, %v3189
      %v3279 = vsel %vm390, %v3115, %v3191
      %v3280 = vsel %vm390, %v3116, %v3193
      %v3281 = vsel %vm390, %v3117, %v3195
      %v3282 = vsel %vm390, %v3118, %v3197
      %v3283 = vsel %vm390, %v3119, %v3199
      %v3284 = vsel %vm390, %v3120, %v3201
      %v3285 = vsel %vm390, %v3121, %v3203
      %v3286 = vsel %vm390, %v3122, %v3205
      %v3287 = vsel %vm390, %v3123, %v3207
      %v3288 = vsel %vm390, %v3124, %v3209
      %v3289 = vsel %vm390, %v3125, %v3211
      %v3290 = vsel %vm390, %v3126, %v3213
      %v3291 = vsel %vm390, %v3127, %v3215
      %v3292 = vsel %vm390, %v3128, %v3217
      %v3293 = vsel %vm390, %v3129, %v3219
      %v3294 = vsel %vm390, %v3130, %v3221
      %v3295 = vsel %vm390, %v3131, %v3223
      %v3296 = vsel %vm390, %v3132, %v3225
      %v3297 = vsel %vm390, %v3133, %v3227
      %v3298 = vsel %vm390, %v3134, %v3229
      %v3299 = vsel %vm390, %v3135, %v3231
      %v3300 = vsel %vm390, %v3136, %v3233
      %v3301 = vsel %vm390, %v3137, %v3235
      %v3302 = vsel %vm390, %v3138, %v3237
      %v3303 = vsel %vm390, %v3139, %v3239
      %v3304 = vpack.c.bf16 %v3273, %v3272
      %v3305 = vpack.c.bf16 %v3113, %v3112
      %v3306 = vpack.c.bf16 %v3275, %v3274
      %v3307 = vpack.c.bf16 %v3115, %v3114
      %v3308 = vpack.c.bf16 %v3277, %v3276
      %v3309 = vpack.c.bf16 %v3117, %v3116
      %v3310 = vpack.c.bf16 %v3279, %v3278
      %v3311 = vpack.c.bf16 %v3119, %v3118
      %v3312 = vpack.c.bf16 %v3281, %v3280
      %v3313 = vpack.c.bf16 %v3121, %v3120
      %v3314 = vpack.c.bf16 %v3283, %v3282
      %v3315 = vpack.c.bf16 %v3123, %v3122
      %v3316 = vpack.c.bf16 %v3285, %v3284
      %v3317 = vpack.c.bf16 %v3125, %v3124
      %v3318 = vpack.c.bf16 %v3287, %v3286
      %v3319 = vpack.c.bf16 %v3127, %v3126
      %v3320 = vpack.c.bf16 %v3289, %v3288
      %v3321 = vpack.c.bf16 %v3129, %v3128
      %v3322 = vpack.c.bf16 %v3291, %v3290
      %v3323 = vpack.c.bf16 %v3131, %v3130
      %v3324 = vpack.c.bf16 %v3293, %v3292
      %v3325 = vpack.c.bf16 %v3133, %v3132
      %v3326 = vpack.c.bf16 %v3295, %v3294
      %v3327 = vpack.c.bf16 %v3135, %v3134
      %v3328 = vpack.c.bf16 %v3297, %v3296
      %v3329 = vpack.c.bf16 %v3137, %v3136
      %v3330 = vpack.c.bf16 %v3299, %v3298
      %v3331 = vpack.c.bf16 %v3139, %v3138
      %v3332 = vpack.c.bf16 %v3301, %v3300
      %v3333 = vpack.c.bf16 %v3141, %v3140
      %v3334 = vpack.c.bf16 %v3303, %v3302
      %v3335 = vpack.c.bf16 %v3143, %v3142
      %s3336 = scalar_lea.vmem %s3, 192
      %v3337 = vld [vmem:[%s3336] sm:$0xf]
      %v3338 = vld [vmem:[%s3336 + $0x4] sm:$0xf]
      %v3339 = vld [vmem:[%s3336 + $0x8] sm:$0xf]
      %v3340 = vld [vmem:[%s3336 + $0xc] sm:$0xf]
      %v3341 = vld [vmem:[%s3336 + $0x10] sm:$0xf]
      %v3342 = vld [vmem:[%s3336 + $0x14] sm:$0xf]
      %v3343 = vld [vmem:[%s3336 + $0x18] sm:$0xf]
      %v3344 = vld [vmem:[%s3336 + $0x1c] sm:$0xf]
      %v3345 = vld [vmem:[%s3336 + $0x20] sm:$0xf]
      %v3346 = vld [vmem:[%s3336 + $0x24] sm:$0xf]
      %v3347 = vld [vmem:[%s3336 + $0x28] sm:$0xf]
      %v3348 = vld [vmem:[%s3336 + $0x2c] sm:$0xf]
      %v3349 = vld [vmem:[%s3336 + $0x30] sm:$0xf]
      %v3350 = vld [vmem:[%s3336 + $0x34] sm:$0xf]
      %v3351 = vld [vmem:[%s3336 + $0x38] sm:$0xf]
      %v3352 = vld [vmem:[%s3336 + $0x3c] sm:$0xf]
      %v3353 = vld [vmem:[%s3336 + $0x40] sm:$0xf]
      %v3354 = vld [vmem:[%s3336 + $0x44] sm:$0xf]
      %v3355 = vld [vmem:[%s3336 + $0x48] sm:$0xf]
      %v3356 = vld [vmem:[%s3336 + $0x4c] sm:$0xf]
      %v3357 = vld [vmem:[%s3336 + $0x50] sm:$0xf]
      %v3358 = vld [vmem:[%s3336 + $0x54] sm:$0xf]
      %v3359 = vld [vmem:[%s3336 + $0x58] sm:$0xf]
      %v3360 = vld [vmem:[%s3336 + $0x5c] sm:$0xf]
      %v3385 = vunpack.c.l.b16 %v3337
      %v3386 = vunpack.c.l.b16 %v3338
      %v3387 = vunpack.c.l.b16 %v3339
      %v3388 = vunpack.c.l.b16 %v3340
      %v3389 = vunpack.c.l.b16 %v3341
      %v3390 = vunpack.c.l.b16 %v3342
      %v3391 = vunpack.c.l.b16 %v3343
      %v3392 = vunpack.c.l.b16 %v3344
      %v3393 = vunpack.c.l.b16 %v3345
      %v3394 = vunpack.c.l.b16 %v3346
      %v3395 = vunpack.c.l.b16 %v3347
      %v3396 = vunpack.c.l.b16 %v3348
      %v3397 = vunpack.c.l.b16 %v3349
      %v3398 = vunpack.c.l.b16 %v3350
      %v3399 = vunpack.c.l.b16 %v3351
      %v3400 = vunpack.c.l.b16 %v3352
      %v3401 = vunpack.c.l.b16 %v3353
      %v3402 = vunpack.c.l.b16 %v3354
      %v3403 = vunpack.c.l.b16 %v3355
      %v3404 = vunpack.c.l.b16 %v3356
      %v3405 = vunpack.c.l.b16 %v3357
      %v3406 = vunpack.c.l.b16 %v3358
      %v3407 = vunpack.c.l.b16 %v3359
      %v3408 = vunpack.c.l.b16 %v3360
      %v3409 = vpack.c.b16 %v3386, %v3385
      %v3410 = vpack.c.b16 %v3388, %v3387
      %v3411 = vpack.c.b16 %v3390, %v3389
      %v3412 = vpack.c.b16 %v3392, %v3391
      %v3413 = vpack.c.b16 %v3394, %v3393
      %v3414 = vpack.c.b16 %v3396, %v3395
      %v3415 = vpack.c.b16 %v3398, %v3397
      %v3416 = vpack.c.b16 %v3400, %v3399
      %v3417 = vpack.c.b16 %v3402, %v3401
      %v3418 = vpack.c.b16 %v3404, %v3403
      %v3419 = vpack.c.b16 %v3406, %v3405
      %v3420 = vpack.c.b16 %v3408, %v3407
      %v3434 = vsel %vm390, %v3305, 0
      %v3437 = vsel %vm390, %v3307, 0
      %v3440 = vsel %vm390, %v3309, 0
      %v3443 = vsel %vm390, %v3311, 0
      %v3446 = vsel %vm390, %v3313, 0
      %v3449 = vsel %vm390, %v3315, 0
      %v3452 = vsel %vm390, %v3317, 0
      %v3455 = vsel %vm390, %v3319, 0
      %v3458 = vsel %vm390, %v3321, 0
      %v3461 = vsel %vm390, %v3323, 0
      %v3464 = vsel %vm390, %v3325, 0
      %v3467 = vsel %vm390, %v3327, 0
      %v3470 = vsel %vm390, %v3329, 0
      %v3473 = vsel %vm390, %v3331, 0
      %v3476 = vsel %vm390, %v3333, 0
      %v3479 = vsel %vm390, %v3335, 0
      %3481 = vmatprep.subr.bf16.mxu0 0
      %3482 = vmatpush1.bf16.msra.mxu0 %v3409
      %3483 = vmatprep.subr.bf16.mxu0 0
      %3484 = vmatpush1.bf16.msra.mxu0 %v3410
      %3485 = vmatprep.subr.bf16.mxu0 0
      %3486 = vmatpush1.bf16.msra.mxu0 %v3411
      %3487 = vmatprep.subr.bf16.mxu0 0
      %3488 = vmatpush1.bf16.msra.mxu0 %v3412
      %3489 = vmatprep.subr.bf16.mxu0 0
      %3490 = vmatpush1.bf16.msra.mxu0 %v3413
      %3491 = vmatprep.subr.bf16.mxu0 0
      %3492 = vmatpush1.bf16.msra.mxu0 %v3414
      %3493 = vmatprep.subr.bf16.mxu0 0
      %3494 = vmatpush1.bf16.msra.mxu0 %v3415
      %3495 = vmatprep.subr.bf16.mxu0 0
      %3496 = vmatpush1.bf16.msra.mxu0 %v3416
      %3497 = vmatprep.subr.bf16.mxu0 0
      %3498 = vmatpush1.bf16.msra.mxu0 %v3417
      %3499 = vmatprep.subr.bf16.mxu0 0
      %3500 = vmatpush1.bf16.msra.mxu0 %v3418
      %3501 = vmatprep.subr.bf16.mxu0 0
      %3502 = vmatpush1.bf16.msra.mxu0 %v3419
      %3503 = vmatprep.subr.bf16.mxu0 0
      %3504 = vmatpush1.bf16.msra.mxu0 %v3420
      %3505 = vmatprep.subr.bf16.mxu0 0
      %3506 = vmatpush1.bf16.msra.mxu0 0
      %3507 = vmatprep.subr.bf16.mxu0 0
      %3508 = vmatpush1.bf16.msra.mxu0 0
      %3509 = vmatprep.subr.bf16.mxu0 0
      %3510 = vmatpush1.bf16.msra.mxu0 0
      %3511 = vmatprep.subr.bf16.mxu0 0
      %3512 = vmatpush1.bf16.msra.mxu0 0
      %3513 = vmatprep.mubr.bf16.mxu0 %v3434
      %3514 = vmatmul.mubr.bf16.gmra.mrb[0].mxu0 %v3304
      %v3515 = vpop.f32.mrb[0].mxu0
      %v3516 = vadd.f32 0.0, %v3515
      %v3517 = vpop.f32.mrb[0].mxu0
      %v3518 = vpop.f32.mrb[0].mxu0
      %v3519 = vadd.f32 0.0, %v3518
      %v3520 = vpop.f32.mrb[0].mxu0
      %3521 = vmatprep.mubr.bf16.mxu0 %v3437
      %3522 = vmatmul.mubr.bf16.gmra.mrb[0].mxu0 %v3306
      %v3523 = vpop.f32.mrb[0].mxu0
      %v3524 = vadd.f32 0.0, %v3523
      %v3525 = vpop.f32.mrb[0].mxu0
      %v3526 = vpop.f32.mrb[0].mxu0
      %v3527 = vadd.f32 0.0, %v3526
      %v3528 = vpop.f32.mrb[0].mxu0
      %3529 = vmatprep.mubr.bf16.mxu0 %v3440
      %3530 = vmatmul.mubr.bf16.gmra.mrb[0].mxu0 %v3308
      %v3531 = vpop.f32.mrb[0].mxu0
      %v3532 = vadd.f32 0.0, %v3531
      %v3533 = vpop.f32.mrb[0].mxu0
      %v3534 = vpop.f32.mrb[0].mxu0
      %v3535 = vadd.f32 0.0, %v3534
      %v3536 = vpop.f32.mrb[0].mxu0
      %3537 = vmatprep.mubr.bf16.mxu0 %v3443
      %3538 = vmatmul.mubr.bf16.gmra.mrb[0].mxu0 %v3310
      %v3539 = vpop.f32.mrb[0].mxu0
      %v3540 = vadd.f32 0.0, %v3539
      %v3541 = vpop.f32.mrb[0].mxu0
      %v3542 = vpop.f32.mrb[0].mxu0
      %v3543 = vadd.f32 0.0, %v3542
      %v3544 = vpop.f32.mrb[0].mxu0
      %3545 = vmatprep.mubr.bf16.mxu0 %v3446
      %3546 = vmatmul.mubr.bf16.gmra.mrb[0].mxu0 %v3312
      %v3547 = vpop.f32.mrb[0].mxu0
      %v3548 = vadd.f32 0.0, %v3547
      %v3549 = vpop.f32.mrb[0].mxu0
      %v3550 = vpop.f32.mrb[0].mxu0
      %v3551 = vadd.f32 0.0, %v3550
      %v3552 = vpop.f32.mrb[0].mxu0
      %3553 = vmatprep.mubr.bf16.mxu0 %v3449
      %3554 = vmatmul.mubr.bf16.gmra.mrb[0].mxu0 %v3314
      %v3555 = vpop.f32.mrb[0].mxu0
      %v3556 = vadd.f32 0.0, %v3555
      %v3557 = vpop.f32.mrb[0].mxu0
      %v3558 = vpop.f32.mrb[0].mxu0
      %v3559 = vadd.f32 0.0, %v3558
      %v3560 = vpop.f32.mrb[0].mxu0
      %3561 = vmatprep.mubr.bf16.mxu0 %v3452
      %3562 = vmatmul.mubr.bf16.gmra.mrb[0].mxu0 %v3316
      %v3563 = vpop.f32.mrb[0].mxu0
      %v3564 = vadd.f32 0.0, %v3563
      %v3565 = vpop.f32.mrb[0].mxu0
      %v3566 = vpop.f32.mrb[0].mxu0
      %v3567 = vadd.f32 0.0, %v3566
      %v3568 = vpop.f32.mrb[0].mxu0
      %3569 = vmatprep.mubr.bf16.mxu0 %v3455
      %3570 = vmatmul.mubr.bf16.gmra.mrb[0].mxu0 %v3318
      %v3571 = vpop.f32.mrb[0].mxu0
      %v3572 = vadd.f32 0.0, %v3571
      %v3573 = vpop.f32.mrb[0].mxu0
      %v3574 = vpop.f32.mrb[0].mxu0
      %v3575 = vadd.f32 0.0, %v3574
      %v3576 = vpop.f32.mrb[0].mxu0
      %3577 = vmatprep.mubr.bf16.mxu0 %v3458
      %3578 = vmatmul.mubr.bf16.gmra.mrb[0].mxu0 %v3320
      %v3579 = vpop.f32.mrb[0].mxu0
      %v3580 = vadd.f32 0.0, %v3579
      %v3581 = vpop.f32.mrb[0].mxu0
      %v3582 = vpop.f32.mrb[0].mxu0
      %v3583 = vadd.f32 0.0, %v3582
      %v3584 = vpop.f32.mrb[0].mxu0
      %3585 = vmatprep.mubr.bf16.mxu0 %v3461
      %3586 = vmatmul.mubr.bf16.gmra.mrb[0].mxu0 %v3322
      %v3587 = vpop.f32.mrb[0].mxu0
      %v3588 = vadd.f32 0.0, %v3587
      %v3589 = vpop.f32.mrb[0].mxu0
      %v3590 = vpop.f32.mrb[0].mxu0
      %v3591 = vadd.f32 0.0, %v3590
      %v3592 = vpop.f32.mrb[0].mxu0
      %3593 = vmatprep.mubr.bf16.mxu0 %v3464
      %3594 = vmatmul.mubr.bf16.gmra.mrb[0].mxu0 %v3324
      %v3595 = vpop.f32.mrb[0].mxu0
      %v3596 = vadd.f32 0.0, %v3595
      %v3597 = vpop.f32.mrb[0].mxu0
      %v3598 = vpop.f32.mrb[0].mxu0
      %v3599 = vadd.f32 0.0, %v3598
      %v3600 = vpop.f32.mrb[0].mxu0
      %3601 = vmatprep.mubr.bf16.mxu0 %v3467
      %3602 = vmatmul.mubr.bf16.gmra.mrb[0].mxu0 %v3326
      %v3603 = vpop.f32.mrb[0].mxu0
      %v3604 = vadd.f32 0.0, %v3603
      %v3605 = vpop.f32.mrb[0].mxu0
      %v3606 = vpop.f32.mrb[0].mxu0
      %v3607 = vadd.f32 0.0, %v3606
      %v3608 = vpop.f32.mrb[0].mxu0
      %3609 = vmatprep.mubr.bf16.mxu0 %v3470
      %3610 = vmatmul.mubr.bf16.gmra.mrb[0].mxu0 %v3328
      %v3611 = vpop.f32.mrb[0].mxu0
      %v3612 = vadd.f32 0.0, %v3611
      %v3613 = vpop.f32.mrb[0].mxu0
      %v3614 = vpop.f32.mrb[0].mxu0
      %v3615 = vadd.f32 0.0, %v3614
      %v3616 = vpop.f32.mrb[0].mxu0
      %3617 = vmatprep.mubr.bf16.mxu0 %v3473
      %3618 = vmatmul.mubr.bf16.gmra.mrb[0].mxu0 %v3330
      %v3619 = vpop.f32.mrb[0].mxu0
      %v3620 = vadd.f32 0.0, %v3619
      %v3621 = vpop.f32.mrb[0].mxu0
      %v3622 = vpop.f32.mrb[0].mxu0
      %v3623 = vadd.f32 0.0, %v3622
      %v3624 = vpop.f32.mrb[0].mxu0
      %3625 = vmatprep.mubr.bf16.mxu0 %v3476
      %3626 = vmatmul.mubr.bf16.gmra.mrb[0].mxu0 %v3332
      %v3627 = vpop.f32.mrb[0].mxu0
      %v3628 = vadd.f32 0.0, %v3627
      %v3629 = vpop.f32.mrb[0].mxu0
      %v3630 = vpop.f32.mrb[0].mxu0
      %v3631 = vadd.f32 0.0, %v3630
      %v3632 = vpop.f32.mrb[0].mxu0
      %3633 = vmatprep.mubr.bf16.mxu0 %v3479
      %3634 = vmatmul.mubr.bf16.gmra.mrb[0].mxu0 %v3334
      %v3635 = vpop.f32.mrb[0].mxu0
      %v3636 = vadd.f32 0.0, %v3635
      %v3637 = vpop.f32.mrb[0].mxu0
      %v3638 = vpop.f32.mrb[0].mxu0
      %v3639 = vadd.f32 0.0, %v3638
      %v3640 = vpop.f32.mrb[0].mxu0
      %3641 = vdwg.mxu0
      %v3642 = vadd.f32 %v2982, %v3516
      %v3643 = vadd.f32 %v2985, %v3519
      %v3644 = vadd.f32 %v2990, %v3524
      %v3645 = vadd.f32 %v2993, %v3527
      %v3646 = vadd.f32 %v2998, %v3532
      %v3647 = vadd.f32 %v3001, %v3535
      %v3648 = vadd.f32 %v3006, %v3540
      %v3649 = vadd.f32 %v3009, %v3543
      %v3650 = vadd.f32 %v3014, %v3548
      %v3651 = vadd.f32 %v3017, %v3551
      %v3652 = vadd.f32 %v3022, %v3556
      %v3653 = vadd.f32 %v3025, %v3559
      %v3654 = vadd.f32 %v3030, %v3564
      %v3655 = vadd.f32 %v3033, %v3567
      %v3656 = vadd.f32 %v3038, %v3572
      %v3657 = vadd.f32 %v3041, %v3575
      %v3658 = vadd.f32 %v3046, %v3580
      %v3659 = vadd.f32 %v3049, %v3583
      %v3660 = vadd.f32 %v3054, %v3588
      %v3661 = vadd.f32 %v3057, %v3591
      %v3662 = vadd.f32 %v3062, %v3596
      %v3663 = vadd.f32 %v3065, %v3599
      %v3664 = vadd.f32 %v3070, %v3604
      %v3665 = vadd.f32 %v3073, %v3607
      %v3666 = vadd.f32 %v3078, %v3612
      %v3667 = vadd.f32 %v3081, %v3615
      %v3668 = vadd.f32 %v3086, %v3620
      %v3669 = vadd.f32 %v3089, %v3623
      %v3670 = vadd.f32 %v3094, %v3628
      %v3671 = vadd.f32 %v3097, %v3631
      %v3672 = vadd.f32 %v3102, %v3636
      %v3673 = vadd.f32 %v3105, %v3639
      %v3674 = vld [vmem:[%s4] sm:$0x1]
      %v3676 = vlaneseq
      %v3677 = vshrl.u32 %v3676, 7
      %v3678 = vsub.s32 0, %v3677
      %v3679 = vrot.slane %v3674, %v3678
      %v3681 = vadd.f32 %v3642, %v3679
      %v3682 = vadd.f32 %v3643, %v3679
      %v3683 = vadd.f32 %v3644, %v3679
      %v3684 = vadd.f32 %v3645, %v3679
      %v3685 = vadd.f32 %v3646, %v3679
      %v3686 = vadd.f32 %v3647, %v3679
      %v3687 = vadd.f32 %v3648, %v3679
      %v3688 = vadd.f32 %v3649, %v3679
      %v3689 = vadd.f32 %v3650, %v3679
      %v3690 = vadd.f32 %v3651, %v3679
      %v3691 = vadd.f32 %v3652, %v3679
      %v3692 = vadd.f32 %v3653, %v3679
      %v3693 = vadd.f32 %v3654, %v3679
      %v3694 = vadd.f32 %v3655, %v3679
      %v3695 = vadd.f32 %v3656, %v3679
      %v3696 = vadd.f32 %v3657, %v3679
      %v3697 = vadd.f32 %v3658, %v3679
      %v3698 = vadd.f32 %v3659, %v3679
      %v3699 = vadd.f32 %v3660, %v3679
      %v3700 = vadd.f32 %v3661, %v3679
      %v3701 = vadd.f32 %v3662, %v3679
      %v3702 = vadd.f32 %v3663, %v3679
      %v3703 = vadd.f32 %v3664, %v3679
      %v3704 = vadd.f32 %v3665, %v3679
      %v3705 = vadd.f32 %v3666, %v3679
      %v3706 = vadd.f32 %v3667, %v3679
      %v3707 = vadd.f32 %v3668, %v3679
      %v3708 = vadd.f32 %v3669, %v3679
      %v3709 = vadd.f32 %v3670, %v3679
      %v3710 = vadd.f32 %v3671, %v3679
      %v3711 = vadd.f32 %v3672, %v3679
      %v3712 = vadd.f32 %v3673, %v3679
      %v3713 = vadd.f32 %v481, %v3681
      %v3714 = vadd.f32 %v482, %v3682
      %v3715 = vadd.f32 %v483, %v3683
      %v3716 = vadd.f32 %v484, %v3684
      %v3717 = vadd.f32 %v485, %v3685
      %v3718 = vadd.f32 %v486, %v3686
      %v3719 = vadd.f32 %v487, %v3687
      %v3720 = vadd.f32 %v488, %v3688
      %v3721 = vadd.f32 %v489, %v3689
      %v3722 = vadd.f32 %v490, %v3690
      %v3723 = vadd.f32 %v491, %v3691
      %v3724 = vadd.f32 %v492, %v3692
      %v3725 = vadd.f32 %v493, %v3693
      %v3726 = vadd.f32 %v494, %v3694
      %v3727 = vadd.f32 %v495, %v3695
      %v3728 = vadd.f32 %v496, %v3696
      %v3729 = vadd.f32 %v497, %v3697
      %v3730 = vadd.f32 %v498, %v3698
      %v3731 = vadd.f32 %v499, %v3699
      %v3732 = vadd.f32 %v500, %v3700
      %v3733 = vadd.f32 %v501, %v3701
      %v3734 = vadd.f32 %v502, %v3702
      %v3735 = vadd.f32 %v503, %v3703
      %v3736 = vadd.f32 %v504, %v3704
      %v3737 = vadd.f32 %v505, %v3705
      %v3738 = vadd.f32 %v506, %v3706
      %v3739 = vadd.f32 %v507, %v3707
      %v3740 = vadd.f32 %v508, %v3708
      %v3741 = vadd.f32 %v509, %v3709
      %v3742 = vadd.f32 %v510, %v3710
      %v3743 = vadd.f32 %v511, %v3711
      %v3744 = vadd.f32 %v512, %v3712
      %3745 = vst.msk [vmem:[%s224] sm:$0xff] %vm390, %v3713
      %3746 = vst.msk [vmem:[%s224 + $0x8] sm:$0xff] %vm390, %v3714
      %3747 = vst.msk [vmem:[%s224 + $0x10] sm:$0xff] %vm390, %v3715
      %3748 = vst.msk [vmem:[%s224 + $0x18] sm:$0xff] %vm390, %v3716
      %3749 = vst.msk [vmem:[%s224 + $0x20] sm:$0xff] %vm390, %v3717
      %3750 = vst.msk [vmem:[%s224 + $0x28] sm:$0xff] %vm390, %v3718
      %3751 = vst.msk [vmem:[%s224 + $0x30] sm:$0xff] %vm390, %v3719
      %3752 = vst.msk [vmem:[%s224 + $0x38] sm:$0xff] %vm390, %v3720
      %3753 = vst.msk [vmem:[%s224 + $0x40] sm:$0xff] %vm390, %v3721
      %3754 = vst.msk [vmem:[%s224 + $0x48] sm:$0xff] %vm390, %v3722
      %3755 = vst.msk [vmem:[%s224 + $0x50] sm:$0xff] %vm390, %v3723
      %3756 = vst.msk [vmem:[%s224 + $0x58] sm:$0xff] %vm390, %v3724
      %3757 = vst.msk [vmem:[%s224 + $0x60] sm:$0xff] %vm390, %v3725
      %3758 = vst.msk [vmem:[%s224 + $0x68] sm:$0xff] %vm390, %v3726
      %3759 = vst.msk [vmem:[%s224 + $0x70] sm:$0xff] %vm390, %v3727
      %3760 = vst.msk [vmem:[%s224 + $0x78] sm:$0xff] %vm390, %v3728
      %3761 = vst.msk [vmem:[%s224 + $0x80] sm:$0xff] %vm390, %v3729
      %3762 = vst.msk [vmem:[%s224 + $0x88] sm:$0xff] %vm390, %v3730
      %3763 = vst.msk [vmem:[%s224 + $0x90] sm:$0xff] %vm390, %v3731
      %3764 = vst.msk [vmem:[%s224 + $0x98] sm:$0xff] %vm390, %v3732
      %3765 = vst.msk [vmem:[%s224 + $0xa0] sm:$0xff] %vm390, %v3733
      %3766 = vst.msk [vmem:[%s224 + $0xa8] sm:$0xff] %vm390, %v3734
      %3767 = vst.msk [vmem:[%s224 + $0xb0] sm:$0xff] %vm390, %v3735
      %3768 = vst.msk [vmem:[%s224 + $0xb8] sm:$0xff] %vm390, %v3736
      %3769 = vst.msk [vmem:[%s224 + $0xc0] sm:$0xff] %vm390, %v3737
      %3770 = vst.msk [vmem:[%s224 + $0xc8] sm:$0xff] %vm390, %v3738
      %3771 = vst.msk [vmem:[%s224 + $0xd0] sm:$0xff] %vm390, %v3739
      %3772 = vst.msk [vmem:[%s224 + $0xd8] sm:$0xff] %vm390, %v3740
      %3773 = vst.msk [vmem:[%s224 + $0xe0] sm:$0xff] %vm390, %v3741
      %3774 = vst.msk [vmem:[%s224 + $0xe8] sm:$0xff] %vm390, %v3742
      %3775 = vst.msk [vmem:[%s224 + $0xf0] sm:$0xff] %vm390, %v3743
      %3776 = vst.msk [vmem:[%s224 + $0xf8] sm:$0xff] %vm390, %v3744
      %p3777 = scmp.lt.s32.totalorder %s16, 1
      %s3778 = scalar_select %p3777, %s16, 1
      %s3779 = smul.addr %s3778, 32
      %s3780 = smul.addr %s3779, 8
      %s3781 = scalar_lea.vmem %s5, %s3780
      // Predicated region
      $region41: #{tpu_custom_call.1} parent=39 // pred_check
        %p3782 = pneg %p144
      $region42: #{tpu_custom_call.1} parent=39 // pred_check_branch
        %3784 = sbr.rel (%p3782) target = $region44
      $region43: #{tpu_custom_call.1} parent=39 // pred_region
        _
      $region44: #{tpu_custom_call.1} parent=39 // pred_fallthru
        _
    $region40: #{tpu_custom_call.1} parent=5 // pred_fallthru
      _
    %p3785 = scmp.le.s32.totalorder 2, %s11
    // Predicated region
    $region45: #{tpu_custom_call.1} parent=5 // pred_check
      %p3786 = pneg %p3785
    $region46: #{tpu_custom_call.1} parent=5 // pred_check_branch
      %3788 = sbr.rel (%p3786) target = $region48
    $region47: #{tpu_custom_call.1} parent=5 // pred_region
      %s3789 = ssub.s32 %s11, 2
      // Predicated region
      $region49: #{tpu_custom_call.1} parent=47 // pred_check
        %p3790 = pneg %p150
      $region50: #{tpu_custom_call.1} parent=47 // pred_check_branch
        %3792 = sbr.rel (%p3790) target = $region52
      $region51: #{tpu_custom_call.1} parent=47 // pred_region
        %p3793 = scmp.lt.s32.totalorder %s17, 1
        %s3794 = scalar_select %p3793, %s17, 1
        %s3795 = smul.addr %s3794, 32
        %s3796 = smul.addr %s3795, 8
        %s3797 = scalar_lea.vmem %s5, %s3796
      $region52: #{tpu_custom_call.1} parent=47 // pred_fallthru
        _
    $region48: #{tpu_custom_call.1} parent=5 // pred_fallthru
      _
  $region6: #{tpu_custom_call.1} parent=0 // loop_footer
    %s15 = sadd.s32 1, %s11
  $region7: #{tpu_custom_call.1} parent=0 // loop_footer_branch
    %10 = sbr.rel target = $region3
  $region8: #{tpu_custom_call.1} parent=0 // loop_exit
    _

</llo_original>
